<compile_context>
chip_gen: v7x
topology: tpu7x:2x2x1
jax: 0.10.0
libtpu: 0.0.40
codegen_flags: <defaults>
</compile_context>

<pallas_src>
import functools
import math

import numpy as np

import jax
import jax.numpy as jnp
from jax.experimental import pallas as pl
from jax.experimental.pallas import tpu as pltpu


# ----------------------------------------------------------------------------
# packed-parameter index constants
# ----------------------------------------------------------------------------
# vd rows (all (Dp,) f32 vectors of one block)
FF1_LN_G, FF1_LN_B, FF1_B2 = 0, 1, 2
ATT_LN_G, ATT_LN_B, ATT_BQ, ATT_BK, ATT_BV, ATT_BO = 3, 4, 5, 6, 7, 8
CNV_LN_G, CNV_LN_B, CNV_BA, CNV_BB, CNV_DWB, CNV_BNS, CNV_BNT, CNV_B2 = (
    9, 10, 11, 12, 13, 14, 15, 16)
FF2_LN_G, FF2_LN_B, FF2_B2 = 17, 18, 19
FIN_LN_G, FIN_LN_B = 20, 21
# md slabs ((Dp, Dp) bf16 matrices of one block)
M_WQ, M_WK, M_WV, M_WO, M_CA, M_CB, M_C2 = 0, 1, 2, 3, 4, 5, 6
# vf rows ((Fp,) f32 vectors)
VF_FF1_B1, VF_FF2_B1 = 0, 1


def _rup(n, m):
    return ((n + m - 1) // m) * m


# ----------------------------------------------------------------------------
# Fused conformer-block kernel (one pallas_call per block, grid over batch)
# ----------------------------------------------------------------------------
def _block_kernel(x_ref, md_ref, mdf_ref, mfd_ref, dw_ref, vd_ref, vf_ref,
                  sh_ref, o_ref, *, S, D, H, K):
    Sp, Dp = x_ref.shape[1], x_ref.shape[2]
    dh = D // H
    f32, bf16 = jnp.float32, jnp.bfloat16

    lane = jax.lax.broadcasted_iota(jnp.int32, (1, Dp), 1)
    cmask = (lane < D).astype(f32)                       # real feature lanes
    row = jax.lax.broadcasted_iota(jnp.int32, (Sp, 1), 0)
    tmask = (row < S).astype(f32)                        # real time rows
    kcol = jax.lax.broadcasted_iota(jnp.int32, (1, Sp), 1)
    key_bias = jnp.where(kcol < S, 0.0, -1e30).astype(f32)

    def layernorm(x, gi, bi):
        # masked two-pass LN over the real D channels (padded lanes are zero,
        # gamma/beta padded with zeros keep them zero)
        xm = x * cmask
        mu = jnp.sum(xm, axis=-1, keepdims=True) * (1.0 / D)
        xc = (x - mu) * cmask
        var = jnp.sum(xc * xc, axis=-1, keepdims=True) * (1.0 / D)
        return xc * jax.lax.rsqrt(var + 1e-5) * vd_ref[gi] + vd_ref[bi]

    def matmul(x, w):                                    # bf16 MXU, f32 acc
        return jnp.dot(x.astype(bf16), w, preferred_element_type=f32)

    def ff(x, wi, b1i, woi, b2i, gi, bi):
        # FeedForwardModule: LN(residual + W2 relu(W1 x)); dropout = identity
        h = jnp.maximum(matmul(x, mdf_ref[wi]) + vf_ref[b1i], 0.0)
        y = matmul(h, mfd_ref[woi]) + vd_ref[b2i]
        return layernorm(x + y, gi, bi)

    x = x_ref[0]

    # ---- FF module 1 (half-step residual) ----
    x = x + 0.5 * ff(x, 0, VF_FF1_B1, 0, FF1_B2, FF1_LN_G, FF1_LN_B)

    # ---- Multi-head self-attention (pre-LN, residual) ----
    xn = layernorm(x, ATT_LN_G, ATT_LN_B)
    q = matmul(xn, md_ref[M_WQ]) + vd_ref[ATT_BQ]
    k = matmul(xn, md_ref[M_WK]) + vd_ref[ATT_BK]
    v = matmul(xn, md_ref[M_WV]) + vd_ref[ATT_BV]
    kb = k.astype(bf16)
    scale = 1.0 / math.sqrt(dh)
    attn = jnp.zeros((Sp, Dp), f32)
    for hd in range(H):
        # select head hd's channels with a lane mask: contraction stays 128
        hmask = ((lane >= hd * dh) & (lane < (hd + 1) * dh)).astype(f32)
        qh = (q * (hmask * scale)).astype(bf16)
        s = jax.lax.dot_general(qh, kb, (((1,), (1,)), ((), ())),
                                preferred_element_type=f32)
        s = s + key_bias                                 # mask padded keys
        m = jnp.max(s, axis=-1, keepdims=True)
        p = jnp.exp(s - m)
        p = p * pl.reciprocal(jnp.sum(p, axis=-1, keepdims=True), approx=True)
        vh = (v * hmask).astype(bf16)
        attn = attn + jnp.dot(p.astype(bf16), vh, preferred_element_type=f32)
    x = x + matmul(attn, md_ref[M_WO]) + vd_ref[ATT_BO]

    # ---- Convolution module ----
    xn = layernorm(x, CNV_LN_G, CNV_LN_B)
    a = matmul(xn, md_ref[M_CA]) + vd_ref[CNV_BA]        # GLU as two matmuls
    g = matmul(xn, md_ref[M_CB]) + vd_ref[CNV_BB]
    h = a * jax.nn.sigmoid(g)
    h = (h * tmask).astype(bf16)                         # zero padded rows
    acc = jnp.zeros((Sp, Dp), f32)
    for j in range(K):                                   # dw conv = K shift-matmuls
        acc = acc + jnp.dot(sh_ref[j], h,
                            preferred_element_type=f32) * dw_ref[j]
    acc = acc + vd_ref[CNV_DWB]
    acc = acc * vd_ref[CNV_BNS] + vd_ref[CNV_BNT]        # eval-mode BatchNorm
    acc = acc * jax.nn.sigmoid(acc)                      # SiLU
    x = x + matmul(acc, md_ref[M_C2]) + vd_ref[CNV_B2]

    # ---- FF module 2 (half-step residual) + final LayerNorm ----
    x = x + 0.5 * ff(x, 1, VF_FF2_B1, 1, FF2_B2, FF2_LN_G, FF2_LN_B)
    x = layernorm(x, FIN_LN_G, FIN_LN_B)

    # TODO(synk): dropout layers are identity in eval mode (no RNG applied).
    o_ref[0] = x


def pallas_conformer_block(x, bp, shifts, *, S, D, H, K):
    B, Sp, Dp = x.shape
    kern = functools.partial(_block_kernel, S=S, D=D, H=H, K=K)
    return pl.pallas_call(
        kern,
        out_shape=jax.ShapeDtypeStruct((B, Sp, Dp), jnp.float32),
        grid=(B,),
        in_specs=[
            pl.BlockSpec((1, Sp, Dp), lambda i: (i, 0, 0)),
            pl.BlockSpec(bp["md"].shape, lambda i: (0, 0, 0)),
            pl.BlockSpec(bp["mdf"].shape, lambda i: (0, 0, 0)),
            pl.BlockSpec(bp["mfd"].shape, lambda i: (0, 0, 0)),
            pl.BlockSpec(bp["dw"].shape, lambda i: (0, 0)),
            pl.BlockSpec(bp["vd"].shape, lambda i: (0, 0)),
            pl.BlockSpec(bp["vf"].shape, lambda i: (0, 0)),
            pl.BlockSpec(shifts.shape, lambda i: (0, 0, 0)),
        ],
        out_specs=pl.BlockSpec((1, Sp, Dp), lambda i: (i, 0, 0)),
        compiler_params=pltpu.CompilerParams(
            dimension_semantics=("parallel",)),
    )(x, bp["md"], bp["mdf"], bp["mfd"], bp["dw"], bp["vd"], bp["vf"], shifts)


# ----------------------------------------------------------------------------
# Stem (input projection + positional encoding) and classifier kernels
# ----------------------------------------------------------------------------
def _stem_kernel(f_ref, w_ref, b_ref, pe_ref, o_ref):
    y = jnp.dot(f_ref[0].astype(jnp.bfloat16), w_ref[...],
                preferred_element_type=jnp.float32)
    o_ref[0] = y + b_ref[...] + pe_ref[...]


def pallas_stem(feats_p, w, b, pe):
    B, Sp, Cp = feats_p.shape
    Dp = w.shape[1]
    return pl.pallas_call(
        _stem_kernel,
        out_shape=jax.ShapeDtypeStruct((B, Sp, Dp), jnp.float32),
        grid=(B,),
        in_specs=[
            pl.BlockSpec((1, Sp, Cp), lambda i: (i, 0, 0)),
            pl.BlockSpec((Cp, Dp), lambda i: (0, 0)),
            pl.BlockSpec((1, Dp), lambda i: (0, 0)),
            pl.BlockSpec((Sp, Dp), lambda i: (0, 0)),
        ],
        out_specs=pl.BlockSpec((1, Sp, Dp), lambda i: (i, 0, 0)),
        compiler_params=pltpu.CompilerParams(
            dimension_semantics=("parallel",)),
    )(feats_p, w, b, pe)


def _classifier_kernel(x_ref, w_ref, b_ref, o_ref, *, S):
    Sp = x_ref.shape[1]
    tmask = (jax.lax.broadcasted_iota(jnp.int32, (1, Sp, 1), 1) < S
             ).astype(jnp.float32)
    pooled = jnp.sum(x_ref[...] * tmask, axis=1) * (1.0 / S)   # mean over time
    o_ref[...] = jnp.dot(pooled.astype(jnp.bfloat16), w_ref[...],
                         preferred_element_type=jnp.float32) + b_ref[...]


def pallas_classifier(x, w, b, *, S):
    B, Sp, Dp = x.shape
    Cp = w.shape[1]
    return pl.pallas_call(
        functools.partial(_classifier_kernel, S=S),
        out_shape=jax.ShapeDtypeStruct((B, Cp), jnp.float32),
        grid=(1,),
        in_specs=[
            pl.BlockSpec((B, Sp, Dp), lambda i: (0, 0, 0)),
            pl.BlockSpec((Dp, Cp), lambda i: (0, 0)),
            pl.BlockSpec((1, Cp), lambda i: (0, 0)),
        ],
        out_specs=pl.BlockSpec((B, Cp), lambda i: (0, 0)),
        compiler_params=pltpu.CompilerParams(
            dimension_semantics=("arbitrary",)),
    )(x, w, b)


# ----------------------------------------------------------------------------
# Forward pass
# ----------------------------------------------------------------------------
def conv_out(n):
    return (n - 3) // 2 + 1


def conformer_forward(x_nchw, packed, *, num_heads, num_classes, d_model,
                      kernel_size):
    B = x_nchw.shape[0]
    # 3x3/stride-2 conv subsampling: left to XLA's conv (per perf feedback the
    # im2col + tiny-matmul Pallas path is pure overhead at 16x16).
    y = jax.lax.conv_general_dilated(
        x_nchw, packed["conv1_w"], (2, 2), "VALID",
        dimension_numbers=("NCHW", "OIHW", "NCHW"))
    y = jnp.maximum(y + packed["conv1_b"][None, :, None, None], 0.0)
    y = jax.lax.conv_general_dilated(
        y, packed["conv2_w"], (2, 2), "VALID",
        dimension_numbers=("NCHW", "OIHW", "NCHW"))
    y = jnp.maximum(y + packed["conv2_b"][None, :, None, None], 0.0)
    y = jnp.transpose(y, (0, 2, 3, 1))                     # NCHW -> NHWC
    Ho, Wo, C = y.shape[1], y.shape[2], y.shape[3]
    S = Ho * Wo
    feats = y.reshape(B, S, C)

    Sp, Dp = packed["pe"].shape
    Cp = packed["proj_w"].shape[0]
    feats = jnp.pad(feats, ((0, 0), (0, Sp - S), (0, Cp - C)))

    x = pallas_stem(feats, packed["proj_w"], packed["proj_b"], packed["pe"])
    for bp in packed["blocks"]:
        x = pallas_conformer_block(x, bp, packed["shifts"],
                                   S=S, D=d_model, H=num_heads, K=kernel_size)
    logits = pallas_classifier(x, packed["cls_w"], packed["cls_b"], S=S)
    return logits[:, :num_classes]


# ----------------------------------------------------------------------------
# Parameter construction (PyTorch layouts) and packing into kernel layout
# ----------------------------------------------------------------------------
def positional_encoding(S, D):
    pos = np.arange(S, dtype=np.float32)[:, None]
    div = np.exp(np.arange(0, D, 2, dtype=np.float32)
                 * (-math.log(10000.0) / D))
    pe = np.zeros((S, D), np.float32)
    pe[:, 0::2] = np.sin(pos * div)
    pe[:, 1::2] = np.cos(pos * div)
    return jnp.asarray(pe)


def _shift_mats(Sp, K, Kp):
    # shift_j @ h  ==  h shifted by (j - pad) rows with zero boundary handling
    pad = (K - 1) // 2
    t = np.arange(Sp)[:, None]
    s = np.arange(Sp)[None, :]
    sh = np.zeros((Kp, Sp, Sp), np.float32)
    for j in range(K):
        sh[j] = (s == (t + j - pad)).astype(np.float32)
    return jnp.asarray(sh, dtype=jnp.bfloat16)


def _padv(v, n):
    return jnp.pad(v, (0, n - v.shape[0]))


def _padm(m, r, c):
    return jnp.pad(m, ((0, r - m.shape[0]), (0, c - m.shape[1])))


def pack_params(params, *, d_model, d_ff, kernel_size, num_classes, S):
    d = d_model
    Dp = _rup(d_model, 128)
    Fp = _rup(d_ff, 128)
    Sp = _rup(max(S, 8), 8)
    Cin = params["proj_w"].shape[1]
    Cp = _rup(Cin, 128)
    Clsp = _rup(num_classes, 128)
    Kp = _rup(kernel_size, 8)
    bf16 = jnp.bfloat16

    packed = {
        "conv1_w": params["conv1_w"], "conv1_b": params["conv1_b"],
        "conv2_w": params["conv2_w"], "conv2_b": params["conv2_b"],
        "proj_w": _padm(params["proj_w"].T, Cp, Dp).astype(bf16),
        "proj_b": _padv(params["proj_b"], Dp)[None, :],
        "pe": _padm(positional_encoding(S, d_model), Sp, Dp),
        "cls_w": _padm(params["cls_w"].T, Dp, Clsp).astype(bf16),
        "cls_b": _padv(params["cls_b"], Clsp)[None, :],
        "shifts": _shift_mats(Sp, kernel_size, Kp),
        "blocks": [],
    }

    for blk in params["blocks"]:
        ff1, ff2, at, cv = blk["ff1"], blk["ff2"], blk["attn"], blk["conv"]
        in_w, in_b = at["in_w"], at["in_b"]
        pw1_w, pw1_b = cv["pw1_w"], cv["pw1_b"]
        bn_scale = cv["bn_g"] / jnp.sqrt(cv["bn_var"] + 1e-5)
        bn_shift = cv["bn_b"] - cv["bn_mu"] * bn_scale

        mats_d = [in_w[:d].T, in_w[d:2 * d].T, in_w[2 * d:].T, at["out_w"].T,
                  pw1_w[:d].T, pw1_w[d:].T, cv["pw2_w"].T]
        md = jnp.stack([_padm(m, Dp, Dp) for m in mats_d]
                       + [jnp.zeros((Dp, Dp), jnp.float32)]
                       * (8 - len(mats_d))).astype(bf16)
        mdf = jnp.stack([_padm(ff1["w1"].T, Dp, Fp),
                         _padm(ff2["w1"].T, Dp, Fp)]).astype(bf16)
        mfd = jnp.stack([_padm(ff1["w2"].T, Fp, Dp),
                         _padm(ff2["w2"].T, Fp, Dp)]).astype(bf16)
        dw = _padm(cv["dw_w"][:, 0, :].T, Kp, Dp)

        vrows = [ff1["ln_g"], ff1["ln_b"], ff1["b2"],
                 at["ln_g"], at["ln_b"], in_b[:d], in_b[d:2 * d], in_b[2 * d:],
                 at["out_b"],
                 cv["ln_g"], cv["ln_b"], pw1_b[:d], pw1_b[d:], cv["dw_b"],
                 bn_scale, bn_shift, cv["pw2_b"],
                 ff2["ln_g"], ff2["ln_b"], ff2["b2"],
                 blk["ln_g"], blk["ln_b"]]
        nvd = _rup(len(vrows), 8)
        vd = jnp.stack([_padv(v, Dp) for v in vrows]
                       + [jnp.zeros((Dp,), jnp.float32)] * (nvd - len(vrows)))
        vf = jnp.stack([_padv(ff1["b1"], Fp), _padv(ff2["b1"], Fp)]
                       + [jnp.zeros((Fp,), jnp.float32)] * 6)

        packed["blocks"].append(dict(md=md, mdf=mdf, mfd=mfd, dw=dw,
                                     vd=vd, vf=vf))
    return packed


def init_params(key, d_model, d_ff, num_heads, num_layers, kernel_size,
                num_classes):
    keys = iter(jax.random.split(key, 256))

    def W(shape, scale=0.05):
        return jax.random.normal(next(keys), shape, jnp.float32) * scale

    def ones(shape):
        return jnp.ones(shape, jnp.float32)

    def zeros(shape):
        return jnp.zeros(shape, jnp.float32)

    p = {
        "conv1_w": W((32, 1, 3, 3)), "conv1_b": W((32,), 0.01),
        "conv2_w": W((64, 32, 3, 3)), "conv2_b": W((64,), 0.01),
        "proj_w": W((d_model, 64)), "proj_b": W((d_model,), 0.01),
        "cls_w": W((num_classes, d_model)), "cls_b": W((num_classes,), 0.01),
        "blocks": [],
    }
    for _ in range(num_layers):
        blk = {}
        for name in ("ff1", "ff2"):
            blk[name] = dict(w1=W((d_ff, d_model)), b1=W((d_ff,), 0.01),
                             w2=W((d_model, d_ff)), b2=W((d_model,), 0.01),
                             ln_g=ones((d_model,)), ln_b=zeros((d_model,)))
        blk["attn"] = dict(ln_g=ones((d_model,)), ln_b=zeros((d_model,)),
                           in_w=W((3 * d_model, d_model)),
                           in_b=W((3 * d_model,), 0.01),
                           out_w=W((d_model, d_model)),
                           out_b=W((d_model,), 0.01))
        blk["conv"] = dict(ln_g=ones((d_model,)), ln_b=zeros((d_model,)),
                           pw1_w=W((2 * d_model, d_model)),
                           pw1_b=W((2 * d_model,), 0.01),
                           dw_w=W((d_model, 1, kernel_size)),
                           dw_b=W((d_model,), 0.01),
                           bn_g=ones((d_model,)), bn_b=zeros((d_model,)),
                           bn_mu=zeros((d_model,)), bn_var=ones((d_model,)),
                           pw2_w=W((d_model, d_model)),
                           pw2_b=W((d_model,), 0.01))
        blk["ln_g"] = ones((d_model,))
        blk["ln_b"] = zeros((d_model,))
        p["blocks"].append(blk)
    return p


if __name__ == "__main__":
    d_model, d_ff, num_heads = 32, 64, 4
    num_layers, kernel_size, num_classes = 2, 7, 10

    key = jax.random.PRNGKey(0)
    pkey, xkey = jax.random.split(key)
    params = init_params(pkey, d_model, d_ff, num_heads, num_layers,
                         kernel_size, num_classes)

    # (B, 1, H, W) spectrogram-like input; two stride-2 3x3 convs -> S = 9.
    x = jax.random.normal(xkey, (2, 1, 16, 16), jnp.float32)
    S = conv_out(conv_out(16)) * conv_out(conv_out(16))

    packed = pack_params(params, d_model=d_model, d_ff=d_ff,
                         kernel_size=kernel_size, num_classes=num_classes, S=S)

    fwd = jax.jit(functools.partial(conformer_forward, num_heads=num_heads,
                                    num_classes=num_classes, d_model=d_model,
                                    kernel_size=kernel_size))
    out = fwd(x, packed)
    jax.block_until_ready(out)
    assert out.shape == (2, num_classes)
    print("KERNEL_OK")
</pallas_src>

<mosaic_0001>
module attributes {stable_mosaic.version = 11 : i64} {
  func.func @_classifier_kernel(%arg0: i32, %arg1: memref<2x16x128xf32, #tpu.memory_space<vmem>>, %arg2: memref<128x128xbf16, #tpu.memory_space<vmem>>, %arg3: memref<1x128xf32, #tpu.memory_space<vmem>>, %arg4: memref<2x128xf32, #tpu.memory_space<vmem>>) attributes {dimension_semantics = [#tpu.dimension_semantics<arbitrary>], iteration_bounds = array<i64: 1>, scalar_prefetch = 0 : i64, scratch_operands = 0 : i64, tpu.core_type = #tpu.core_type<tc>, window_params = [{pipeline_mode = #tpu.pipeline_mode<synchronous>, transform_indices = @transform_0, window_bounds = array<i64: 2, 16, 128>}, {pipeline_mode = #tpu.pipeline_mode<synchronous>, transform_indices = @transform_1, window_bounds = array<i64: 128, 128>}, {pipeline_mode = #tpu.pipeline_mode<synchronous>, transform_indices = @transform_2, window_bounds = array<i64: 1, 128>}, {pipeline_mode = #tpu.pipeline_mode<synchronous>, transform_indices = @transform_3, window_bounds = array<i64: 2, 128>}]} {
    %0 = tpu.iota {dimensions = array<i32: 1>} : vector<1x16x1xi32>
    %c9_i32 = arith.constant 9 : i32
    %1 = vector.broadcast %c9_i32 : i32 to vector<1x16x1xi32>
    %2 = arith.cmpi slt, %0, %1 : vector<1x16x1xi32>
    %3 = arith.extui %2 : vector<1x16x1xi1> to vector<1x16x1xi32>
    %4 = arith.sitofp %3 : vector<1x16x1xi32> to vector<1x16x1xf32>
    %c0 = arith.constant 0 : index
    %c0_0 = arith.constant 0 : index
    %c0_1 = arith.constant 0 : index
    %5 = vector.load %arg1[%c0, %c0_0, %c0_1] : memref<2x16x128xf32, #tpu.memory_space<vmem>>, vector<2x16x128xf32>
    %6 = vector.broadcast %4 : vector<1x16x1xf32> to vector<2x16x128xf32>
    %7 = arith.mulf %5, %6 : vector<2x16x128xf32>
    %cst = arith.constant dense<0.000000e+00> : vector<2x128xf32>
    %8 = vector.multi_reduction <add>, %7, %cst [1] : vector<2x16x128xf32> to vector<2x128xf32>
    %cst_2 = arith.constant 0.111111112 : f32
    %9 = vector.broadcast %cst_2 : f32 to vector<2x128xf32>
    %10 = arith.mulf %8, %9 : vector<2x128xf32>
    %11 = arith.truncf %10 : vector<2x128xf32> to vector<2x128xbf16>
    %c0_3 = arith.constant 0 : index
    %c0_4 = arith.constant 0 : index
    %12 = vector.load %arg2[%c0_3, %c0_4] : memref<128x128xbf16, #tpu.memory_space<vmem>>, vector<128x128xbf16>
    %cst_5 = arith.constant dense<0.000000e+00> : vector<2x128xf32>
    %13 = tpu.matmul %11, %12, %cst_5 {dimension_numbers = #tpu.dot_dimension_numbers<[1], [0], [0], [1], [0, 0, 1, 1], [], []>} : vector<2x128xbf16>, vector<128x128xbf16>, vector<2x128xf32> -> vector<2x128xf32>
    %c0_6 = arith.constant 0 : index
    %c0_7 = arith.constant 0 : index
    %14 = vector.load %arg3[%c0_6, %c0_7] : memref<1x128xf32, #tpu.memory_space<vmem>>, vector<1x128xf32>
    %15 = vector.broadcast %14 : vector<1x128xf32> to vector<2x128xf32>
    %16 = arith.addf %13, %15 : vector<2x128xf32>
    %c0_8 = arith.constant 0 : index
    %c0_9 = arith.constant 0 : index
    %17 = vector.load %arg4[%c0_8, %c0_9] : memref<2x128xf32, #tpu.memory_space<vmem>>, vector<2x128xf32>
    tpu.vector_store %arg4[%c0_8, %c0_9], %16 {strides = array<i32>} : memref<2x128xf32, #tpu.memory_space<vmem>>, vector<2x128xf32>,
    return
  }
  func.func @transform_0(%arg0: i32) -> (i32, i32, i32) {
    %c0_i32 = arith.constant 0 : i32
    %c0_i32_0 = arith.constant 0 : i32
    %c0_i32_1 = arith.constant 0 : i32
    %c0_i32_2 = arith.constant 0 : i32
    return %c0_i32, %c0_i32_0, %c0_i32_1 : i32, i32, i32
  }
  func.func @transform_1(%arg0: i32) -> (i32, i32) {
    %c0_i32 = arith.constant 0 : i32
    %c0_i32_0 = arith.constant 0 : i32
    %c0_i32_1 = arith.constant 0 : i32
    return %c0_i32, %c0_i32_0 : i32, i32
  }
  func.func @transform_2(%arg0: i32) -> (i32, i32) {
    %c0_i32 = arith.constant 0 : i32
    %c0_i32_0 = arith.constant 0 : i32
    %c0_i32_1 = arith.constant 0 : i32
    return %c0_i32, %c0_i32_0 : i32, i32
  }
  func.func @transform_3(%arg0: i32) -> (i32, i32) {
    %c0_i32 = arith.constant 0 : i32
    %c0_i32_0 = arith.constant 0 : i32
    %c0_i32_1 = arith.constant 0 : i32
    return %c0_i32, %c0_i32_0 : i32, i32
  }
}

module attributes {stable_mosaic.version = 11 : i64} {
  func.func @_stem_kernel(%arg0: i32, %arg1: memref<1x16x128xf32, #tpu.memory_space<vmem>>, %arg2: memref<128x128xbf16, #tpu.memory_space<vmem>>, %arg3: memref<1x128xf32, #tpu.memory_space<vmem>>, %arg4: memref<16x128xf32, #tpu.memory_space<vmem>>, %arg5: memref<1x16x128xf32, #tpu.memory_space<vmem>>) attributes {dimension_semantics = [#tpu.dimension_semantics<parallel>], iteration_bounds = array<i64: 2>, scalar_prefetch = 0 : i64, scratch_operands = 0 : i64, tpu.core_type = #tpu.core_type<tc>, window_params = [{transform_indices = @transform_0, window_bounds = array<i64: 1, 16, 128>}, {pipeline_mode = #tpu.pipeline_mode<synchronous>, transform_indices = @transform_1, window_bounds = array<i64: 128, 128>}, {pipeline_mode = #tpu.pipeline_mode<synchronous>, transform_indices = @transform_2, window_bounds = array<i64: 1, 128>}, {pipeline_mode = #tpu.pipeline_mode<synchronous>, transform_indices = @transform_3, window_bounds = array<i64: 16, 128>}, {transform_indices = @transform_4, window_bounds = array<i64: 1, 16, 128>}]} {
    %c0 = arith.constant 0 : index
    %c0_0 = arith.constant 0 : index
    %c0_1 = arith.constant 0 : index
    %0 = vector.load %arg1[%c0, %c0_0, %c0_1] : memref<1x16x128xf32, #tpu.memory_space<vmem>>, vector<1x16x128xf32>
    %1 = vector.shape_cast %0 : vector<1x16x128xf32> to vector<16x128xf32>
    %2 = arith.truncf %1 : vector<16x128xf32> to vector<16x128xbf16>
    %c0_2 = arith.constant 0 : index
    %c0_3 = arith.constant 0 : index
    %3 = vector.load %arg2[%c0_2, %c0_3] : memref<128x128xbf16, #tpu.memory_space<vmem>>, vector<128x128xbf16>
    %cst = arith.constant dense<0.000000e+00> : vector<16x128xf32>
    %4 = tpu.matmul %2, %3, %cst {dimension_numbers = #tpu.dot_dimension_numbers<[1], [0], [0], [1], [0, 0, 1, 1], [], []>} : vector<16x128xbf16>, vector<128x128xbf16>, vector<16x128xf32> -> vector<16x128xf32>
    %c0_4 = arith.constant 0 : index
    %c0_5 = arith.constant 0 : index
    %5 = vector.load %arg3[%c0_4, %c0_5] : memref<1x128xf32, #tpu.memory_space<vmem>>, vector<1x128xf32>
    %6 = vector.broadcast %5 : vector<1x128xf32> to vector<16x128xf32>
    %7 = arith.addf %4, %6 : vector<16x128xf32>
    %c0_6 = arith.constant 0 : index
    %c0_7 = arith.constant 0 : index
    %8 = vector.load %arg4[%c0_6, %c0_7] : memref<16x128xf32, #tpu.memory_space<vmem>>, vector<16x128xf32>
    %9 = arith.addf %7, %8 : vector<16x128xf32>
    %c0_8 = arith.constant 0 : index
    %c0_9 = arith.constant 0 : index
    %c0_10 = arith.constant 0 : index
    %10 = vector.load %arg5[%c0_8, %c0_9, %c0_10] : memref<1x16x128xf32, #tpu.memory_space<vmem>>, vector<1x16x128xf32>
    %11 = vector.shape_cast %10 : vector<1x16x128xf32> to vector<16x128xf32>
    %12 = vector.shape_cast %9 : vector<16x128xf32> to vector<1x16x128xf32>
    tpu.vector_store %arg5[%c0_8, %c0_9, %c0_10], %12 {strides = array<i32>} : memref<1x16x128xf32, #tpu.memory_space<vmem>>, vector<1x16x128xf32>,
    return
  }
  func.func @transform_0(%arg0: i32) -> (i32, i32, i32) {
    %c0_i32 = arith.constant 0 : i32
    %c0_i32_0 = arith.constant 0 : i32
    %c0_i32_1 = arith.constant 0 : i32
    return %arg0, %c0_i32, %c0_i32_0 : i32, i32, i32
  }
  func.func @transform_1(%arg0: i32) -> (i32, i32) {
    %c0_i32 = arith.constant 0 : i32
    %c0_i32_0 = arith.constant 0 : i32
    %c0_i32_1 = arith.constant 0 : i32
    return %c0_i32, %c0_i32_0 : i32, i32
  }
  func.func @transform_2(%arg0: i32) -> (i32, i32) {
    %c0_i32 = arith.constant 0 : i32
    %c0_i32_0 = arith.constant 0 : i32
    %c0_i32_1 = arith.constant 0 : i32
    return %c0_i32, %c0_i32_0 : i32, i32
  }
  func.func @transform_3(%arg0: i32) -> (i32, i32) {
    %c0_i32 = arith.constant 0 : i32
    %c0_i32_0 = arith.constant 0 : i32
    %c0_i32_1 = arith.constant 0 : i32
    return %c0_i32, %c0_i32_0 : i32, i32
  }
  func.func @transform_4(%arg0: i32) -> (i32, i32, i32) {
    %c0_i32 = arith.constant 0 : i32
    %c0_i32_0 = arith.constant 0 : i32
    %c0_i32_1 = arith.constant 0 : i32
    return %arg0, %c0_i32, %c0_i32_0 : i32, i32, i32
  }
}

module attributes {stable_mosaic.version = 11 : i64} {
  func.func @_block_kernel(%arg0: i32, %arg1: memref<1x16x128xf32, #tpu.memory_space<vmem>>, %arg2: memref<8x128x128xbf16, #tpu.memory_space<vmem>>, %arg3: memref<2x128x128xbf16, #tpu.memory_space<vmem>>, %arg4: memref<2x128x128xbf16, #tpu.memory_space<vmem>>, %arg5: memref<8x128xf32, #tpu.memory_space<vmem>>, %arg6: memref<24x128xf32, #tpu.memory_space<vmem>>, %arg7: memref<8x128xf32, #tpu.memory_space<vmem>>, %arg8: memref<8x16x16xbf16, #tpu.memory_space<vmem>>, %arg9: memref<1x16x128xf32, #tpu.memory_space<vmem>>) attributes {dimension_semantics = [#tpu.dimension_semantics<parallel>], iteration_bounds = array<i64: 2>, scalar_prefetch = 0 : i64, scratch_operands = 0 : i64, tpu.core_type = #tpu.core_type<tc>, window_params = [{transform_indices = @transform_0, window_bounds = array<i64: 1, 16, 128>}, {pipeline_mode = #tpu.pipeline_mode<synchronous>, transform_indices = @transform_1, window_bounds = array<i64: 8, 128, 128>}, {pipeline_mode = #tpu.pipeline_mode<synchronous>, transform_indices = @transform_2, window_bounds = array<i64: 2, 128, 128>}, {pipeline_mode = #tpu.pipeline_mode<synchronous>, transform_indices = @transform_3, window_bounds = array<i64: 2, 128, 128>}, {pipeline_mode = #tpu.pipeline_mode<synchronous>, transform_indices = @transform_4, window_bounds = array<i64: 8, 128>}, {pipeline_mode = #tpu.pipeline_mode<synchronous>, transform_indices = @transform_5, window_bounds = array<i64: 24, 128>}, {pipeline_mode = #tpu.pipeline_mode<synchronous>, transform_indices = @transform_6, window_bounds = array<i64: 8, 128>}, {pipeline_mode = #tpu.pipeline_mode<synchronous>, transform_indices = @transform_7, window_bounds = array<i64: 8, 16, 16>}, {transform_indices = @transform_8, window_bounds = array<i64: 1, 16, 128>}]} {
    %0 = tpu.iota {dimensions = array<i32: 1>} : vector<1x128xi32>
    %c32_i32 = arith.constant 32 : i32
    %1 = vector.broadcast %c32_i32 : i32 to vector<1x128xi32>
    %2 = arith.cmpi slt, %0, %1 : vector<1x128xi32>
    %3 = arith.extui %2 : vector<1x128xi1> to vector<1x128xi32>
    %4 = arith.sitofp %3 : vector<1x128xi32> to vector<1x128xf32>
    %5 = tpu.iota {dimensions = array<i32: 0>} : vector<16x1xi32>
    %c9_i32 = arith.constant 9 : i32
    %6 = vector.broadcast %c9_i32 : i32 to vector<16x1xi32>
    %7 = arith.cmpi slt, %5, %6 : vector<16x1xi32>
    %8 = arith.extui %7 : vector<16x1xi1> to vector<16x1xi32>
    %9 = arith.sitofp %8 : vector<16x1xi32> to vector<16x1xf32>
    %10 = tpu.iota {dimensions = array<i32: 1>} : vector<1x16xi32>
    %c9_i32_0 = arith.constant 9 : i32
    %11 = vector.broadcast %c9_i32_0 : i32 to vector<1x16xi32>
    %12 = arith.cmpi slt, %10, %11 : vector<1x16xi32>
    %cst = arith.constant 0.000000e+00 : f32
    %cst_1 = arith.constant -1.000000e+30 : f32
    %13 = vector.broadcast %cst : f32 to vector<1x16xf32>
    %14 = vector.broadcast %cst_1 : f32 to vector<1x16xf32>
    %15 = arith.select %12, %13, %14 : vector<1x16xi1>, vector<1x16xf32>
    %c0 = arith.constant 0 : index
    %c0_2 = arith.constant 0 : index
    %c0_3 = arith.constant 0 : index
    %16 = vector.load %arg1[%c0, %c0_2, %c0_3] : memref<1x16x128xf32, #tpu.memory_space<vmem>>, vector<1x16x128xf32>
    %17 = vector.shape_cast %16 : vector<1x16x128xf32> to vector<16x128xf32>
    %c0_4 = arith.constant 0 : index
    %c0_5 = arith.constant 0 : index
    %c0_6 = arith.constant 0 : index
    %18 = vector.load %arg3[%c0_4, %c0_5, %c0_6] : memref<2x128x128xbf16, #tpu.memory_space<vmem>>, vector<1x128x128xbf16>
    %19 = vector.shape_cast %18 : vector<1x128x128xbf16> to vector<128x128xbf16>
    %20 = arith.truncf %17 : vector<16x128xf32> to vector<16x128xbf16>
    %cst_7 = arith.constant dense<0.000000e+00> : vector<16x128xf32>
    %21 = tpu.matmul %20, %19, %cst_7 {dimension_numbers = #tpu.dot_dimension_numbers<[1], [0], [0], [1], [0, 0, 1, 1], [], []>} : vector<16x128xbf16>, vector<128x128xbf16>, vector<16x128xf32> -> vector<16x128xf32>
    %c0_8 = arith.constant 0 : index
    %c0_9 = arith.constant 0 : index
    %22 = vector.load %arg7[%c0_8, %c0_9] : memref<8x128xf32, #tpu.memory_space<vmem>>, vector<1x128xf32>
    %23 = vector.shape_cast %22 : vector<1x128xf32> to vector<128xf32>
    %24 = vector.shape_cast %23 : vector<128xf32> to vector<1x128xf32>
    %25 = vector.broadcast %24 : vector<1x128xf32> to vector<16x128xf32>
    %26 = arith.addf %21, %25 : vector<16x128xf32>
    %cst_10 = arith.constant 0.000000e+00 : f32
    %27 = vector.broadcast %cst_10 : f32 to vector<16x128xf32>
    %28 = arith.maximumf %26, %27 : vector<16x128xf32>
    %c0_11 = arith.constant 0 : index
    %c0_12 = arith.constant 0 : index
    %c0_13 = arith.constant 0 : index
    %29 = vector.load %arg4[%c0_11, %c0_12, %c0_13] : memref<2x128x128xbf16, #tpu.memory_space<vmem>>, vector<1x128x128xbf16>
    %30 = vector.shape_cast %29 : vector<1x128x128xbf16> to vector<128x128xbf16>
    %31 = arith.truncf %28 : vector<16x128xf32> to vector<16x128xbf16>
    %cst_14 = arith.constant dense<0.000000e+00> : vector<16x128xf32>
    %32 = tpu.matmul %31, %30, %cst_14 {dimension_numbers = #tpu.dot_dimension_numbers<[1], [0], [0], [1], [0, 0, 1, 1], [], []>} : vector<16x128xbf16>, vector<128x128xbf16>, vector<16x128xf32> -> vector<16x128xf32>
    %c2 = arith.constant 2 : index
    %c0_15 = arith.constant 0 : index
    %33 = vector.load %arg6[%c2, %c0_15] : memref<24x128xf32, #tpu.memory_space<vmem>>, vector<1x128xf32>
    %34 = vector.shape_cast %33 : vector<1x128xf32> to vector<128xf32>
    %35 = vector.shape_cast %34 : vector<128xf32> to vector<1x128xf32>
    %36 = vector.broadcast %35 : vector<1x128xf32> to vector<16x128xf32>
    %37 = arith.addf %32, %36 : vector<16x128xf32>
    %38 = arith.addf %17, %37 : vector<16x128xf32>
    %39 = vector.broadcast %4 : vector<1x128xf32> to vector<16x128xf32>
    %40 = arith.mulf %38, %39 : vector<16x128xf32>
    %cst_16 = arith.constant dense<0.000000e+00> : vector<16xf32>
    %41 = vector.multi_reduction <add>, %40, %cst_16 [1] : vector<16x128xf32> to vector<16xf32>
    %42 = vector.shape_cast %41 : vector<16xf32> to vector<16x1xf32>
    %cst_17 = arith.constant 3.125000e-02 : f32
    %43 = vector.broadcast %cst_17 : f32 to vector<16x1xf32>
    %44 = arith.mulf %42, %43 : vector<16x1xf32>
    %45 = vector.broadcast %44 : vector<16x1xf32> to vector<16x128xf32>
    %46 = arith.subf %38, %45 : vector<16x128xf32>
    %47 = vector.broadcast %4 : vector<1x128xf32> to vector<16x128xf32>
    %48 = arith.mulf %46, %47 : vector<16x128xf32>
    %49 = arith.mulf %48, %48 : vector<16x128xf32>
    %cst_18 = arith.constant dense<0.000000e+00> : vector<16xf32>
    %50 = vector.multi_reduction <add>, %49, %cst_18 [1] : vector<16x128xf32> to vector<16xf32>
    %51 = vector.shape_cast %50 : vector<16xf32> to vector<16x1xf32>
    %cst_19 = arith.constant 3.125000e-02 : f32
    %52 = vector.broadcast %cst_19 : f32 to vector<16x1xf32>
    %53 = arith.mulf %51, %52 : vector<16x1xf32>
    %cst_20 = arith.constant 9.99999974E-6 : f32
    %54 = vector.broadcast %cst_20 : f32 to vector<16x1xf32>
    %55 = arith.addf %53, %54 : vector<16x1xf32>
    %56 = math.rsqrt %55 : vector<16x1xf32>
    %57 = vector.broadcast %56 : vector<16x1xf32> to vector<16x128xf32>
    %58 = arith.mulf %48, %57 : vector<16x128xf32>
    %c0_21 = arith.constant 0 : index
    %c0_22 = arith.constant 0 : index
    %59 = vector.load %arg6[%c0_21, %c0_22] : memref<24x128xf32, #tpu.memory_space<vmem>>, vector<1x128xf32>
    %60 = vector.shape_cast %59 : vector<1x128xf32> to vector<128xf32>
    %61 = vector.shape_cast %60 : vector<128xf32> to vector<1x128xf32>
    %62 = vector.broadcast %61 : vector<1x128xf32> to vector<16x128xf32>
    %63 = arith.mulf %58, %62 : vector<16x128xf32>
    %c1 = arith.constant 1 : index
    %c0_23 = arith.constant 0 : index
    %64 = vector.load %arg6[%c1, %c0_23] : memref<24x128xf32, #tpu.memory_space<vmem>>, vector<1x128xf32>
    %65 = vector.shape_cast %64 : vector<1x128xf32> to vector<128xf32>
    %66 = vector.shape_cast %65 : vector<128xf32> to vector<1x128xf32>
    %67 = vector.broadcast %66 : vector<1x128xf32> to vector<16x128xf32>
    %68 = arith.addf %63, %67 : vector<16x128xf32>
    %cst_24 = arith.constant 5.000000e-01 : f32
    %69 = vector.broadcast %cst_24 : f32 to vector<16x128xf32>
    %70 = arith.mulf %69, %68 : vector<16x128xf32>
    %71 = arith.addf %17, %70 : vector<16x128xf32>
    %72 = vector.broadcast %4 : vector<1x128xf32> to vector<16x128xf32>
    %73 = arith.mulf %71, %72 : vector<16x128xf32>
    %cst_25 = arith.constant dense<0.000000e+00> : vector<16xf32>
    %74 = vector.multi_reduction <add>, %73, %cst_25 [1] : vector<16x128xf32> to vector<16xf32>
    %75 = vector.shape_cast %74 : vector<16xf32> to vector<16x1xf32>
    %cst_26 = arith.constant 3.125000e-02 : f32
    %76 = vector.broadcast %cst_26 : f32 to vector<16x1xf32>
    %77 = arith.mulf %75, %76 : vector<16x1xf32>
    %78 = vector.broadcast %77 : vector<16x1xf32> to vector<16x128xf32>
    %79 = arith.subf %71, %78 : vector<16x128xf32>
    %80 = vector.broadcast %4 : vector<1x128xf32> to vector<16x128xf32>
    %81 = arith.mulf %79, %80 : vector<16x128xf32>
    %82 = arith.mulf %81, %81 : vector<16x128xf32>
    %cst_27 = arith.constant dense<0.000000e+00> : vector<16xf32>
    %83 = vector.multi_reduction <add>, %82, %cst_27 [1] : vector<16x128xf32> to vector<16xf32>
    %84 = vector.shape_cast %83 : vector<16xf32> to vector<16x1xf32>
    %cst_28 = arith.constant 3.125000e-02 : f32
    %85 = vector.broadcast %cst_28 : f32 to vector<16x1xf32>
    %86 = arith.mulf %84, %85 : vector<16x1xf32>
    %cst_29 = arith.constant 9.99999974E-6 : f32
    %87 = vector.broadcast %cst_29 : f32 to vector<16x1xf32>
    %88 = arith.addf %86, %87 : vector<16x1xf32>
    %89 = math.rsqrt %88 : vector<16x1xf32>
    %90 = vector.broadcast %89 : vector<16x1xf32> to vector<16x128xf32>
    %91 = arith.mulf %81, %90 : vector<16x128xf32>
    %c3 = arith.constant 3 : index
    %c0_30 = arith.constant 0 : index
    %92 = vector.load %arg6[%c3, %c0_30] : memref<24x128xf32, #tpu.memory_space<vmem>>, vector<1x128xf32>
    %93 = vector.shape_cast %92 : vector<1x128xf32> to vector<128xf32>
    %94 = vector.shape_cast %93 : vector<128xf32> to vector<1x128xf32>
    %95 = vector.broadcast %94 : vector<1x128xf32> to vector<16x128xf32>
    %96 = arith.mulf %91, %95 : vector<16x128xf32>
    %c4 = arith.constant 4 : index
    %c0_31 = arith.constant 0 : index
    %97 = vector.load %arg6[%c4, %c0_31] : memref<24x128xf32, #tpu.memory_space<vmem>>, vector<1x128xf32>
    %98 = vector.shape_cast %97 : vector<1x128xf32> to vector<128xf32>
    %99 = vector.shape_cast %98 : vector<128xf32> to vector<1x128xf32>
    %100 = vector.broadcast %99 : vector<1x128xf32> to vector<16x128xf32>
    %101 = arith.addf %96, %100 : vector<16x128xf32>
    %c0_32 = arith.constant 0 : index
    %c0_33 = arith.constant 0 : index
    %c0_34 = arith.constant 0 : index
    %102 = vector.load %arg2[%c0_32, %c0_33, %c0_34] : memref<8x128x128xbf16, #tpu.memory_space<vmem>>, vector<1x128x128xbf16>
    %103 = vector.shape_cast %102 : vector<1x128x128xbf16> to vector<128x128xbf16>
    %104 = arith.truncf %101 : vector<16x128xf32> to vector<16x128xbf16>
    %cst_35 = arith.constant dense<0.000000e+00> : vector<16x128xf32>
    %105 = tpu.matmul %104, %103, %cst_35 {dimension_numbers = #tpu.dot_dimension_numbers<[1], [0], [0], [1], [0, 0, 1, 1], [], []>} : vector<16x128xbf16>, vector<128x128xbf16>, vector<16x128xf32> -> vector<16x128xf32>
    %c5 = arith.constant 5 : index
    %c0_36 = arith.constant 0 : index
    %106 = vector.load %arg6[%c5, %c0_36] : memref<24x128xf32, #tpu.memory_space<vmem>>, vector<1x128xf32>
    %107 = vector.shape_cast %106 : vector<1x128xf32> to vector<128xf32>
    %108 = vector.shape_cast %107 : vector<128xf32> to vector<1x128xf32>
    %109 = vector.broadcast %108 : vector<1x128xf32> to vector<16x128xf32>
    %110 = arith.addf %105, %109 : vector<16x128xf32>
    %c1_37 = arith.constant 1 : index
    %c0_38 = arith.constant 0 : index
    %c0_39 = arith.constant 0 : index
    %111 = vector.load %arg2[%c1_37, %c0_38, %c0_39] : memref<8x128x128xbf16, #tpu.memory_space<vmem>>, vector<1x128x128xbf16>
    %112 = vector.shape_cast %111 : vector<1x128x128xbf16> to vector<128x128xbf16>
    %113 = arith.truncf %101 : vector<16x128xf32> to vector<16x128xbf16>
    %cst_40 = arith.constant dense<0.000000e+00> : vector<16x128xf32>
    %114 = tpu.matmul %113, %112, %cst_40 {dimension_numbers = #tpu.dot_dimension_numbers<[1], [0], [0], [1], [0, 0, 1, 1], [], []>} : vector<16x128xbf16>, vector<128x128xbf16>, vector<16x128xf32> -> vector<16x128xf32>
    %c6 = arith.constant 6 : index
    %c0_41 = arith.constant 0 : index
    %115 = vector.load %arg6[%c6, %c0_41] : memref<24x128xf32, #tpu.memory_space<vmem>>, vector<1x128xf32>
    %116 = vector.shape_cast %115 : vector<1x128xf32> to vector<128xf32>
    %117 = vector.shape_cast %116 : vector<128xf32> to vector<1x128xf32>
    %118 = vector.broadcast %117 : vector<1x128xf32> to vector<16x128xf32>
    %119 = arith.addf %114, %118 : vector<16x128xf32>
    %c2_42 = arith.constant 2 : index
    %c0_43 = arith.constant 0 : index
    %c0_44 = arith.constant 0 : index
    %120 = vector.load %arg2[%c2_42, %c0_43, %c0_44] : memref<8x128x128xbf16, #tpu.memory_space<vmem>>, vector<1x128x128xbf16>
    %121 = vector.shape_cast %120 : vector<1x128x128xbf16> to vector<128x128xbf16>
    %122 = arith.truncf %101 : vector<16x128xf32> to vector<16x128xbf16>
    %cst_45 = arith.constant dense<0.000000e+00> : vector<16x128xf32>
    %123 = tpu.matmul %122, %121, %cst_45 {dimension_numbers = #tpu.dot_dimension_numbers<[1], [0], [0], [1], [0, 0, 1, 1], [], []>} : vector<16x128xbf16>, vector<128x128xbf16>, vector<16x128xf32> -> vector<16x128xf32>
    %c7 = arith.constant 7 : index
    %c0_46 = arith.constant 0 : index
    %124 = vector.load %arg6[%c7, %c0_46] : memref<24x128xf32, #tpu.memory_space<vmem>>, vector<1x128xf32>
    %125 = vector.shape_cast %124 : vector<1x128xf32> to vector<128xf32>
    %126 = vector.shape_cast %125 : vector<128xf32> to vector<1x128xf32>
    %127 = vector.broadcast %126 : vector<1x128xf32> to vector<16x128xf32>
    %128 = arith.addf %123, %127 : vector<16x128xf32>
    %129 = arith.truncf %119 : vector<16x128xf32> to vector<16x128xbf16>
    %cst_47 = arith.constant 0.000000e+00 : f32
    %130 = vector.broadcast %cst_47 : f32 to vector<16x128xf32>
    %c0_i32 = arith.constant 0 : i32
    %131 = vector.broadcast %c0_i32 : i32 to vector<1x128xi32>
    %132 = arith.cmpi sge, %0, %131 : vector<1x128xi32>
    %c8_i32 = arith.constant 8 : i32
    %133 = vector.broadcast %c8_i32 : i32 to vector<1x128xi32>
    %134 = arith.cmpi slt, %0, %133 : vector<1x128xi32>
    %135 = arith.andi %132, %134 : vector<1x128xi1>
    %136 = arith.extui %135 : vector<1x128xi1> to vector<1x128xi32>
    %137 = arith.sitofp %136 : vector<1x128xi32> to vector<1x128xf32>
    %cst_48 = arith.constant 0.353553385 : f32
    %138 = vector.broadcast %cst_48 : f32 to vector<1x128xf32>
    %139 = arith.mulf %137, %138 : vector<1x128xf32>
    %140 = vector.broadcast %139 : vector<1x128xf32> to vector<16x128xf32>
    %141 = arith.mulf %110, %140 : vector<16x128xf32>
    %142 = arith.truncf %141 : vector<16x128xf32> to vector<16x128xbf16>
    %cst_49 = arith.constant dense<0.000000e+00> : vector<16x16xf32>
    %143 = tpu.matmul %142, %129, %cst_49 {dimension_numbers = #tpu.dot_dimension_numbers<[1], [1], [0], [0], [0, 0, 1, 0], [], []>} : vector<16x128xbf16>, vector<16x128xbf16>, vector<16x16xf32> -> vector<16x16xf32>
    %144 = vector.broadcast %15 : vector<1x16xf32> to vector<16x16xf32>
    %145 = arith.addf %143, %144 : vector<16x16xf32>
    %cst_50 = arith.constant dense<0xFF800000> : vector<16xf32>
    %146 = vector.multi_reduction <maximumf>, %145, %cst_50 [1] : vector<16x16xf32> to vector<16xf32>
    %147 = vector.shape_cast %146 : vector<16xf32> to vector<16x1xf32>
    %148 = vector.broadcast %147 : vector<16x1xf32> to vector<16x16xf32>
    %149 = arith.subf %145, %148 : vector<16x16xf32>
    %150 = math.exp %149 : vector<16x16xf32>
    %cst_51 = arith.constant dense<0.000000e+00> : vector<16xf32>
    %151 = vector.multi_reduction <add>, %150, %cst_51 [1] : vector<16x16xf32> to vector<16xf32>
    %152 = vector.shape_cast %151 : vector<16xf32> to vector<16x1xf32>
    %153 = tpu.reciprocal %152 {approx = true} : vector<16x1xf32> -> vector<16x1xf32>
    %154 = vector.broadcast %153 : vector<16x1xf32> to vector<16x16xf32>
    %155 = arith.mulf %150, %154 : vector<16x16xf32>
    %156 = vector.broadcast %137 : vector<1x128xf32> to vector<16x128xf32>
    %157 = arith.mulf %128, %156 : vector<16x128xf32>
    %158 = arith.truncf %157 : vector<16x128xf32> to vector<16x128xbf16>
    %159 = arith.truncf %155 : vector<16x16xf32> to vector<16x16xbf16>
    %cst_52 = arith.constant dense<0.000000e+00> : vector<16x128xf32>
    %160 = tpu.matmul %159, %158, %cst_52 {dimension_numbers = #tpu.dot_dimension_numbers<[1], [0], [0], [1], [0, 0, 1, 1], [], []>} : vector<16x16xbf16>, vector<16x128xbf16>, vector<16x128xf32> -> vector<16x128xf32>
    %161 = arith.addf %130, %160 : vector<16x128xf32>
    %c8_i32_53 = arith.constant 8 : i32
    %162 = vector.broadcast %c8_i32_53 : i32 to vector<1x128xi32>
    %163 = arith.cmpi sge, %0, %162 : vector<1x128xi32>
    %c16_i32 = arith.constant 16 : i32
    %164 = vector.broadcast %c16_i32 : i32 to vector<1x128xi32>
    %165 = arith.cmpi slt, %0, %164 : vector<1x128xi32>
    %166 = arith.andi %163, %165 : vector<1x128xi1>
    %167 = arith.extui %166 : vector<1x128xi1> to vector<1x128xi32>
    %168 = arith.sitofp %167 : vector<1x128xi32> to vector<1x128xf32>
    %cst_54 = arith.constant 0.353553385 : f32
    %169 = vector.broadcast %cst_54 : f32 to vector<1x128xf32>
    %170 = arith.mulf %168, %169 : vector<1x128xf32>
    %171 = vector.broadcast %170 : vector<1x128xf32> to vector<16x128xf32>
    %172 = arith.mulf %110, %171 : vector<16x128xf32>
    %173 = arith.truncf %172 : vector<16x128xf32> to vector<16x128xbf16>
    %cst_55 = arith.constant dense<0.000000e+00> : vector<16x16xf32>
    %174 = tpu.matmul %173, %129, %cst_55 {dimension_numbers = #tpu.dot_dimension_numbers<[1], [1], [0], [0], [0, 0, 1, 0], [], []>} : vector<16x128xbf16>, vector<16x128xbf16>, vector<16x16xf32> -> vector<16x16xf32>
    %175 = vector.broadcast %15 : vector<1x16xf32> to vector<16x16xf32>
    %176 = arith.addf %174, %175 : vector<16x16xf32>
    %cst_56 = arith.constant dense<0xFF800000> : vector<16xf32>
    %177 = vector.multi_reduction <maximumf>, %176, %cst_56 [1] : vector<16x16xf32> to vector<16xf32>
    %178 = vector.shape_cast %177 : vector<16xf32> to vector<16x1xf32>
    %179 = vector.broadcast %178 : vector<16x1xf32> to vector<16x16xf32>
    %180 = arith.subf %176, %179 : vector<16x16xf32>
    %181 = math.exp %180 : vector<16x16xf32>
    %cst_57 = arith.constant dense<0.000000e+00> : vector<16xf32>
    %182 = vector.multi_reduction <add>, %181, %cst_57 [1] : vector<16x16xf32> to vector<16xf32>
    %183 = vector.shape_cast %182 : vector<16xf32> to vector<16x1xf32>
    %184 = tpu.reciprocal %183 {approx = true} : vector<16x1xf32> -> vector<16x1xf32>
    %185 = vector.broadcast %184 : vector<16x1xf32> to vector<16x16xf32>
    %186 = arith.mulf %181, %185 : vector<16x16xf32>
    %187 = vector.broadcast %168 : vector<1x128xf32> to vector<16x128xf32>
    %188 = arith.mulf %128, %187 : vector<16x128xf32>
    %189 = arith.truncf %188 : vector<16x128xf32> to vector<16x128xbf16>
    %190 = arith.truncf %186 : vector<16x16xf32> to vector<16x16xbf16>
    %cst_58 = arith.constant dense<0.000000e+00> : vector<16x128xf32>
    %191 = tpu.matmul %190, %189, %cst_58 {dimension_numbers = #tpu.dot_dimension_numbers<[1], [0], [0], [1], [0, 0, 1, 1], [], []>} : vector<16x16xbf16>, vector<16x128xbf16>, vector<16x128xf32> -> vector<16x128xf32>
    %192 = arith.addf %161, %191 : vector<16x128xf32>
    %c16_i32_59 = arith.constant 16 : i32
    %193 = vector.broadcast %c16_i32_59 : i32 to vector<1x128xi32>
    %194 = arith.cmpi sge, %0, %193 : vector<1x128xi32>
    %c24_i32 = arith.constant 24 : i32
    %195 = vector.broadcast %c24_i32 : i32 to vector<1x128xi32>
    %196 = arith.cmpi slt, %0, %195 : vector<1x128xi32>
    %197 = arith.andi %194, %196 : vector<1x128xi1>
    %198 = arith.extui %197 : vector<1x128xi1> to vector<1x128xi32>
    %199 = arith.sitofp %198 : vector<1x128xi32> to vector<1x128xf32>
    %cst_60 = arith.constant 0.353553385 : f32
    %200 = vector.broadcast %cst_60 : f32 to vector<1x128xf32>
    %201 = arith.mulf %199, %200 : vector<1x128xf32>
    %202 = vector.broadcast %201 : vector<1x128xf32> to vector<16x128xf32>
    %203 = arith.mulf %110, %202 : vector<16x128xf32>
    %204 = arith.truncf %203 : vector<16x128xf32> to vector<16x128xbf16>
    %cst_61 = arith.constant dense<0.000000e+00> : vector<16x16xf32>
    %205 = tpu.matmul %204, %129, %cst_61 {dimension_numbers = #tpu.dot_dimension_numbers<[1], [1], [0], [0], [0, 0, 1, 0], [], []>} : vector<16x128xbf16>, vector<16x128xbf16>, vector<16x16xf32> -> vector<16x16xf32>
    %206 = vector.broadcast %15 : vector<1x16xf32> to vector<16x16xf32>
    %207 = arith.addf %205, %206 : vector<16x16xf32>
    %cst_62 = arith.constant dense<0xFF800000> : vector<16xf32>
    %208 = vector.multi_reduction <maximumf>, %207, %cst_62 [1] : vector<16x16xf32> to vector<16xf32>
    %209 = vector.shape_cast %208 : vector<16xf32> to vector<16x1xf32>
    %210 = vector.broadcast %209 : vector<16x1xf32> to vector<16x16xf32>
    %211 = arith.subf %207, %210 : vector<16x16xf32>
    %212 = math.exp %211 : vector<16x16xf32>
    %cst_63 = arith.constant dense<0.000000e+00> : vector<16xf32>
    %213 = vector.multi_reduction <add>, %212, %cst_63 [1] : vector<16x16xf32> to vector<16xf32>
    %214 = vector.shape_cast %213 : vector<16xf32> to vector<16x1xf32>
    %215 = tpu.reciprocal %214 {approx = true} : vector<16x1xf32> -> vector<16x1xf32>
    %216 = vector.broadcast %215 : vector<16x1xf32> to vector<16x16xf32>
    %217 = arith.mulf %212, %216 : vector<16x16xf32>
    %218 = vector.broadcast %199 : vector<1x128xf32> to vector<16x128xf32>
    %219 = arith.mulf %128, %218 : vector<16x128xf32>
    %220 = arith.truncf %219 : vector<16x128xf32> to vector<16x128xbf16>
    %221 = arith.truncf %217 : vector<16x16xf32> to vector<16x16xbf16>
    %cst_64 = arith.constant dense<0.000000e+00> : vector<16x128xf32>
    %222 = tpu.matmul %221, %220, %cst_64 {dimension_numbers = #tpu.dot_dimension_numbers<[1], [0], [0], [1], [0, 0, 1, 1], [], []>} : vector<16x16xbf16>, vector<16x128xbf16>, vector<16x128xf32> -> vector<16x128xf32>
    %223 = arith.addf %192, %222 : vector<16x128xf32>
    %c24_i32_65 = arith.constant 24 : i32
    %224 = vector.broadcast %c24_i32_65 : i32 to vector<1x128xi32>
    %225 = arith.cmpi sge, %0, %224 : vector<1x128xi32>
    %c32_i32_66 = arith.constant 32 : i32
    %226 = vector.broadcast %c32_i32_66 : i32 to vector<1x128xi32>
    %227 = arith.cmpi slt, %0, %226 : vector<1x128xi32>
    %228 = arith.andi %225, %227 : vector<1x128xi1>
    %229 = arith.extui %228 : vector<1x128xi1> to vector<1x128xi32>
    %230 = arith.sitofp %229 : vector<1x128xi32> to vector<1x128xf32>
    %cst_67 = arith.constant 0.353553385 : f32
    %231 = vector.broadcast %cst_67 : f32 to vector<1x128xf32>
    %232 = arith.mulf %230, %231 : vector<1x128xf32>
    %233 = vector.broadcast %232 : vector<1x128xf32> to vector<16x128xf32>
    %234 = arith.mulf %110, %233 : vector<16x128xf32>
    %235 = arith.truncf %234 : vector<16x128xf32> to vector<16x128xbf16>
    %cst_68 = arith.constant dense<0.000000e+00> : vector<16x16xf32>
    %236 = tpu.matmul %235, %129, %cst_68 {dimension_numbers = #tpu.dot_dimension_numbers<[1], [1], [0], [0], [0, 0, 1, 0], [], []>} : vector<16x128xbf16>, vector<16x128xbf16>, vector<16x16xf32> -> vector<16x16xf32>
    %237 = vector.broadcast %15 : vector<1x16xf32> to vector<16x16xf32>
    %238 = arith.addf %236, %237 : vector<16x16xf32>
    %cst_69 = arith.constant dense<0xFF800000> : vector<16xf32>
    %239 = vector.multi_reduction <maximumf>, %238, %cst_69 [1] : vector<16x16xf32> to vector<16xf32>
    %240 = vector.shape_cast %239 : vector<16xf32> to vector<16x1xf32>
    %241 = vector.broadcast %240 : vector<16x1xf32> to vector<16x16xf32>
    %242 = arith.subf %238, %241 : vector<16x16xf32>
    %243 = math.exp %242 : vector<16x16xf32>
    %cst_70 = arith.constant dense<0.000000e+00> : vector<16xf32>
    %244 = vector.multi_reduction <add>, %243, %cst_70 [1] : vector<16x16xf32> to vector<16xf32>
    %245 = vector.shape_cast %244 : vector<16xf32> to vector<16x1xf32>
    %246 = tpu.reciprocal %245 {approx = true} : vector<16x1xf32> -> vector<16x1xf32>
    %247 = vector.broadcast %246 : vector<16x1xf32> to vector<16x16xf32>
    %248 = arith.mulf %243, %247 : vector<16x16xf32>
    %249 = vector.broadcast %230 : vector<1x128xf32> to vector<16x128xf32>
    %250 = arith.mulf %128, %249 : vector<16x128xf32>
    %251 = arith.truncf %250 : vector<16x128xf32> to vector<16x128xbf16>
    %252 = arith.truncf %248 : vector<16x16xf32> to vector<16x16xbf16>
    %cst_71 = arith.constant dense<0.000000e+00> : vector<16x128xf32>
    %253 = tpu.matmul %252, %251, %cst_71 {dimension_numbers = #tpu.dot_dimension_numbers<[1], [0], [0], [1], [0, 0, 1, 1], [], []>} : vector<16x16xbf16>, vector<16x128xbf16>, vector<16x128xf32> -> vector<16x128xf32>
    %254 = arith.addf %223, %253 : vector<16x128xf32>
    %c3_72 = arith.constant 3 : index
    %c0_73 = arith.constant 0 : index
    %c0_74 = arith.constant 0 : index
    %255 = vector.load %arg2[%c3_72, %c0_73, %c0_74] : memref<8x128x128xbf16, #tpu.memory_space<vmem>>, vector<1x128x128xbf16>
    %256 = vector.shape_cast %255 : vector<1x128x128xbf16> to vector<128x128xbf16>
    %257 = arith.truncf %254 : vector<16x128xf32> to vector<16x128xbf16>
    %cst_75 = arith.constant dense<0.000000e+00> : vector<16x128xf32>
    %258 = tpu.matmul %257, %256, %cst_75 {dimension_numbers = #tpu.dot_dimension_numbers<[1], [0], [0], [1], [0, 0, 1, 1], [], []>} : vector<16x128xbf16>, vector<128x128xbf16>, vector<16x128xf32> -> vector<16x128xf32>
    %259 = arith.addf %71, %258 : vector<16x128xf32>
    %c8 = arith.constant 8 : index
    %c0_76 = arith.constant 0 : index
    %260 = vector.load %arg6[%c8, %c0_76] : memref<24x128xf32, #tpu.memory_space<vmem>>, vector<1x128xf32>
    %261 = vector.shape_cast %260 : vector<1x128xf32> to vector<128xf32>
    %262 = vector.shape_cast %261 : vector<128xf32> to vector<1x128xf32>
    %263 = vector.broadcast %262 : vector<1x128xf32> to vector<16x128xf32>
    %264 = arith.addf %259, %263 : vector<16x128xf32>
    %265 = vector.broadcast %4 : vector<1x128xf32> to vector<16x128xf32>
    %266 = arith.mulf %264, %265 : vector<16x128xf32>
    %cst_77 = arith.constant dense<0.000000e+00> : vector<16xf32>
    %267 = vector.multi_reduction <add>, %266, %cst_77 [1] : vector<16x128xf32> to vector<16xf32>
    %268 = vector.shape_cast %267 : vector<16xf32> to vector<16x1xf32>
    %cst_78 = arith.constant 3.125000e-02 : f32
    %269 = vector.broadcast %cst_78 : f32 to vector<16x1xf32>
    %270 = arith.mulf %268, %269 : vector<16x1xf32>
    %271 = vector.broadcast %270 : vector<16x1xf32> to vector<16x128xf32>
    %272 = arith.subf %264, %271 : vector<16x128xf32>
    %273 = vector.broadcast %4 : vector<1x128xf32> to vector<16x128xf32>
    %274 = arith.mulf %272, %273 : vector<16x128xf32>
    %275 = arith.mulf %274, %274 : vector<16x128xf32>
    %cst_79 = arith.constant dense<0.000000e+00> : vector<16xf32>
    %276 = vector.multi_reduction <add>, %275, %cst_79 [1] : vector<16x128xf32> to vector<16xf32>
    %277 = vector.shape_cast %276 : vector<16xf32> to vector<16x1xf32>
    %cst_80 = arith.constant 3.125000e-02 : f32
    %278 = vector.broadcast %cst_80 : f32 to vector<16x1xf32>
    %279 = arith.mulf %277, %278 : vector<16x1xf32>
    %cst_81 = arith.constant 9.99999974E-6 : f32
    %280 = vector.broadcast %cst_81 : f32 to vector<16x1xf32>
    %281 = arith.addf %279, %280 : vector<16x1xf32>
    %282 = math.rsqrt %281 : vector<16x1xf32>
    %283 = vector.broadcast %282 : vector<16x1xf32> to vector<16x128xf32>
    %284 = arith.mulf %274, %283 : vector<16x128xf32>
    %c9 = arith.constant 9 : index
    %c0_82 = arith.constant 0 : index
    %285 = vector.load %arg6[%c9, %c0_82] : memref<24x128xf32, #tpu.memory_space<vmem>>, vector<1x128xf32>
    %286 = vector.shape_cast %285 : vector<1x128xf32> to vector<128xf32>
    %287 = vector.shape_cast %286 : vector<128xf32> to vector<1x128xf32>
    %288 = vector.broadcast %287 : vector<1x128xf32> to vector<16x128xf32>
    %289 = arith.mulf %284, %288 : vector<16x128xf32>
    %c10 = arith.constant 10 : index
    %c0_83 = arith.constant 0 : index
    %290 = vector.load %arg6[%c10, %c0_83] : memref<24x128xf32, #tpu.memory_space<vmem>>, vector<1x128xf32>
    %291 = vector.shape_cast %290 : vector<1x128xf32> to vector<128xf32>
    %292 = vector.shape_cast %291 : vector<128xf32> to vector<1x128xf32>
    %293 = vector.broadcast %292 : vector<1x128xf32> to vector<16x128xf32>
    %294 = arith.addf %289, %293 : vector<16x128xf32>
    %c4_84 = arith.constant 4 : index
    %c0_85 = arith.constant 0 : index
    %c0_86 = arith.constant 0 : index
    %295 = vector.load %arg2[%c4_84, %c0_85, %c0_86] : memref<8x128x128xbf16, #tpu.memory_space<vmem>>, vector<1x128x128xbf16>
    %296 = vector.shape_cast %295 : vector<1x128x128xbf16> to vector<128x128xbf16>
    %297 = arith.truncf %294 : vector<16x128xf32> to vector<16x128xbf16>
    %cst_87 = arith.constant dense<0.000000e+00> : vector<16x128xf32>
    %298 = tpu.matmul %297, %296, %cst_87 {dimension_numbers = #tpu.dot_dimension_numbers<[1], [0], [0], [1], [0, 0, 1, 1], [], []>} : vector<16x128xbf16>, vector<128x128xbf16>, vector<16x128xf32> -> vector<16x128xf32>
    %c11 = arith.constant 11 : index
    %c0_88 = arith.constant 0 : index
    %299 = vector.load %arg6[%c11, %c0_88] : memref<24x128xf32, #tpu.memory_space<vmem>>, vector<1x128xf32>
    %300 = vector.shape_cast %299 : vector<1x128xf32> to vector<128xf32>
    %301 = vector.shape_cast %300 : vector<128xf32> to vector<1x128xf32>
    %302 = vector.broadcast %301 : vector<1x128xf32> to vector<16x128xf32>
    %303 = arith.addf %298, %302 : vector<16x128xf32>
    %c5_89 = arith.constant 5 : index
    %c0_90 = arith.constant 0 : index
    %c0_91 = arith.constant 0 : index
    %304 = vector.load %arg2[%c5_89, %c0_90, %c0_91] : memref<8x128x128xbf16, #tpu.memory_space<vmem>>, vector<1x128x128xbf16>
    %305 = vector.shape_cast %304 : vector<1x128x128xbf16> to vector<128x128xbf16>
    %306 = arith.truncf %294 : vector<16x128xf32> to vector<16x128xbf16>
    %cst_92 = arith.constant dense<0.000000e+00> : vector<16x128xf32>
    %307 = tpu.matmul %306, %305, %cst_92 {dimension_numbers = #tpu.dot_dimension_numbers<[1], [0], [0], [1], [0, 0, 1, 1], [], []>} : vector<16x128xbf16>, vector<128x128xbf16>, vector<16x128xf32> -> vector<16x128xf32>
    %c12 = arith.constant 12 : index
    %c0_93 = arith.constant 0 : index
    %308 = vector.load %arg6[%c12, %c0_93] : memref<24x128xf32, #tpu.memory_space<vmem>>, vector<1x128xf32>
    %309 = vector.shape_cast %308 : vector<1x128xf32> to vector<128xf32>
    %310 = vector.shape_cast %309 : vector<128xf32> to vector<1x128xf32>
    %311 = vector.broadcast %310 : vector<1x128xf32> to vector<16x128xf32>
    %312 = arith.addf %307, %311 : vector<16x128xf32>
    %313 = arith.negf %312 : vector<16x128xf32>
    %314 = math.exp %313 : vector<16x128xf32>
    %cst_94 = arith.constant 1.000000e+00 : f32
    %315 = vector.broadcast %cst_94 : f32 to vector<16x128xf32>
    %316 = arith.addf %315, %314 : vector<16x128xf32>
    %317 = arith.divf %315, %316 : vector<16x128xf32>
    %318 = arith.mulf %303, %317 : vector<16x128xf32>
    %319 = vector.broadcast %9 : vector<16x1xf32> to vector<16x128xf32>
    %320 = arith.mulf %318, %319 : vector<16x128xf32>
    %321 = arith.truncf %320 : vector<16x128xf32> to vector<16x128xbf16>
    %cst_95 = arith.constant 0.000000e+00 : f32
    %322 = vector.broadcast %cst_95 : f32 to vector<16x128xf32>
    %c0_96 = arith.constant 0 : index
    %c0_97 = arith.constant 0 : index
    %c0_98 = arith.constant 0 : index
    %323 = vector.load %arg8[%c0_96, %c0_97, %c0_98] : memref<8x16x16xbf16, #tpu.memory_space<vmem>>, vector<1x16x16xbf16>
    %324 = vector.shape_cast %323 : vector<1x16x16xbf16> to vector<16x16xbf16>
    %cst_99 = arith.constant dense<0.000000e+00> : vector<16x128xf32>
    %325 = tpu.matmul %324, %321, %cst_99 {dimension_numbers = #tpu.dot_dimension_numbers<[1], [0], [0], [1], [0, 0, 1, 1], [], []>} : vector<16x16xbf16>, vector<16x128xbf16>, vector<16x128xf32> -> vector<16x128xf32>
    %c0_100 = arith.constant 0 : index
    %c0_101 = arith.constant 0 : index
    %326 = vector.load %arg5[%c0_100, %c0_101] : memref<8x128xf32, #tpu.memory_space<vmem>>, vector<1x128xf32>
    %327 = vector.shape_cast %326 : vector<1x128xf32> to vector<128xf32>
    %328 = vector.shape_cast %327 : vector<128xf32> to vector<1x128xf32>
    %329 = vector.broadcast %328 : vector<1x128xf32> to vector<16x128xf32>
    %330 = arith.mulf %325, %329 : vector<16x128xf32>
    %331 = arith.addf %322, %330 : vector<16x128xf32>
    %c1_102 = arith.constant 1 : index
    %c0_103 = arith.constant 0 : index
    %c0_104 = arith.constant 0 : index
    %332 = vector.load %arg8[%c1_102, %c0_103, %c0_104] : memref<8x16x16xbf16, #tpu.memory_space<vmem>>, vector<1x16x16xbf16>
    %333 = vector.shape_cast %332 : vector<1x16x16xbf16> to vector<16x16xbf16>
    %cst_105 = arith.constant dense<0.000000e+00> : vector<16x128xf32>
    %334 = tpu.matmul %333, %321, %cst_105 {dimension_numbers = #tpu.dot_dimension_numbers<[1], [0], [0], [1], [0, 0, 1, 1], [], []>} : vector<16x16xbf16>, vector<16x128xbf16>, vector<16x128xf32> -> vector<16x128xf32>
    %c1_106 = arith.constant 1 : index
    %c0_107 = arith.constant 0 : index
    %335 = vector.load %arg5[%c1_106, %c0_107] : memref<8x128xf32, #tpu.memory_space<vmem>>, vector<1x128xf32>
    %336 = vector.shape_cast %335 : vector<1x128xf32> to vector<128xf32>
    %337 = vector.shape_cast %336 : vector<128xf32> to vector<1x128xf32>
    %338 = vector.broadcast %337 : vector<1x128xf32> to vector<16x128xf32>
    %339 = arith.mulf %334, %338 : vector<16x128xf32>
    %340 = arith.addf %331, %339 : vector<16x128xf32>
    %c2_108 = arith.constant 2 : index
    %c0_109 = arith.constant 0 : index
    %c0_110 = arith.constant 0 : index
    %341 = vector.load %arg8[%c2_108, %c0_109, %c0_110] : memref<8x16x16xbf16, #tpu.memory_space<vmem>>, vector<1x16x16xbf16>
    %342 = vector.shape_cast %341 : vector<1x16x16xbf16> to vector<16x16xbf16>
    %cst_111 = arith.constant dense<0.000000e+00> : vector<16x128xf32>
    %343 = tpu.matmul %342, %321, %cst_111 {dimension_numbers = #tpu.dot_dimension_numbers<[1], [0], [0], [1], [0, 0, 1, 1], [], []>} : vector<16x16xbf16>, vector<16x128xbf16>, vector<16x128xf32> -> vector<16x128xf32>
    %c2_112 = arith.constant 2 : index
    %c0_113 = arith.constant 0 : index
    %344 = vector.load %arg5[%c2_112, %c0_113] : memref<8x128xf32, #tpu.memory_space<vmem>>, vector<1x128xf32>
    %345 = vector.shape_cast %344 : vector<1x128xf32> to vector<128xf32>
    %346 = vector.shape_cast %345 : vector<128xf32> to vector<1x128xf32>
    %347 = vector.broadcast %346 : vector<1x128xf32> to vector<16x128xf32>
    %348 = arith.mulf %343, %347 : vector<16x128xf32>
    %349 = arith.addf %340, %348 : vector<16x128xf32>
    %c3_114 = arith.constant 3 : index
    %c0_115 = arith.constant 0 : index
    %c0_116 = arith.constant 0 : index
    %350 = vector.load %arg8[%c3_114, %c0_115, %c0_116] : memref<8x16x16xbf16, #tpu.memory_space<vmem>>, vector<1x16x16xbf16>
    %351 = vector.shape_cast %350 : vector<1x16x16xbf16> to vector<16x16xbf16>
    %cst_117 = arith.constant dense<0.000000e+00> : vector<16x128xf32>
    %352 = tpu.matmul %351, %321, %cst_117 {dimension_numbers = #tpu.dot_dimension_numbers<[1], [0], [0], [1], [0, 0, 1, 1], [], []>} : vector<16x16xbf16>, vector<16x128xbf16>, vector<16x128xf32> -> vector<16x128xf32>
    %c3_118 = arith.constant 3 : index
    %c0_119 = arith.constant 0 : index
    %353 = vector.load %arg5[%c3_118, %c0_119] : memref<8x128xf32, #tpu.memory_space<vmem>>, vector<1x128xf32>
    %354 = vector.shape_cast %353 : vector<1x128xf32> to vector<128xf32>
    %355 = vector.shape_cast %354 : vector<128xf32> to vector<1x128xf32>
    %356 = vector.broadcast %355 : vector<1x128xf32> to vector<16x128xf32>
    %357 = arith.mulf %352, %356 : vector<16x128xf32>
    %358 = arith.addf %349, %357 : vector<16x128xf32>
    %c4_120 = arith.constant 4 : index
    %c0_121 = arith.constant 0 : index
    %c0_122 = arith.constant 0 : index
    %359 = vector.load %arg8[%c4_120, %c0_121, %c0_122] : memref<8x16x16xbf16, #tpu.memory_space<vmem>>, vector<1x16x16xbf16>
    %360 = vector.shape_cast %359 : vector<1x16x16xbf16> to vector<16x16xbf16>
    %cst_123 = arith.constant dense<0.000000e+00> : vector<16x128xf32>
    %361 = tpu.matmul %360, %321, %cst_123 {dimension_numbers = #tpu.dot_dimension_numbers<[1], [0], [0], [1], [0, 0, 1, 1], [], []>} : vector<16x16xbf16>, vector<16x128xbf16>, vector<16x128xf32> -> vector<16x128xf32>
    %c4_124 = arith.constant 4 : index
    %c0_125 = arith.constant 0 : index
    %362 = vector.load %arg5[%c4_124, %c0_125] : memref<8x128xf32, #tpu.memory_space<vmem>>, vector<1x128xf32>
    %363 = vector.shape_cast %362 : vector<1x128xf32> to vector<128xf32>
    %364 = vector.shape_cast %363 : vector<128xf32> to vector<1x128xf32>
    %365 = vector.broadcast %364 : vector<1x128xf32> to vector<16x128xf32>
    %366 = arith.mulf %361, %365 : vector<16x128xf32>
    %367 = arith.addf %358, %366 : vector<16x128xf32>
    %c5_126 = arith.constant 5 : index
    %c0_127 = arith.constant 0 : index
    %c0_128 = arith.constant 0 : index
    %368 = vector.load %arg8[%c5_126, %c0_127, %c0_128] : memref<8x16x16xbf16, #tpu.memory_space<vmem>>, vector<1x16x16xbf16>
    %369 = vector.shape_cast %368 : vector<1x16x16xbf16> to vector<16x16xbf16>
    %cst_129 = arith.constant dense<0.000000e+00> : vector<16x128xf32>
    %370 = tpu.matmul %369, %321, %cst_129 {dimension_numbers = #tpu.dot_dimension_numbers<[1], [0], [0], [1], [0, 0, 1, 1], [], []>} : vector<16x16xbf16>, vector<16x128xbf16>, vector<16x128xf32> -> vector<16x128xf32>
    %c5_130 = arith.constant 5 : index
    %c0_131 = arith.constant 0 : index
    %371 = vector.load %arg5[%c5_130, %c0_131] : memref<8x128xf32, #tpu.memory_space<vmem>>, vector<1x128xf32>
    %372 = vector.shape_cast %371 : vector<1x128xf32> to vector<128xf32>
    %373 = vector.shape_cast %372 : vector<128xf32> to vector<1x128xf32>
    %374 = vector.broadcast %373 : vector<1x128xf32> to vector<16x128xf32>
    %375 = arith.mulf %370, %374 : vector<16x128xf32>
    %376 = arith.addf %367, %375 : vector<16x128xf32>
    %c6_132 = arith.constant 6 : index
    %c0_133 = arith.constant 0 : index
    %c0_134 = arith.constant 0 : index
    %377 = vector.load %arg8[%c6_132, %c0_133, %c0_134] : memref<8x16x16xbf16, #tpu.memory_space<vmem>>, vector<1x16x16xbf16>
    %378 = vector.shape_cast %377 : vector<1x16x16xbf16> to vector<16x16xbf16>
    %cst_135 = arith.constant dense<0.000000e+00> : vector<16x128xf32>
    %379 = tpu.matmul %378, %321, %cst_135 {dimension_numbers = #tpu.dot_dimension_numbers<[1], [0], [0], [1], [0, 0, 1, 1], [], []>} : vector<16x16xbf16>, vector<16x128xbf16>, vector<16x128xf32> -> vector<16x128xf32>
    %c6_136 = arith.constant 6 : index
    %c0_137 = arith.constant 0 : index
    %380 = vector.load %arg5[%c6_136, %c0_137] : memref<8x128xf32, #tpu.memory_space<vmem>>, vector<1x128xf32>
    %381 = vector.shape_cast %380 : vector<1x128xf32> to vector<128xf32>
    %382 = vector.shape_cast %381 : vector<128xf32> to vector<1x128xf32>
    %383 = vector.broadcast %382 : vector<1x128xf32> to vector<16x128xf32>
    %384 = arith.mulf %379, %383 : vector<16x128xf32>
    %385 = arith.addf %376, %384 : vector<16x128xf32>
    %c13 = arith.constant 13 : index
    %c0_138 = arith.constant 0 : index
    %386 = vector.load %arg6[%c13, %c0_138] : memref<24x128xf32, #tpu.memory_space<vmem>>, vector<1x128xf32>
    %387 = vector.shape_cast %386 : vector<1x128xf32> to vector<128xf32>
    %388 = vector.shape_cast %387 : vector<128xf32> to vector<1x128xf32>
    %389 = vector.broadcast %388 : vector<1x128xf32> to vector<16x128xf32>
    %390 = arith.addf %385, %389 : vector<16x128xf32>
    %c14 = arith.constant 14 : index
    %c0_139 = arith.constant 0 : index
    %391 = vector.load %arg6[%c14, %c0_139] : memref<24x128xf32, #tpu.memory_space<vmem>>, vector<1x128xf32>
    %392 = vector.shape_cast %391 : vector<1x128xf32> to vector<128xf32>
    %393 = vector.shape_cast %392 : vector<128xf32> to vector<1x128xf32>
    %394 = vector.broadcast %393 : vector<1x128xf32> to vector<16x128xf32>
    %395 = arith.mulf %390, %394 : vector<16x128xf32>
    %c15 = arith.constant 15 : index
    %c0_140 = arith.constant 0 : index
    %396 = vector.load %arg6[%c15, %c0_140] : memref<24x128xf32, #tpu.memory_space<vmem>>, vector<1x128xf32>
    %397 = vector.shape_cast %396 : vector<1x128xf32> to vector<128xf32>
    %398 = vector.shape_cast %397 : vector<128xf32> to vector<1x128xf32>
    %399 = vector.broadcast %398 : vector<1x128xf32> to vector<16x128xf32>
    %400 = arith.addf %395, %399 : vector<16x128xf32>
    %401 = arith.negf %400 : vector<16x128xf32>
    %402 = math.exp %401 : vector<16x128xf32>
    %cst_141 = arith.constant 1.000000e+00 : f32
    %403 = vector.broadcast %cst_141 : f32 to vector<16x128xf32>
    %404 = arith.addf %403, %402 : vector<16x128xf32>
    %405 = arith.divf %403, %404 : vector<16x128xf32>
    %406 = arith.mulf %400, %405 : vector<16x128xf32>
    %c6_142 = arith.constant 6 : index
    %c0_143 = arith.constant 0 : index
    %c0_144 = arith.constant 0 : index
    %407 = vector.load %arg2[%c6_142, %c0_143, %c0_144] : memref<8x128x128xbf16, #tpu.memory_space<vmem>>, vector<1x128x128xbf16>
    %408 = vector.shape_cast %407 : vector<1x128x128xbf16> to vector<128x128xbf16>
    %409 = arith.truncf %406 : vector<16x128xf32> to vector<16x128xbf16>
    %cst_145 = arith.constant dense<0.000000e+00> : vector<16x128xf32>
    %410 = tpu.matmul %409, %408, %cst_145 {dimension_numbers = #tpu.dot_dimension_numbers<[1], [0], [0], [1], [0, 0, 1, 1], [], []>} : vector<16x128xbf16>, vector<128x128xbf16>, vector<16x128xf32> -> vector<16x128xf32>
    %411 = arith.addf %264, %410 : vector<16x128xf32>
    %c16 = arith.constant 16 : index
    %c0_146 = arith.constant 0 : index
    %412 = vector.load %arg6[%c16, %c0_146] : memref<24x128xf32, #tpu.memory_space<vmem>>, vector<1x128xf32>
    %413 = vector.shape_cast %412 : vector<1x128xf32> to vector<128xf32>
    %414 = vector.shape_cast %413 : vector<128xf32> to vector<1x128xf32>
    %415 = vector.broadcast %414 : vector<1x128xf32> to vector<16x128xf32>
    %416 = arith.addf %411, %415 : vector<16x128xf32>
    %c1_147 = arith.constant 1 : index
    %c0_148 = arith.constant 0 : index
    %c0_149 = arith.constant 0 : index
    %417 = vector.load %arg3[%c1_147, %c0_148, %c0_149] : memref<2x128x128xbf16, #tpu.memory_space<vmem>>, vector<1x128x128xbf16>
    %418 = vector.shape_cast %417 : vector<1x128x128xbf16> to vector<128x128xbf16>
    %419 = arith.truncf %416 : vector<16x128xf32> to vector<16x128xbf16>
    %cst_150 = arith.constant dense<0.000000e+00> : vector<16x128xf32>
    %420 = tpu.matmul %419, %418, %cst_150 {dimension_numbers = #tpu.dot_dimension_numbers<[1], [0], [0], [1], [0, 0, 1, 1], [], []>} : vector<16x128xbf16>, vector<128x128xbf16>, vector<16x128xf32> -> vector<16x128xf32>
    %c1_151 = arith.constant 1 : index
    %c0_152 = arith.constant 0 : index
    %421 = vector.load %arg7[%c1_151, %c0_152] : memref<8x128xf32, #tpu.memory_space<vmem>>, vector<1x128xf32>
    %422 = vector.shape_cast %421 : vector<1x128xf32> to vector<128xf32>
    %423 = vector.shape_cast %422 : vector<128xf32> to vector<1x128xf32>
    %424 = vector.broadcast %423 : vector<1x128xf32> to vector<16x128xf32>
    %425 = arith.addf %420, %424 : vector<16x128xf32>
    %cst_153 = arith.constant 0.000000e+00 : f32
    %426 = vector.broadcast %cst_153 : f32 to vector<16x128xf32>
    %427 = arith.maximumf %425, %426 : vector<16x128xf32>
    %c1_154 = arith.constant 1 : index
    %c0_155 = arith.constant 0 : index
    %c0_156 = arith.constant 0 : index
    %428 = vector.load %arg4[%c1_154, %c0_155, %c0_156] : memref<2x128x128xbf16, #tpu.memory_space<vmem>>, vector<1x128x128xbf16>
    %429 = vector.shape_cast %428 : vector<1x128x128xbf16> to vector<128x128xbf16>
    %430 = arith.truncf %427 : vector<16x128xf32> to vector<16x128xbf16>
    %cst_157 = arith.constant dense<0.000000e+00> : vector<16x128xf32>
    %431 = tpu.matmul %430, %429, %cst_157 {dimension_numbers = #tpu.dot_dimension_numbers<[1], [0], [0], [1], [0, 0, 1, 1], [], []>} : vector<16x128xbf16>, vector<128x128xbf16>, vector<16x128xf32> -> vector<16x128xf32>
    %c19 = arith.constant 19 : index
    %c0_158 = arith.constant 0 : index
    %432 = vector.load %arg6[%c19, %c0_158] : memref<24x128xf32, #tpu.memory_space<vmem>>, vector<1x128xf32>
    %433 = vector.shape_cast %432 : vector<1x128xf32> to vector<128xf32>
    %434 = vector.shape_cast %433 : vector<128xf32> to vector<1x128xf32>
    %435 = vector.broadcast %434 : vector<1x128xf32> to vector<16x128xf32>
    %436 = arith.addf %431, %435 : vector<16x128xf32>
    %437 = arith.addf %416, %436 : vector<16x128xf32>
    %438 = vector.broadcast %4 : vector<1x128xf32> to vector<16x128xf32>
    %439 = arith.mulf %437, %438 : vector<16x128xf32>
    %cst_159 = arith.constant dense<0.000000e+00> : vector<16xf32>
    %440 = vector.multi_reduction <add>, %439, %cst_159 [1] : vector<16x128xf32> to vector<16xf32>
    %441 = vector.shape_cast %440 : vector<16xf32> to vector<16x1xf32>
    %cst_160 = arith.constant 3.125000e-02 : f32
    %442 = vector.broadcast %cst_160 : f32 to vector<16x1xf32>
    %443 = arith.mulf %441, %442 : vector<16x1xf32>
    %444 = vector.broadcast %443 : vector<16x1xf32> to vector<16x128xf32>
    %445 = arith.subf %437, %444 : vector<16x128xf32>
    %446 = vector.broadcast %4 : vector<1x128xf32> to vector<16x128xf32>
    %447 = arith.mulf %445, %446 : vector<16x128xf32>
    %448 = arith.mulf %447, %447 : vector<16x128xf32>
    %cst_161 = arith.constant dense<0.000000e+00> : vector<16xf32>
    %449 = vector.multi_reduction <add>, %448, %cst_161 [1] : vector<16x128xf32> to vector<16xf32>
    %450 = vector.shape_cast %449 : vector<16xf32> to vector<16x1xf32>
    %cst_162 = arith.constant 3.125000e-02 : f32
    %451 = vector.broadcast %cst_162 : f32 to vector<16x1xf32>
    %452 = arith.mulf %450, %451 : vector<16x1xf32>
    %cst_163 = arith.constant 9.99999974E-6 : f32
    %453 = vector.broadcast %cst_163 : f32 to vector<16x1xf32>
    %454 = arith.addf %452, %453 : vector<16x1xf32>
    %455 = math.rsqrt %454 : vector<16x1xf32>
    %456 = vector.broadcast %455 : vector<16x1xf32> to vector<16x128xf32>
    %457 = arith.mulf %447, %456 : vector<16x128xf32>
    %c17 = arith.constant 17 : index
    %c0_164 = arith.constant 0 : index
    %458 = vector.load %arg6[%c17, %c0_164] : memref<24x128xf32, #tpu.memory_space<vmem>>, vector<1x128xf32>
    %459 = vector.shape_cast %458 : vector<1x128xf32> to vector<128xf32>
    %460 = vector.shape_cast %459 : vector<128xf32> to vector<1x128xf32>
    %461 = vector.broadcast %460 : vector<1x128xf32> to vector<16x128xf32>
    %462 = arith.mulf %457, %461 : vector<16x128xf32>
    %c18 = arith.constant 18 : index
    %c0_165 = arith.constant 0 : index
    %463 = vector.load %arg6[%c18, %c0_165] : memref<24x128xf32, #tpu.memory_space<vmem>>, vector<1x128xf32>
    %464 = vector.shape_cast %463 : vector<1x128xf32> to vector<128xf32>
    %465 = vector.shape_cast %464 : vector<128xf32> to vector<1x128xf32>
    %466 = vector.broadcast %465 : vector<1x128xf32> to vector<16x128xf32>
    %467 = arith.addf %462, %466 : vector<16x128xf32>
    %cst_166 = arith.constant 5.000000e-01 : f32
    %468 = vector.broadcast %cst_166 : f32 to vector<16x128xf32>
    %469 = arith.mulf %468, %467 : vector<16x128xf32>
    %470 = arith.addf %416, %469 : vector<16x128xf32>
    %471 = vector.broadcast %4 : vector<1x128xf32> to vector<16x128xf32>
    %472 = arith.mulf %470, %471 : vector<16x128xf32>
    %cst_167 = arith.constant dense<0.000000e+00> : vector<16xf32>
    %473 = vector.multi_reduction <add>, %472, %cst_167 [1] : vector<16x128xf32> to vector<16xf32>
    %474 = vector.shape_cast %473 : vector<16xf32> to vector<16x1xf32>
    %cst_168 = arith.constant 3.125000e-02 : f32
    %475 = vector.broadcast %cst_168 : f32 to vector<16x1xf32>
    %476 = arith.mulf %474, %475 : vector<16x1xf32>
    %477 = vector.broadcast %476 : vector<16x1xf32> to vector<16x128xf32>
    %478 = arith.subf %470, %477 : vector<16x128xf32>
    %479 = vector.broadcast %4 : vector<1x128xf32> to vector<16x128xf32>
    %480 = arith.mulf %478, %479 : vector<16x128xf32>
    %481 = arith.mulf %480, %480 : vector<16x128xf32>
    %cst_169 = arith.constant dense<0.000000e+00> : vector<16xf32>
    %482 = vector.multi_reduction <add>, %481, %cst_169 [1] : vector<16x128xf32> to vector<16xf32>
    %483 = vector.shape_cast %482 : vector<16xf32> to vector<16x1xf32>
    %cst_170 = arith.constant 3.125000e-02 : f32
    %484 = vector.broadcast %cst_170 : f32 to vector<16x1xf32>
    %485 = arith.mulf %483, %484 : vector<16x1xf32>
    %cst_171 = arith.constant 9.99999974E-6 : f32
    %486 = vector.broadcast %cst_171 : f32 to vector<16x1xf32>
    %487 = arith.addf %485, %486 : vector<16x1xf32>
    %488 = math.rsqrt %487 : vector<16x1xf32>
    %489 = vector.broadcast %488 : vector<16x1xf32> to vector<16x128xf32>
    %490 = arith.mulf %480, %489 : vector<16x128xf32>
    %c20 = arith.constant 20 : index
    %c0_172 = arith.constant 0 : index
    %491 = vector.load %arg6[%c20, %c0_172] : memref<24x128xf32, #tpu.memory_space<vmem>>, vector<1x128xf32>
    %492 = vector.shape_cast %491 : vector<1x128xf32> to vector<128xf32>
    %493 = vector.shape_cast %492 : vector<128xf32> to vector<1x128xf32>
    %494 = vector.broadcast %493 : vector<1x128xf32> to vector<16x128xf32>
    %495 = arith.mulf %490, %494 : vector<16x128xf32>
    %c21 = arith.constant 21 : index
    %c0_173 = arith.constant 0 : index
    %496 = vector.load %arg6[%c21, %c0_173] : memref<24x128xf32, #tpu.memory_space<vmem>>, vector<1x128xf32>
    %497 = vector.shape_cast %496 : vector<1x128xf32> to vector<128xf32>
    %498 = vector.shape_cast %497 : vector<128xf32> to vector<1x128xf32>
    %499 = vector.broadcast %498 : vector<1x128xf32> to vector<16x128xf32>
    %500 = arith.addf %495, %499 : vector<16x128xf32>
    %c0_174 = arith.constant 0 : index
    %c0_175 = arith.constant 0 : index
    %c0_176 = arith.constant 0 : index
    %501 = vector.load %arg9[%c0_174, %c0_175, %c0_176] : memref<1x16x128xf32, #tpu.memory_space<vmem>>, vector<1x16x128xf32>
    %502 = vector.shape_cast %501 : vector<1x16x128xf32> to vector<16x128xf32>
    %503 = vector.shape_cast %500 : vector<16x128xf32> to vector<1x16x128xf32>
    tpu.vector_store %arg9[%c0_174, %c0_175, %c0_176], %503 {strides = array<i32>} : memref<1x16x128xf32, #tpu.memory_space<vmem>>, vector<1x16x128xf32>,
    return
  }
  func.func @transform_0(%arg0: i32) -> (i32, i32, i32) {
    %c0_i32 = arith.constant 0 : i32
    %c0_i32_0 = arith.constant 0 : i32
    %c0_i32_1 = arith.constant 0 : i32
    return %arg0, %c0_i32, %c0_i32_0 : i32, i32, i32
  }
  func.func @transform_1(%arg0: i32) -> (i32, i32, i32) {
    %c0_i32 = arith.constant 0 : i32
    %c0_i32_0 = arith.constant 0 : i32
    %c0_i32_1 = arith.constant 0 : i32
    %c0_i32_2 = arith.constant 0 : i32
    return %c0_i32, %c0_i32_0, %c0_i32_1 : i32, i32, i32
  }
  func.func @transform_2(%arg0: i32) -> (i32, i32, i32) {
    %c0_i32 = arith.constant 0 : i32
    %c0_i32_0 = arith.constant 0 : i32
    %c0_i32_1 = arith.constant 0 : i32
    %c0_i32_2 = arith.constant 0 : i32
    return %c0_i32, %c0_i32_0, %c0_i32_1 : i32, i32, i32
  }
  func.func @transform_3(%arg0: i32) -> (i32, i32, i32) {
    %c0_i32 = arith.constant 0 : i32
    %c0_i32_0 = arith.constant 0 : i32
    %c0_i32_1 = arith.constant 0 : i32
    %c0_i32_2 = arith.constant 0 : i32
    return %c0_i32, %c0_i32_0, %c0_i32_1 : i32, i32, i32
  }
  func.func @transform_4(%arg0: i32) -> (i32, i32) {
    %c0_i32 = arith.constant 0 : i32
    %c0_i32_0 = arith.constant 0 : i32
    %c0_i32_1 = arith.constant 0 : i32
    return %c0_i32, %c0_i32_0 : i32, i32
  }
  func.func @transform_5(%arg0: i32) -> (i32, i32) {
    %c0_i32 = arith.constant 0 : i32
    %c0_i32_0 = arith.constant 0 : i32
    %c0_i32_1 = arith.constant 0 : i32
    return %c0_i32, %c0_i32_0 : i32, i32
  }
  func.func @transform_6(%arg0: i32) -> (i32, i32) {
    %c0_i32 = arith.constant 0 : i32
    %c0_i32_0 = arith.constant 0 : i32
    %c0_i32_1 = arith.constant 0 : i32
    return %c0_i32, %c0_i32_0 : i32, i32
  }
  func.func @transform_7(%arg0: i32) -> (i32, i32, i32) {
    %c0_i32 = arith.constant 0 : i32
    %c0_i32_0 = arith.constant 0 : i32
    %c0_i32_1 = arith.constant 0 : i32
    %c0_i32_2 = arith.constant 0 : i32
    return %c0_i32, %c0_i32_0, %c0_i32_1 : i32, i32, i32
  }
  func.func @transform_8(%arg0: i32) -> (i32, i32, i32) {
    %c0_i32 = arith.constant 0 : i32
    %c0_i32_0 = arith.constant 0 : i32
    %c0_i32_1 = arith.constant 0 : i32
    return %arg0, %c0_i32, %c0_i32_0 : i32, i32, i32
  }
}

</mosaic_0001>

<llo_original>
// kernel: conformer_forward.4
$region0: #{conformer_forward.4}
  #allocation0 [shape = 'u32[]', space=smem, size = 0x4, offset = 0x4, fixed_abs, tag = 'smem constant byte address 0x4 - core index']
  #allocation1 [shape = 'u32[144,128]{1,0:T(1,128)}', space=vmem, size = 0x12000, scoped, tag = 'internal scratch']
  %s0 = inlined_call_operand.vmem [shape: f32[2,16,128], index: 0, kind: input, shape index: {}]
  %s1 = inlined_call_operand.vmem [shape: bf16[128,128], index: 1, kind: input, shape index: {}]
  %s2 = inlined_call_operand.vmem [shape: f32[1,128], index: 2, kind: input, shape index: {}]
  %s3 = inlined_call_operand.vmem [shape: f32[16,128], index: 3, kind: input, shape index: {}]
  %s4 = inlined_call_operand.vmem [shape: f32[2,16,128], index: 4, kind: output, shape index: {}]
  %s5 = sld [smem:[#allocation0]]
  $region49: #{conformer_forward.4} parent=0
    _
  %s7 = ssub.s32 1, %s5
  %s8 = scalar_select 0, %s7, %s5
  loop: start=0, step=1, limit=4
  $region2: #{conformer_forward.4} parent=0 // loop_pre_header
    _
  $region3: #{conformer_forward.4} parent=0 // loop_header
    %s10 = sphi 0, %s14
    %p11 = scmp.ge.s32.totalorder %s10, 4
    %s20 = sphi 0, %s22
    %s23 = sphi 0, %s20
    %s24 = sphi 0, %s23
    %s40 = sphi 0, %s24
    %s44 = sphi 0, %s44
    %s46 = sphi 0, %s44
    %s47 = sphi 0, %s46
    %s61 = sphi 0, %s47
    %s65 = sphi 0, %s65
    %s67 = sphi 0, %s65
    %s68 = sphi 0, %s67
    %s82 = sphi 0, %s68
    %s86 = sphi 0, %s86
    %s88 = sphi 0, %s86
    %s89 = sphi 0, %s88
    %s103 = sphi 0, %s89
    %s109 = sphi 0, %s111
    %s112 = sphi 0, %s109
    %s113 = sphi 0, %s112
    %s129 = sphi 0, %s113
  $region4: #{conformer_forward.4} parent=0 // loop_header_branch
    %13 = sbr.rel (%p11) target = $region8
  $region5: #{conformer_forward.4} parent=0 // loop_body
    %s15 = ssub.s32 %s10, 1
    %s16 = ssub.s32 %s10, 2
    %s17 = sadd.s32 %s10, 1
    %s18 = ssub.s32 %s10, %s17
    %p19 = scmp.eq.s32.totalorder %s18, 0
    %s21 = sadd.s32 %s20, 1
    %s22 = scalar_select %p19, %s20, %s21
    %p25 = pneg %p19
    %p26 = scmp.eq.s32.totalorder %s10, 1
    %p27 = por %p25, %p26
    %p28 = scmp.ne.s32.totalorder %s20, %s23
    %p29 = scmp.eq.s32.totalorder %s10, 0
    %p30 = por %p28, %p29
    %p31 = scmp.ne.s32.totalorder %s20, %s23
    %p32 = scmp.eq.s32.totalorder %s15, 1
    %p33 = por %p31, %p32
    %p34 = scmp.ne.s32.totalorder %s23, %s24
    %p35 = scmp.eq.s32.totalorder %s15, 0
    %p36 = por %p34, %p35
    %p37 = scmp.ne.s32.totalorder %s23, %s24
    %p38 = scmp.eq.s32.totalorder %s16, 1
    %p39 = por %p37, %p38
    %p41 = scmp.ne.s32.totalorder %s24, %s40
    %p42 = scmp.eq.s32.totalorder %s16, 0
    %p43 = por %p41, %p42
    %s45 = sadd.s32 %s44, 1
    %p48 = scmp.eq.s32.totalorder %s10, 1
    %p49 = scmp.ne.s32.totalorder %s44, %s46
    %p50 = scmp.eq.s32.totalorder %s10, 0
    %p51 = por %p49, %p50
    %p52 = scmp.ne.s32.totalorder %s44, %s46
    %p53 = scmp.eq.s32.totalorder %s15, 1
    %p54 = por %p52, %p53
    %p55 = scmp.ne.s32.totalorder %s46, %s47
    %p56 = scmp.eq.s32.totalorder %s15, 0
    %p57 = por %p55, %p56
    %p58 = scmp.ne.s32.totalorder %s46, %s47
    %p59 = scmp.eq.s32.totalorder %s16, 1
    %p60 = por %p58, %p59
    %p62 = scmp.ne.s32.totalorder %s47, %s61
    %p63 = scmp.eq.s32.totalorder %s16, 0
    %p64 = por %p62, %p63
    %s66 = sadd.s32 %s65, 1
    %p69 = scmp.eq.s32.totalorder %s10, 1
    %p70 = scmp.ne.s32.totalorder %s65, %s67
    %p71 = scmp.eq.s32.totalorder %s10, 0
    %p72 = por %p70, %p71
    %p73 = scmp.ne.s32.totalorder %s65, %s67
    %p74 = scmp.eq.s32.totalorder %s15, 1
    %p75 = por %p73, %p74
    %p76 = scmp.ne.s32.totalorder %s67, %s68
    %p77 = scmp.eq.s32.totalorder %s15, 0
    %p78 = por %p76, %p77
    %p79 = scmp.ne.s32.totalorder %s67, %s68
    %p80 = scmp.eq.s32.totalorder %s16, 1
    %p81 = por %p79, %p80
    %p83 = scmp.ne.s32.totalorder %s68, %s82
    %p84 = scmp.eq.s32.totalorder %s16, 0
    %p85 = por %p83, %p84
    %s87 = sadd.s32 %s86, 1
    %p90 = scmp.eq.s32.totalorder %s10, 1
    %p91 = scmp.ne.s32.totalorder %s86, %s88
    %p92 = scmp.eq.s32.totalorder %s10, 0
    %p93 = por %p91, %p92
    %p94 = scmp.ne.s32.totalorder %s86, %s88
    %p95 = scmp.eq.s32.totalorder %s15, 1
    %p96 = por %p94, %p95
    %p97 = scmp.ne.s32.totalorder %s88, %s89
    %p98 = scmp.eq.s32.totalorder %s15, 0
    %p99 = por %p97, %p98
    %p100 = scmp.ne.s32.totalorder %s88, %s89
    %p101 = scmp.eq.s32.totalorder %s16, 1
    %p102 = por %p100, %p101
    %p104 = scmp.ne.s32.totalorder %s89, %s103
    %p105 = scmp.eq.s32.totalorder %s16, 0
    %p106 = por %p104, %p105
    %s107 = ssub.s32 %s10, %s17
    %p108 = scmp.eq.s32.totalorder %s107, 0
    %s110 = sadd.s32 %s109, 1
    %s111 = scalar_select %p108, %s109, %s110
    %p114 = pneg %p108
    %p115 = scmp.eq.s32.totalorder %s10, 1
    %p116 = por %p114, %p115
    %p117 = scmp.ne.s32.totalorder %s109, %s112
    %p118 = scmp.eq.s32.totalorder %s10, 0
    %p119 = por %p117, %p118
    %p120 = scmp.ne.s32.totalorder %s109, %s112
    %p121 = scmp.eq.s32.totalorder %s15, 1
    %p122 = por %p120, %p121
    %p123 = scmp.ne.s32.totalorder %s112, %s113
    %p124 = scmp.eq.s32.totalorder %s15, 0
    %p125 = por %p123, %p124
    %p126 = scmp.ne.s32.totalorder %s112, %s113
    %p127 = scmp.eq.s32.totalorder %s16, 1
    %p128 = por %p126, %p127
    %p130 = scmp.ne.s32.totalorder %s113, %s129
    %p131 = scmp.eq.s32.totalorder %s16, 0
    %p132 = por %p130, %p131
    %p133 = scmp.le.s32.totalorder 1, %s10
    %p134 = scmp.lt.s32.totalorder %s10, 3
    %p135 = pnand %p133, %p134
    %p136 = pneg %p135
    // Predicated region
    $region9: #{conformer_forward.4} parent=5 // pred_check
      _
    $region10: #{conformer_forward.4} parent=5 // pred_check_branch
      %138 = sbr.rel (%p135) target = $region12
    $region11: #{conformer_forward.4} parent=5 // pred_region
      %s139 = ssub.s32 %s10, 1
      // Predicated region
      $region13: #{conformer_forward.4} parent=11 // pred_check
        %p140 = pneg %p57
      $region14: #{conformer_forward.4} parent=11 // pred_check_branch
        %142 = sbr.rel (%p140) target = $region16
      $region15: #{conformer_forward.4} parent=11 // pred_region
        _
      $region16: #{conformer_forward.4} parent=11 // pred_fallthru
        _
      // Predicated region
      $region17: #{conformer_forward.4} parent=11 // pred_check
        %p143 = pneg %p78
      $region18: #{conformer_forward.4} parent=11 // pred_check_branch
        %145 = sbr.rel (%p143) target = $region20
      $region19: #{conformer_forward.4} parent=11 // pred_region
        _
      $region20: #{conformer_forward.4} parent=11 // pred_fallthru
        _
      // Predicated region
      $region21: #{conformer_forward.4} parent=11 // pred_check
        %p146 = pneg %p99
      $region22: #{conformer_forward.4} parent=11 // pred_check_branch
        %148 = sbr.rel (%p146) target = $region24
      $region23: #{conformer_forward.4} parent=11 // pred_region
        _
      $region24: #{conformer_forward.4} parent=11 // pred_fallthru
        _
    $region12: #{conformer_forward.4} parent=5 // pred_fallthru
      _
    %p149 = scmp.lt.s32.totalorder %s10, 2
    // Predicated region
    $region25: #{conformer_forward.4} parent=5 // pred_check
      %p150 = pneg %p149
    $region26: #{conformer_forward.4} parent=5 // pred_check_branch
      %152 = sbr.rel (%p150) target = $region28
    $region27: #{conformer_forward.4} parent=5 // pred_region
      // Predicated region
      $region29: #{conformer_forward.4} parent=27 // pred_check
        %p153 = pneg %p30
      $region30: #{conformer_forward.4} parent=27 // pred_check_branch
        %155 = sbr.rel (%p153) target = $region32
      $region31: #{conformer_forward.4} parent=27 // pred_region
        %p156 = scmp.lt.s32.totalorder %s10, 1
        %s157 = scalar_select %p156, %s10, 1
        %s158 = smul.addr %s157, 2
        %s159 = smul.addr %s158, 8
        %s160 = scalar_lea.vmem %s0, %s159
      $region32: #{conformer_forward.4} parent=27 // pred_fallthru
        _
    $region28: #{conformer_forward.4} parent=5 // pred_fallthru
      _
    %p161 = scmp.le.s32.totalorder 1, %s10
    %p162 = scmp.lt.s32.totalorder %s10, 3
    %p163 = pnand %p161, %p162
    %p164 = pneg %p163
    // Predicated region
    $region33: #{conformer_forward.4} parent=5 // pred_check
      _
    $region34: #{conformer_forward.4} parent=5 // pred_check_branch
      %166 = sbr.rel (%p163) target = $region36
    $region35: #{conformer_forward.4} parent=5 // pred_region
      %s167 = ssub.s32 %s10, 1
      %p168 = scmp.lt.s32.totalorder %s15, 1
      %s169 = scalar_select %p168, %s15, 1
      %s170 = smul.addr %s169, 2
      %s171 = smul.addr %s170, 8
      %s172 = scalar_lea.vmem %s0, %s171
      %p173 = pneg %p36
      %p174 = pneg %p33
      %p175 = pneg %p57
      %p176 = pneg %p54
      %p177 = pneg %p78
      %p178 = pneg %p75
      %p179 = pneg %p99
      %p180 = pneg %p96
      %p181 = pneg %p125
      %p182 = pneg %p122
      %p183 = scmp.lt.s32.totalorder %s15, 1
      %s184 = scalar_select %p183, %s15, 1
      %s185 = smul.addr %s184, 2
      %s186 = smul.addr %s185, 8
      %s187 = scalar_lea.vmem %s4, %s186
      %p188 = scmp.lt.s32.totalorder %s15, 1
      %s189 = scalar_select %p188, %s15, 1
      %s190 = smul.addr %s189, 2
      %s191 = smul.addr %s190, 8
      %s192 = scalar_lea.vmem %s0, %s191
      %p193 = scmp.lt.s32.totalorder %s15, 1
      %s194 = scalar_select %p193, %s15, 1
      %s195 = smul.addr %s194, 2
      %s196 = smul.addr %s195, 8
      %s197 = scalar_lea.vmem %s4, %s196
      %v199 = vld [vmem:[%s192] sm:$0xff]
      %v200 = vld [vmem:[%s192 + $0x8] sm:$0xff]
      %v201 = vpack.c.bf16 %v200, %v199
      %v202 = vld [vmem:[%s1] sm:$0xf]
      %v203 = vld [vmem:[%s1 + $0x4] sm:$0xf]
      %v204 = vld [vmem:[%s1 + $0x8] sm:$0xf]
      %v205 = vld [vmem:[%s1 + $0xc] sm:$0xf]
      %v206 = vld [vmem:[%s1 + $0x10] sm:$0xf]
      %v207 = vld [vmem:[%s1 + $0x14] sm:$0xf]
      %v208 = vld [vmem:[%s1 + $0x18] sm:$0xf]
      %v209 = vld [vmem:[%s1 + $0x1c] sm:$0xf]
      %v210 = vld [vmem:[%s1 + $0x20] sm:$0xf]
      %v211 = vld [vmem:[%s1 + $0x24] sm:$0xf]
      %v212 = vld [vmem:[%s1 + $0x28] sm:$0xf]
      %v213 = vld [vmem:[%s1 + $0x2c] sm:$0xf]
      %v214 = vld [vmem:[%s1 + $0x30] sm:$0xf]
      %v215 = vld [vmem:[%s1 + $0x34] sm:$0xf]
      %v216 = vld [vmem:[%s1 + $0x38] sm:$0xf]
      %v217 = vld [vmem:[%s1 + $0x3c] sm:$0xf]
      %v218 = vld [vmem:[%s2] sm:$0x1]
      %v220 = vlaneseq
      %v221 = vshrl.u32 %v220, 7
      %v222 = vsub.s32 0, %v221
      %v223 = vrot.slane %v218, %v222
      %v241 = vunpack.c.l.b16 %v202
      %v242 = vunpack.c.l.b16 %v203
      %v243 = vunpack.c.l.b16 %v204
      %v244 = vunpack.c.l.b16 %v205
      %v245 = vunpack.c.l.b16 %v206
      %v246 = vunpack.c.l.b16 %v207
      %v247 = vunpack.c.l.b16 %v208
      %v248 = vunpack.c.l.b16 %v209
      %v249 = vunpack.c.l.b16 %v210
      %v250 = vunpack.c.l.b16 %v211
      %v251 = vunpack.c.l.b16 %v212
      %v252 = vunpack.c.l.b16 %v213
      %v253 = vunpack.c.l.b16 %v214
      %v254 = vunpack.c.l.b16 %v215
      %v255 = vunpack.c.l.b16 %v216
      %v256 = vunpack.c.l.b16 %v217
      %v257 = vpack.c.b16 %v242, %v241
      %v258 = vpack.c.b16 %v244, %v243
      %v259 = vpack.c.b16 %v246, %v245
      %v260 = vpack.c.b16 %v248, %v247
      %v261 = vpack.c.b16 %v250, %v249
      %v262 = vpack.c.b16 %v252, %v251
      %v263 = vpack.c.b16 %v254, %v253
      %v264 = vpack.c.b16 %v256, %v255
      %273 = vmatprep.subr.bf16.mxu0 0
      %274 = vmatpush1.bf16.msra.mxu0 %v257
      %275 = vmatprep.subr.bf16.mxu0 0
      %276 = vmatpush1.bf16.msra.mxu0 %v258
      %277 = vmatprep.subr.bf16.mxu0 0
      %278 = vmatpush1.bf16.msra.mxu0 %v259
      %279 = vmatprep.subr.bf16.mxu0 0
      %280 = vmatpush1.bf16.msra.mxu0 %v260
      %281 = vmatprep.subr.bf16.mxu0 0
      %282 = vmatpush1.bf16.msra.mxu0 %v261
      %283 = vmatprep.subr.bf16.mxu0 0
      %284 = vmatpush1.bf16.msra.mxu0 %v262
      %285 = vmatprep.subr.bf16.mxu0 0
      %286 = vmatpush1.bf16.msra.mxu0 %v263
      %287 = vmatprep.subr.bf16.mxu0 0
      %288 = vmatpush1.bf16.msra.mxu0 %v264
      %289 = vmatprep.subr.bf16.mxu0 0
      %290 = vmatpush1.bf16.msra.mxu0 0
      %291 = vmatprep.subr.bf16.mxu0 0
      %292 = vmatpush1.bf16.msra.mxu0 0
      %293 = vmatprep.subr.bf16.mxu0 0
      %294 = vmatpush1.bf16.msra.mxu0 0
      %295 = vmatprep.subr.bf16.mxu0 0
      %296 = vmatpush1.bf16.msra.mxu0 0
      %297 = vmatprep.subr.bf16.mxu0 0
      %298 = vmatpush1.bf16.msra.mxu0 0
      %299 = vmatprep.subr.bf16.mxu0 0
      %300 = vmatpush1.bf16.msra.mxu0 0
      %301 = vmatprep.subr.bf16.mxu0 0
      %302 = vmatpush1.bf16.msra.mxu0 0
      %303 = vmatprep.subr.bf16.mxu0 0
      %304 = vmatpush1.bf16.msra.mxu0 0
      %305 = vmatprep.mubr.bf16.mxu0 0
      %306 = vmatmul.mubr.bf16.gmra.mrb[0].mxu0 %v201
      %v307 = vpop.f32.mrb[0].mxu0
      %v308 = vadd.f32 %v223, %v307
      %v309 = vpop.f32.mrb[0].mxu0
      %v310 = vpop.f32.mrb[0].mxu0
      %v311 = vadd.f32 %v223, %v310
      %v312 = vpop.f32.mrb[0].mxu0
      %313 = vdwg.mxu0
      %v314 = vld [vmem:[%s3] sm:$0xff]
      %v315 = vld [vmem:[%s3 + $0x8] sm:$0xff]
      %v316 = vadd.f32 %v308, %v314
      %v317 = vadd.f32 %v311, %v315
      %318 = vst [vmem:[%s197] sm:$0xff] %v316
      %319 = vst [vmem:[%s197 + $0x8] sm:$0xff] %v317
      %p320 = scmp.lt.s32.totalorder %s15, 1
      %s321 = scalar_select %p320, %s15, 1
      %s322 = smul.addr %s321, 2
      %s323 = smul.addr %s322, 8
      %s324 = scalar_lea.vmem %s4, %s323
      // Predicated region
      $region37: #{conformer_forward.4} parent=35 // pred_check
        %p325 = pneg %p122
      $region38: #{conformer_forward.4} parent=35 // pred_check_branch
        %327 = sbr.rel (%p325) target = $region40
      $region39: #{conformer_forward.4} parent=35 // pred_region
        _
      $region40: #{conformer_forward.4} parent=35 // pred_fallthru
        _
    $region36: #{conformer_forward.4} parent=5 // pred_fallthru
      _
    %p328 = scmp.le.s32.totalorder 2, %s10
    // Predicated region
    $region41: #{conformer_forward.4} parent=5 // pred_check
      %p329 = pneg %p328
    $region42: #{conformer_forward.4} parent=5 // pred_check_branch
      %331 = sbr.rel (%p329) target = $region44
    $region43: #{conformer_forward.4} parent=5 // pred_region
      %s332 = ssub.s32 %s10, 2
      // Predicated region
      $region45: #{conformer_forward.4} parent=43 // pred_check
        %p333 = pneg %p128
      $region46: #{conformer_forward.4} parent=43 // pred_check_branch
        %335 = sbr.rel (%p333) target = $region48
      $region47: #{conformer_forward.4} parent=43 // pred_region
        %p336 = scmp.lt.s32.totalorder %s16, 1
        %s337 = scalar_select %p336, %s16, 1
        %s338 = smul.addr %s337, 2
        %s339 = smul.addr %s338, 8
        %s340 = scalar_lea.vmem %s4, %s339
      $region48: #{conformer_forward.4} parent=43 // pred_fallthru
        _
    $region44: #{conformer_forward.4} parent=5 // pred_fallthru
      _
  $region6: #{conformer_forward.4} parent=0 // loop_footer
    %s14 = sadd.s32 1, %s10
  $region7: #{conformer_forward.4} parent=0 // loop_footer_branch
    %9 = sbr.rel target = $region3
  $region8: #{conformer_forward.4} parent=0 // loop_exit
    _

// kernel: conformer_forward.7
$region0: #{conformer_forward.7}
  #allocation0 [shape = 'u32[]', space=smem, size = 0x4, offset = 0x4, fixed_abs, tag = 'smem constant byte address 0x4 - core index']
  #allocation1 [shape = 'u32[144,128]{1,0:T(1,128)}', space=vmem, size = 0x12000, scoped, tag = 'internal scratch']
  %s0 = inlined_call_operand.vmem [shape: f32[2,16,128], index: 0, kind: input, shape index: {}]
  %s1 = inlined_call_operand.vmem [shape: bf16[128,128], index: 1, kind: input, shape index: {}]
  %s2 = inlined_call_operand.vmem [shape: f32[1,128], index: 2, kind: input, shape index: {}]
  %s3 = inlined_call_operand.hbm [shape: f32[2,128], index: 3, kind: output, shape index: {}]
  %s4 = sld [smem:[#allocation0]]
  $region22: #{conformer_forward.7} parent=0
    _
  %s6 = ssub.s32 1, %s4
  %s7 = scalar_select 0, %s6, %s4
  $region1: #{conformer_forward.7} parent=0
    #allocation2 [shape = 'u8[1024]{0}', space=vmem, size = 0x400, scoped, tag = 'output window, operand 0, single buffered']
    #allocation3 [shape = 's32[1]{0}', space=sflag, size = 0x4, scoped, tag = 'scoped memory for conformer_forward.7']
    %8 = vsyncpa [#allocation3], 0
    // Predicated region
    $region2: #{conformer_forward.7} parent=1 // pred_check
      _
    $region3: #{conformer_forward.7} parent=1 // pred_check_branch
      %10 = sbr.rel (0) target = $region5
    $region4: #{conformer_forward.7} parent=1 // pred_region
      _
    $region5: #{conformer_forward.7} parent=1 // pred_fallthru
      _
    // Predicated region
    $region6: #{conformer_forward.7} parent=1 // pred_check
      _
    $region7: #{conformer_forward.7} parent=1 // pred_check_branch
      %12 = sbr.rel (0) target = $region9
    $region8: #{conformer_forward.7} parent=1 // pred_region
      _
    $region9: #{conformer_forward.7} parent=1 // pred_fallthru
      _
    // Predicated region
    $region10: #{conformer_forward.7} parent=1 // pred_check
      _
    $region11: #{conformer_forward.7} parent=1 // pred_check_branch
      %14 = sbr.rel (0) target = $region13
    $region12: #{conformer_forward.7} parent=1 // pred_region
      _
    $region13: #{conformer_forward.7} parent=1 // pred_fallthru
      _
    %v16 = vlaneseq
    %v17 = vshrl.u32 %v16, 7
    %v18 = vadd.s32 %v17, 8
    %vm19 = vcmp.lt.s32.totalorder %v17, 9
    %vm20 = vcmp.lt.s32.totalorder %v18, 9
    %v21 = vsel %vm19, 1, 0
    %v22 = vsel %vm20, 1, 0
    %v23 = vcvt.s32.f32 %v21
    %v24 = vcvt.s32.f32 %v22
    %v25 = vld [vmem:[%s0] sm:$0xff]
    %v26 = vld [vmem:[%s0 + $0x8] sm:$0xff]
    %v27 = vld [vmem:[%s0 + $0x10] sm:$0xff]
    %v28 = vld [vmem:[%s0 + $0x18] sm:$0xff]
    %v29 = vmul.f32 %v25, %v23
    %v30 = vmul.f32 %v26, %v24
    %v31 = vmul.f32 %v27, %v23
    %v32 = vmul.f32 %v28, %v24
    %v33 = vadd.f32 %v29, %v30
    %v34 = vrot.slane %v33, 4
    %v35 = vadd.f32 %v33, %v34
    %v36 = vrot.slane %v35, 2
    %v37 = vadd.f32 %v35, %v36
    %v38 = vrot.slane %v37, 1
    %v39 = vadd.f32 %v37, %v38
    %v40 = vadd.f32 %v31, %v32
    %v41 = vrot.slane %v40, 4
    %v42 = vadd.f32 %v40, %v41
    %v43 = vrot.slane %v42, 2
    %v44 = vadd.f32 %v42, %v43
    %v45 = vrot.slane %v44, 1
    %v46 = vadd.f32 %v44, %v45
    %v47 = vmul.f32 %v39, 0.11111111
    %v48 = vmul.f32 %v46, 0.11111111
    %v49 = vpack.c.bf16 %v47, %v47
    %v50 = vpack.c.bf16 %v48, %v48
    %v51 = vld [vmem:[%s1] sm:$0xf]
    %v52 = vld [vmem:[%s1 + $0x4] sm:$0xf]
    %v53 = vld [vmem:[%s1 + $0x8] sm:$0xf]
    %v54 = vld [vmem:[%s1 + $0xc] sm:$0xf]
    %v55 = vld [vmem:[%s1 + $0x10] sm:$0xf]
    %v56 = vld [vmem:[%s1 + $0x14] sm:$0xf]
    %v57 = vld [vmem:[%s1 + $0x18] sm:$0xf]
    %v58 = vld [vmem:[%s1 + $0x1c] sm:$0xf]
    %v59 = vld [vmem:[%s1 + $0x20] sm:$0xf]
    %v60 = vld [vmem:[%s1 + $0x24] sm:$0xf]
    %v61 = vld [vmem:[%s1 + $0x28] sm:$0xf]
    %v62 = vld [vmem:[%s1 + $0x2c] sm:$0xf]
    %v63 = vld [vmem:[%s1 + $0x30] sm:$0xf]
    %v64 = vld [vmem:[%s1 + $0x34] sm:$0xf]
    %v65 = vld [vmem:[%s1 + $0x38] sm:$0xf]
    %v66 = vld [vmem:[%s1 + $0x3c] sm:$0xf]
    %v67 = vld [vmem:[%s2] sm:$0x1]
    %v69 = vlaneseq
    %v70 = vshrl.u32 %v69, 7
    %v71 = vsub.s32 0, %v70
    %v72 = vrot.slane %v67, %v71
    %v76 = vunpack.c.l.b16 %v49
    %v77 = vunpack.c.l.b16 %v50
    %vm78 = vcmask 1041409
    %v79 = vsel %vm78, %v77, %v76
    %v80 = vpack.c.b16 %v79, %v79
    %v98 = vunpack.c.l.b16 %v51
    %v99 = vunpack.c.l.b16 %v52
    %v100 = vunpack.c.l.b16 %v53
    %v101 = vunpack.c.l.b16 %v54
    %v102 = vunpack.c.l.b16 %v55
    %v103 = vunpack.c.l.b16 %v56
    %v104 = vunpack.c.l.b16 %v57
    %v105 = vunpack.c.l.b16 %v58
    %v106 = vunpack.c.l.b16 %v59
    %v107 = vunpack.c.l.b16 %v60
    %v108 = vunpack.c.l.b16 %v61
    %v109 = vunpack.c.l.b16 %v62
    %v110 = vunpack.c.l.b16 %v63
    %v111 = vunpack.c.l.b16 %v64
    %v112 = vunpack.c.l.b16 %v65
    %v113 = vunpack.c.l.b16 %v66
    %v114 = vpack.c.b16 %v99, %v98
    %v115 = vpack.c.b16 %v101, %v100
    %v116 = vpack.c.b16 %v103, %v102
    %v117 = vpack.c.b16 %v105, %v104
    %v118 = vpack.c.b16 %v107, %v106
    %v119 = vpack.c.b16 %v109, %v108
    %v120 = vpack.c.b16 %v111, %v110
    %v121 = vpack.c.b16 %v113, %v112
    %130 = vmatprep.subr.bf16.mxu0 0
    %131 = vmatpush1.bf16.msra.mxu0 %v114
    %132 = vmatprep.subr.bf16.mxu0 0
    %133 = vmatpush1.bf16.msra.mxu0 %v115
    %134 = vmatprep.subr.bf16.mxu0 0
    %135 = vmatpush1.bf16.msra.mxu0 %v116
    %136 = vmatprep.subr.bf16.mxu0 0
    %137 = vmatpush1.bf16.msra.mxu0 %v117
    %138 = vmatprep.subr.bf16.mxu0 0
    %139 = vmatpush1.bf16.msra.mxu0 %v118
    %140 = vmatprep.subr.bf16.mxu0 0
    %141 = vmatpush1.bf16.msra.mxu0 %v119
    %142 = vmatprep.subr.bf16.mxu0 0
    %143 = vmatpush1.bf16.msra.mxu0 %v120
    %144 = vmatprep.subr.bf16.mxu0 0
    %145 = vmatpush1.bf16.msra.mxu0 %v121
    %146 = vmatprep.subr.bf16.mxu0 0
    %147 = vmatpush1.bf16.msra.mxu0 0
    %148 = vmatprep.subr.bf16.mxu0 0
    %149 = vmatpush1.bf16.msra.mxu0 0
    %150 = vmatprep.subr.bf16.mxu0 0
    %151 = vmatpush1.bf16.msra.mxu0 0
    %152 = vmatprep.subr.bf16.mxu0 0
    %153 = vmatpush1.bf16.msra.mxu0 0
    %154 = vmatprep.subr.bf16.mxu0 0
    %155 = vmatpush1.bf16.msra.mxu0 0
    %156 = vmatprep.subr.bf16.mxu0 0
    %157 = vmatpush1.bf16.msra.mxu0 0
    %158 = vmatprep.subr.bf16.mxu0 0
    %159 = vmatpush1.bf16.msra.mxu0 0
    %160 = vmatprep.subr.bf16.mxu0 0
    %161 = vmatpush1.bf16.msra.mxu0 0
    %162 = vmatprep.mubr.bf16.mxu0 0
    %163 = vmatmul.mubr.bf16.gmra.mrb[0].mxu0 %v80
    %v164 = vpop.f32.mrb[0].mxu0
    %v165 = vadd.f32 %v72, %v164
    %v166 = vpop.f32.mrb[0].mxu0
    %v167 = vpop.f32.mrb[0].mxu0
    %v168 = vpop.f32.mrb[0].mxu0
    %169 = vdwg.mxu0
    %170 = vst [vmem:[#allocation2] sm:$0x3] %v165
    // Predicated region
    $region14: #{conformer_forward.7} parent=1 // pred_check
      _
    $region15: #{conformer_forward.7} parent=1 // pred_check_branch
      %172 = sbr.rel (0) target = $region17
    $region16: #{conformer_forward.7} parent=1 // pred_region
      %s174 = ssub.s32 32, 32
      %175 = vsyncadd [#allocation3], %s174
      %s177 = sshll.u32 [#allocation2], 4
      %s178 = int_to_ptr.vmem [resolvable:$true] %s177
      %180 = dma.vmem_to_hbm [thread:$0]  %s178, 32, %s3, [#allocation3]
    $region17: #{conformer_forward.7} parent=1 // pred_fallthru
      _
    // Predicated region
    $region18: #{conformer_forward.7} parent=1 // pred_check
      _
    $region19: #{conformer_forward.7} parent=1 // pred_check_branch
      %182 = sbr.rel (0) target = $region21
    $region20: #{conformer_forward.7} parent=1 // pred_region
      %183 = dma.done [#allocation3], 32
    $region21: #{conformer_forward.7} parent=1 // pred_fallthru
      _
    %184 = vsyncpa [#allocation3], 1

// kernel: conformer_forward.5
$region0: #{conformer_forward.5}
  #allocation0 [shape = 'u32[]', space=smem, size = 0x4, offset = 0x4, fixed_abs, tag = 'smem constant byte address 0x4 - core index']
  #allocation1 [shape = 'u32[144,128]{1,0:T(1,128)}', space=vmem, size = 0x12000, scoped, tag = 'internal scratch']
  %s0 = inlined_call_operand.vmem [shape: f32[2,16,128], index: 0, kind: input, shape index: {}]
  %s1 = inlined_call_operand.vmem [shape: bf16[8,128,128], index: 1, kind: input, shape index: {}]
  %s2 = inlined_call_operand.vmem [shape: bf16[2,128,128], index: 2, kind: input, shape index: {}]
  %s3 = inlined_call_operand.vmem [shape: bf16[2,128,128], index: 3, kind: input, shape index: {}]
  %s4 = inlined_call_operand.vmem [shape: f32[8,128], index: 4, kind: input, shape index: {}]
  %s5 = inlined_call_operand.vmem [shape: f32[24,128], index: 5, kind: input, shape index: {}]
  %s6 = inlined_call_operand.vmem [shape: f32[8,128], index: 6, kind: input, shape index: {}]
  %s7 = inlined_call_operand.vmem [shape: bf16[8,16,16], index: 7, kind: input, shape index: {}]
  %s8 = inlined_call_operand.vmem [shape: f32[2,16,128], index: 8, kind: output, shape index: {}]
  %s9 = sld [smem:[#allocation0]]
  $region65: #{conformer_forward.5} parent=0
    _
  %s11 = ssub.s32 1, %s9
  %s12 = scalar_select 0, %s11, %s9
  loop: start=0, step=1, limit=4
  $region2: #{conformer_forward.5} parent=0 // loop_pre_header
    _
  $region3: #{conformer_forward.5} parent=0 // loop_header
    %s14 = sphi 0, %s18
    %p15 = scmp.ge.s32.totalorder %s14, 4
    %s24 = sphi 0, %s26
    %s27 = sphi 0, %s24
    %s28 = sphi 0, %s27
    %s44 = sphi 0, %s28
    %s48 = sphi 0, %s48
    %s50 = sphi 0, %s48
    %s51 = sphi 0, %s50
    %s65 = sphi 0, %s51
    %s69 = sphi 0, %s69
    %s71 = sphi 0, %s69
    %s72 = sphi 0, %s71
    %s86 = sphi 0, %s72
    %s90 = sphi 0, %s90
    %s92 = sphi 0, %s90
    %s93 = sphi 0, %s92
    %s107 = sphi 0, %s93
    %s111 = sphi 0, %s111
    %s113 = sphi 0, %s111
    %s114 = sphi 0, %s113
    %s128 = sphi 0, %s114
    %s132 = sphi 0, %s132
    %s134 = sphi 0, %s132
    %s135 = sphi 0, %s134
    %s149 = sphi 0, %s135
    %s153 = sphi 0, %s153
    %s155 = sphi 0, %s153
    %s156 = sphi 0, %s155
    %s170 = sphi 0, %s156
    %s174 = sphi 0, %s174
    %s176 = sphi 0, %s174
    %s177 = sphi 0, %s176
    %s191 = sphi 0, %s177
    %s197 = sphi 0, %s199
    %s200 = sphi 0, %s197
    %s201 = sphi 0, %s200
    %s217 = sphi 0, %s201
  $region4: #{conformer_forward.5} parent=0 // loop_header_branch
    %17 = sbr.rel (%p15) target = $region8
  $region5: #{conformer_forward.5} parent=0 // loop_body
    %s19 = ssub.s32 %s14, 1
    %s20 = ssub.s32 %s14, 2
    %s21 = sadd.s32 %s14, 1
    %s22 = ssub.s32 %s14, %s21
    %p23 = scmp.eq.s32.totalorder %s22, 0
    %s25 = sadd.s32 %s24, 1
    %s26 = scalar_select %p23, %s24, %s25
    %p29 = pneg %p23
    %p30 = scmp.eq.s32.totalorder %s14, 1
    %p31 = por %p29, %p30
    %p32 = scmp.ne.s32.totalorder %s24, %s27
    %p33 = scmp.eq.s32.totalorder %s14, 0
    %p34 = por %p32, %p33
    %p35 = scmp.ne.s32.totalorder %s24, %s27
    %p36 = scmp.eq.s32.totalorder %s19, 1
    %p37 = por %p35, %p36
    %p38 = scmp.ne.s32.totalorder %s27, %s28
    %p39 = scmp.eq.s32.totalorder %s19, 0
    %p40 = por %p38, %p39
    %p41 = scmp.ne.s32.totalorder %s27, %s28
    %p42 = scmp.eq.s32.totalorder %s20, 1
    %p43 = por %p41, %p42
    %p45 = scmp.ne.s32.totalorder %s28, %s44
    %p46 = scmp.eq.s32.totalorder %s20, 0
    %p47 = por %p45, %p46
    %s49 = sadd.s32 %s48, 1
    %p52 = scmp.eq.s32.totalorder %s14, 1
    %p53 = scmp.ne.s32.totalorder %s48, %s50
    %p54 = scmp.eq.s32.totalorder %s14, 0
    %p55 = por %p53, %p54
    %p56 = scmp.ne.s32.totalorder %s48, %s50
    %p57 = scmp.eq.s32.totalorder %s19, 1
    %p58 = por %p56, %p57
    %p59 = scmp.ne.s32.totalorder %s50, %s51
    %p60 = scmp.eq.s32.totalorder %s19, 0
    %p61 = por %p59, %p60
    %p62 = scmp.ne.s32.totalorder %s50, %s51
    %p63 = scmp.eq.s32.totalorder %s20, 1
    %p64 = por %p62, %p63
    %p66 = scmp.ne.s32.totalorder %s51, %s65
    %p67 = scmp.eq.s32.totalorder %s20, 0
    %p68 = por %p66, %p67
    %s70 = sadd.s32 %s69, 1
    %p73 = scmp.eq.s32.totalorder %s14, 1
    %p74 = scmp.ne.s32.totalorder %s69, %s71
    %p75 = scmp.eq.s32.totalorder %s14, 0
    %p76 = por %p74, %p75
    %p77 = scmp.ne.s32.totalorder %s69, %s71
    %p78 = scmp.eq.s32.totalorder %s19, 1
    %p79 = por %p77, %p78
    %p80 = scmp.ne.s32.totalorder %s71, %s72
    %p81 = scmp.eq.s32.totalorder %s19, 0
    %p82 = por %p80, %p81
    %p83 = scmp.ne.s32.totalorder %s71, %s72
    %p84 = scmp.eq.s32.totalorder %s20, 1
    %p85 = por %p83, %p84
    %p87 = scmp.ne.s32.totalorder %s72, %s86
    %p88 = scmp.eq.s32.totalorder %s20, 0
    %p89 = por %p87, %p88
    %s91 = sadd.s32 %s90, 1
    %p94 = scmp.eq.s32.totalorder %s14, 1
    %p95 = scmp.ne.s32.totalorder %s90, %s92
    %p96 = scmp.eq.s32.totalorder %s14, 0
    %p97 = por %p95, %p96
    %p98 = scmp.ne.s32.totalorder %s90, %s92
    %p99 = scmp.eq.s32.totalorder %s19, 1
    %p100 = por %p98, %p99
    %p101 = scmp.ne.s32.totalorder %s92, %s93
    %p102 = scmp.eq.s32.totalorder %s19, 0
    %p103 = por %p101, %p102
    %p104 = scmp.ne.s32.totalorder %s92, %s93
    %p105 = scmp.eq.s32.totalorder %s20, 1
    %p106 = por %p104, %p105
    %p108 = scmp.ne.s32.totalorder %s93, %s107
    %p109 = scmp.eq.s32.totalorder %s20, 0
    %p110 = por %p108, %p109
    %s112 = sadd.s32 %s111, 1
    %p115 = scmp.eq.s32.totalorder %s14, 1
    %p116 = scmp.ne.s32.totalorder %s111, %s113
    %p117 = scmp.eq.s32.totalorder %s14, 0
    %p118 = por %p116, %p117
    %p119 = scmp.ne.s32.totalorder %s111, %s113
    %p120 = scmp.eq.s32.totalorder %s19, 1
    %p121 = por %p119, %p120
    %p122 = scmp.ne.s32.totalorder %s113, %s114
    %p123 = scmp.eq.s32.totalorder %s19, 0
    %p124 = por %p122, %p123
    %p125 = scmp.ne.s32.totalorder %s113, %s114
    %p126 = scmp.eq.s32.totalorder %s20, 1
    %p127 = por %p125, %p126
    %p129 = scmp.ne.s32.totalorder %s114, %s128
    %p130 = scmp.eq.s32.totalorder %s20, 0
    %p131 = por %p129, %p130
    %s133 = sadd.s32 %s132, 1
    %p136 = scmp.eq.s32.totalorder %s14, 1
    %p137 = scmp.ne.s32.totalorder %s132, %s134
    %p138 = scmp.eq.s32.totalorder %s14, 0
    %p139 = por %p137, %p138
    %p140 = scmp.ne.s32.totalorder %s132, %s134
    %p141 = scmp.eq.s32.totalorder %s19, 1
    %p142 = por %p140, %p141
    %p143 = scmp.ne.s32.totalorder %s134, %s135
    %p144 = scmp.eq.s32.totalorder %s19, 0
    %p145 = por %p143, %p144
    %p146 = scmp.ne.s32.totalorder %s134, %s135
    %p147 = scmp.eq.s32.totalorder %s20, 1
    %p148 = por %p146, %p147
    %p150 = scmp.ne.s32.totalorder %s135, %s149
    %p151 = scmp.eq.s32.totalorder %s20, 0
    %p152 = por %p150, %p151
    %s154 = sadd.s32 %s153, 1
    %p157 = scmp.eq.s32.totalorder %s14, 1
    %p158 = scmp.ne.s32.totalorder %s153, %s155
    %p159 = scmp.eq.s32.totalorder %s14, 0
    %p160 = por %p158, %p159
    %p161 = scmp.ne.s32.totalorder %s153, %s155
    %p162 = scmp.eq.s32.totalorder %s19, 1
    %p163 = por %p161, %p162
    %p164 = scmp.ne.s32.totalorder %s155, %s156
    %p165 = scmp.eq.s32.totalorder %s19, 0
    %p166 = por %p164, %p165
    %p167 = scmp.ne.s32.totalorder %s155, %s156
    %p168 = scmp.eq.s32.totalorder %s20, 1
    %p169 = por %p167, %p168
    %p171 = scmp.ne.s32.totalorder %s156, %s170
    %p172 = scmp.eq.s32.totalorder %s20, 0
    %p173 = por %p171, %p172
    %s175 = sadd.s32 %s174, 1
    %p178 = scmp.eq.s32.totalorder %s14, 1
    %p179 = scmp.ne.s32.totalorder %s174, %s176
    %p180 = scmp.eq.s32.totalorder %s14, 0
    %p181 = por %p179, %p180
    %p182 = scmp.ne.s32.totalorder %s174, %s176
    %p183 = scmp.eq.s32.totalorder %s19, 1
    %p184 = por %p182, %p183
    %p185 = scmp.ne.s32.totalorder %s176, %s177
    %p186 = scmp.eq.s32.totalorder %s19, 0
    %p187 = por %p185, %p186
    %p188 = scmp.ne.s32.totalorder %s176, %s177
    %p189 = scmp.eq.s32.totalorder %s20, 1
    %p190 = por %p188, %p189
    %p192 = scmp.ne.s32.totalorder %s177, %s191
    %p193 = scmp.eq.s32.totalorder %s20, 0
    %p194 = por %p192, %p193
    %s195 = ssub.s32 %s14, %s21
    %p196 = scmp.eq.s32.totalorder %s195, 0
    %s198 = sadd.s32 %s197, 1
    %s199 = scalar_select %p196, %s197, %s198
    %p202 = pneg %p196
    %p203 = scmp.eq.s32.totalorder %s14, 1
    %p204 = por %p202, %p203
    %p205 = scmp.ne.s32.totalorder %s197, %s200
    %p206 = scmp.eq.s32.totalorder %s14, 0
    %p207 = por %p205, %p206
    %p208 = scmp.ne.s32.totalorder %s197, %s200
    %p209 = scmp.eq.s32.totalorder %s19, 1
    %p210 = por %p208, %p209
    %p211 = scmp.ne.s32.totalorder %s200, %s201
    %p212 = scmp.eq.s32.totalorder %s19, 0
    %p213 = por %p211, %p212
    %p214 = scmp.ne.s32.totalorder %s200, %s201
    %p215 = scmp.eq.s32.totalorder %s20, 1
    %p216 = por %p214, %p215
    %p218 = scmp.ne.s32.totalorder %s201, %s217
    %p219 = scmp.eq.s32.totalorder %s20, 0
    %p220 = por %p218, %p219
    %p221 = scmp.le.s32.totalorder 1, %s14
    %p222 = scmp.lt.s32.totalorder %s14, 3
    %p223 = pnand %p221, %p222
    %p224 = pneg %p223
    // Predicated region
    $region9: #{conformer_forward.5} parent=5 // pred_check
      _
    $region10: #{conformer_forward.5} parent=5 // pred_check_branch
      %226 = sbr.rel (%p223) target = $region12
    $region11: #{conformer_forward.5} parent=5 // pred_region
      %s227 = ssub.s32 %s14, 1
      // Predicated region
      $region13: #{conformer_forward.5} parent=11 // pred_check
        %p228 = pneg %p61
      $region14: #{conformer_forward.5} parent=11 // pred_check_branch
        %230 = sbr.rel (%p228) target = $region16
      $region15: #{conformer_forward.5} parent=11 // pred_region
        _
      $region16: #{conformer_forward.5} parent=11 // pred_fallthru
        _
      // Predicated region
      $region17: #{conformer_forward.5} parent=11 // pred_check
        %p231 = pneg %p82
      $region18: #{conformer_forward.5} parent=11 // pred_check_branch
        %233 = sbr.rel (%p231) target = $region20
      $region19: #{conformer_forward.5} parent=11 // pred_region
        _
      $region20: #{conformer_forward.5} parent=11 // pred_fallthru
        _
      // Predicated region
      $region21: #{conformer_forward.5} parent=11 // pred_check
        %p234 = pneg %p103
      $region22: #{conformer_forward.5} parent=11 // pred_check_branch
        %236 = sbr.rel (%p234) target = $region24
      $region23: #{conformer_forward.5} parent=11 // pred_region
        _
      $region24: #{conformer_forward.5} parent=11 // pred_fallthru
        _
      // Predicated region
      $region25: #{conformer_forward.5} parent=11 // pred_check
        %p237 = pneg %p124
      $region26: #{conformer_forward.5} parent=11 // pred_check_branch
        %239 = sbr.rel (%p237) target = $region28
      $region27: #{conformer_forward.5} parent=11 // pred_region
        _
      $region28: #{conformer_forward.5} parent=11 // pred_fallthru
        _
      // Predicated region
      $region29: #{conformer_forward.5} parent=11 // pred_check
        %p240 = pneg %p145
      $region30: #{conformer_forward.5} parent=11 // pred_check_branch
        %242 = sbr.rel (%p240) target = $region32
      $region31: #{conformer_forward.5} parent=11 // pred_region
        _
      $region32: #{conformer_forward.5} parent=11 // pred_fallthru
        _
      // Predicated region
      $region33: #{conformer_forward.5} parent=11 // pred_check
        %p243 = pneg %p166
      $region34: #{conformer_forward.5} parent=11 // pred_check_branch
        %245 = sbr.rel (%p243) target = $region36
      $region35: #{conformer_forward.5} parent=11 // pred_region
        _
      $region36: #{conformer_forward.5} parent=11 // pred_fallthru
        _
      // Predicated region
      $region37: #{conformer_forward.5} parent=11 // pred_check
        %p246 = pneg %p187
      $region38: #{conformer_forward.5} parent=11 // pred_check_branch
        %248 = sbr.rel (%p246) target = $region40
      $region39: #{conformer_forward.5} parent=11 // pred_region
        _
      $region40: #{conformer_forward.5} parent=11 // pred_fallthru
        _
    $region12: #{conformer_forward.5} parent=5 // pred_fallthru
      _
    %p249 = scmp.lt.s32.totalorder %s14, 2
    // Predicated region
    $region41: #{conformer_forward.5} parent=5 // pred_check
      %p250 = pneg %p249
    $region42: #{conformer_forward.5} parent=5 // pred_check_branch
      %252 = sbr.rel (%p250) target = $region44
    $region43: #{conformer_forward.5} parent=5 // pred_region
      // Predicated region
      $region45: #{conformer_forward.5} parent=43 // pred_check
        %p253 = pneg %p34
      $region46: #{conformer_forward.5} parent=43 // pred_check_branch
        %255 = sbr.rel (%p253) target = $region48
      $region47: #{conformer_forward.5} parent=43 // pred_region
        %p256 = scmp.lt.s32.totalorder %s14, 1
        %s257 = scalar_select %p256, %s14, 1
        %s258 = smul.addr %s257, 2
        %s259 = smul.addr %s258, 8
        %s260 = scalar_lea.vmem %s0, %s259
      $region48: #{conformer_forward.5} parent=43 // pred_fallthru
        _
    $region44: #{conformer_forward.5} parent=5 // pred_fallthru
      _
    %p261 = scmp.le.s32.totalorder 1, %s14
    %p262 = scmp.lt.s32.totalorder %s14, 3
    %p263 = pnand %p261, %p262
    %p264 = pneg %p263
    // Predicated region
    $region49: #{conformer_forward.5} parent=5 // pred_check
      _
    $region50: #{conformer_forward.5} parent=5 // pred_check_branch
      %266 = sbr.rel (%p263) target = $region52
    $region51: #{conformer_forward.5} parent=5 // pred_region
      %s267 = ssub.s32 %s14, 1
      %p268 = scmp.lt.s32.totalorder %s19, 1
      %s269 = scalar_select %p268, %s19, 1
      %s270 = smul.addr %s269, 2
      %s271 = smul.addr %s270, 8
      %s272 = scalar_lea.vmem %s0, %s271
      %p273 = pneg %p40
      %p274 = pneg %p37
      %p275 = pneg %p61
      %p276 = pneg %p58
      %p277 = pneg %p82
      %p278 = pneg %p79
      %p279 = pneg %p103
      %p280 = pneg %p100
      %p281 = pneg %p124
      %p282 = pneg %p121
      %p283 = pneg %p145
      %p284 = pneg %p142
      %p285 = pneg %p166
      %p286 = pneg %p163
      %p287 = pneg %p187
      %p288 = pneg %p184
      %p289 = pneg %p213
      %p290 = pneg %p210
      %p291 = scmp.lt.s32.totalorder %s19, 1
      %s292 = scalar_select %p291, %s19, 1
      %s293 = smul.addr %s292, 2
      %s294 = smul.addr %s293, 8
      %s295 = scalar_lea.vmem %s8, %s294
      %p296 = scmp.lt.s32.totalorder %s19, 1
      %s297 = scalar_select %p296, %s19, 1
      %s298 = smul.addr %s297, 2
      %s299 = smul.addr %s298, 8
      %s300 = scalar_lea.vmem %s0, %s299
      %p301 = scmp.lt.s32.totalorder %s19, 1
      %s302 = scalar_select %p301, %s19, 1
      %s303 = smul.addr %s302, 2
      %s304 = smul.addr %s303, 8
      %s305 = scalar_lea.vmem %s8, %s304
      %v307 = vlaneseq
      %v308 = vand.u32 %v307, 127
      %vm309 = vcmp.lt.s32.totalorder %v308, 32
      %v310 = vsel %vm309, 1, 0
      %v311 = vcvt.s32.f32 %v310
      %v312 = vlaneseq
      %v313 = vshrl.u32 %v312, 7
      %v314 = vadd.s32 %v313, 8
      %vm315 = vcmp.lt.s32.totalorder %v313, 9
      %vm316 = vcmp.lt.s32.totalorder %v314, 9
      %v317 = vsel %vm315, 1, 0
      %v318 = vsel %vm316, 1, 0
      %v319 = vcvt.s32.f32 %v317
      %v320 = vcvt.s32.f32 %v318
      %vm321 = vcmp.lt.s32.totalorder %v308, 9
      %v322 = vsel %vm321, 0.0, -1e+30
      %v323 = vld [vmem:[%s300] sm:$0xff]
      %v324 = vld [vmem:[%s300 + $0x8] sm:$0xff]
      %v325 = vld [vmem:[%s2] sm:$0xf]
      %v326 = vld [vmem:[%s2 + $0x4] sm:$0xf]
      %v327 = vld [vmem:[%s2 + $0x8] sm:$0xf]
      %v328 = vld [vmem:[%s2 + $0xc] sm:$0xf]
      %v329 = vld [vmem:[%s2 + $0x10] sm:$0xf]
      %v330 = vld [vmem:[%s2 + $0x14] sm:$0xf]
      %v331 = vld [vmem:[%s2 + $0x18] sm:$0xf]
      %v332 = vld [vmem:[%s2 + $0x1c] sm:$0xf]
      %v333 = vld [vmem:[%s2 + $0x20] sm:$0xf]
      %v334 = vld [vmem:[%s2 + $0x24] sm:$0xf]
      %v335 = vld [vmem:[%s2 + $0x28] sm:$0xf]
      %v336 = vld [vmem:[%s2 + $0x2c] sm:$0xf]
      %v337 = vld [vmem:[%s2 + $0x30] sm:$0xf]
      %v338 = vld [vmem:[%s2 + $0x34] sm:$0xf]
      %v339 = vld [vmem:[%s2 + $0x38] sm:$0xf]
      %v340 = vld [vmem:[%s2 + $0x3c] sm:$0xf]
      %v341 = vpack.c.bf16 %v324, %v323
      %v342 = vld [vmem:[%s6] sm:$0x1]
      %v343 = vlaneseq
      %v344 = vshrl.u32 %v343, 7
      %v345 = vsub.s32 0, %v344
      %v346 = vrot.slane %v342, %v345
      %v363 = vunpack.c.l.b16 %v325
      %v364 = vunpack.c.l.b16 %v326
      %v365 = vunpack.c.l.b16 %v327
      %v366 = vunpack.c.l.b16 %v328
      %v367 = vunpack.c.l.b16 %v329
      %v368 = vunpack.c.l.b16 %v330
      %v369 = vunpack.c.l.b16 %v331
      %v370 = vunpack.c.l.b16 %v332
      %v371 = vunpack.c.l.b16 %v333
      %v372 = vunpack.c.l.b16 %v334
      %v373 = vunpack.c.l.b16 %v335
      %v374 = vunpack.c.l.b16 %v336
      %v375 = vunpack.c.l.b16 %v337
      %v376 = vunpack.c.l.b16 %v338
      %v377 = vunpack.c.l.b16 %v339
      %v378 = vunpack.c.l.b16 %v340
      %v379 = vpack.c.b16 %v364, %v363
      %v380 = vpack.c.b16 %v366, %v365
      %v381 = vpack.c.b16 %v368, %v367
      %v382 = vpack.c.b16 %v370, %v369
      %v383 = vpack.c.b16 %v372, %v371
      %v384 = vpack.c.b16 %v374, %v373
      %v385 = vpack.c.b16 %v376, %v375
      %v386 = vpack.c.b16 %v378, %v377
      %395 = vmatprep.subr.bf16.mxu0 0
      %396 = vmatpush1.bf16.msra.mxu0 %v379
      %397 = vmatprep.subr.bf16.mxu0 0
      %398 = vmatpush1.bf16.msra.mxu0 %v380
      %399 = vmatprep.subr.bf16.mxu0 0
      %400 = vmatpush1.bf16.msra.mxu0 %v381
      %401 = vmatprep.subr.bf16.mxu0 0
      %402 = vmatpush1.bf16.msra.mxu0 %v382
      %403 = vmatprep.subr.bf16.mxu0 0
      %404 = vmatpush1.bf16.msra.mxu0 %v383
      %405 = vmatprep.subr.bf16.mxu0 0
      %406 = vmatpush1.bf16.msra.mxu0 %v384
      %407 = vmatprep.subr.bf16.mxu0 0
      %408 = vmatpush1.bf16.msra.mxu0 %v385
      %409 = vmatprep.subr.bf16.mxu0 0
      %410 = vmatpush1.bf16.msra.mxu0 %v386
      %411 = vmatprep.subr.bf16.mxu0 0
      %412 = vmatpush1.bf16.msra.mxu0 0
      %413 = vmatprep.subr.bf16.mxu0 0
      %414 = vmatpush1.bf16.msra.mxu0 0
      %415 = vmatprep.subr.bf16.mxu0 0
      %416 = vmatpush1.bf16.msra.mxu0 0
      %417 = vmatprep.subr.bf16.mxu0 0
      %418 = vmatpush1.bf16.msra.mxu0 0
      %419 = vmatprep.subr.bf16.mxu0 0
      %420 = vmatpush1.bf16.msra.mxu0 0
      %421 = vmatprep.subr.bf16.mxu0 0
      %422 = vmatpush1.bf16.msra.mxu0 0
      %423 = vmatprep.subr.bf16.mxu0 0
      %424 = vmatpush1.bf16.msra.mxu0 0
      %425 = vmatprep.subr.bf16.mxu0 0
      %426 = vmatpush1.bf16.msra.mxu0 0
      %427 = vmatprep.mubr.bf16.mxu0 0
      %428 = vmatmul.mubr.bf16.gmra.mrb[0].mxu0 %v341
      %v429 = vpop.f32.mrb[0].mxu0
      %v430 = vadd.f32 %v346, %v429
      %v431 = vpop.f32.mrb[0].mxu0
      %v432 = vpop.f32.mrb[0].mxu0
      %v433 = vadd.f32 %v346, %v432
      %v434 = vpop.f32.mrb[0].mxu0
      %435 = vdwg.mxu0
      %v436 = vmax.f32 %v430, 0.0
      %v437 = vmax.f32 %v433, 0.0
      %v438 = vld [vmem:[%s3] sm:$0xf]
      %v439 = vld [vmem:[%s3 + $0x4] sm:$0xf]
      %v440 = vld [vmem:[%s3 + $0x8] sm:$0xf]
      %v441 = vld [vmem:[%s3 + $0xc] sm:$0xf]
      %v442 = vld [vmem:[%s3 + $0x10] sm:$0xf]
      %v443 = vld [vmem:[%s3 + $0x14] sm:$0xf]
      %v444 = vld [vmem:[%s3 + $0x18] sm:$0xf]
      %v445 = vld [vmem:[%s3 + $0x1c] sm:$0xf]
      %v446 = vld [vmem:[%s3 + $0x20] sm:$0xf]
      %v447 = vld [vmem:[%s3 + $0x24] sm:$0xf]
      %v448 = vld [vmem:[%s3 + $0x28] sm:$0xf]
      %v449 = vld [vmem:[%s3 + $0x2c] sm:$0xf]
      %v450 = vld [vmem:[%s3 + $0x30] sm:$0xf]
      %v451 = vld [vmem:[%s3 + $0x34] sm:$0xf]
      %v452 = vld [vmem:[%s3 + $0x38] sm:$0xf]
      %v453 = vld [vmem:[%s3 + $0x3c] sm:$0xf]
      %v454 = vpack.c.bf16 %v437, %v436
      %v455 = vld [vmem:[%s5 + $0x2] sm:$0x1]
      %v456 = vlaneseq
      %v457 = vshrl.u32 %v456, 7
      %v458 = vsub.s32 0, %v457
      %v459 = vrot.slane %v455, %v458
      %v476 = vunpack.c.l.b16 %v438
      %v477 = vunpack.c.l.b16 %v439
      %v478 = vunpack.c.l.b16 %v440
      %v479 = vunpack.c.l.b16 %v441
      %v480 = vunpack.c.l.b16 %v442
      %v481 = vunpack.c.l.b16 %v443
      %v482 = vunpack.c.l.b16 %v444
      %v483 = vunpack.c.l.b16 %v445
      %v484 = vunpack.c.l.b16 %v446
      %v485 = vunpack.c.l.b16 %v447
      %v486 = vunpack.c.l.b16 %v448
      %v487 = vunpack.c.l.b16 %v449
      %v488 = vunpack.c.l.b16 %v450
      %v489 = vunpack.c.l.b16 %v451
      %v490 = vunpack.c.l.b16 %v452
      %v491 = vunpack.c.l.b16 %v453
      %v492 = vpack.c.b16 %v477, %v476
      %v493 = vpack.c.b16 %v479, %v478
      %v494 = vpack.c.b16 %v481, %v480
      %v495 = vpack.c.b16 %v483, %v482
      %v496 = vpack.c.b16 %v485, %v484
      %v497 = vpack.c.b16 %v487, %v486
      %v498 = vpack.c.b16 %v489, %v488
      %v499 = vpack.c.b16 %v491, %v490
      %508 = vmatprep.subr.bf16.mxu0 0
      %509 = vmatpush1.bf16.msra.mxu0 %v492
      %510 = vmatprep.subr.bf16.mxu0 0
      %511 = vmatpush1.bf16.msra.mxu0 %v493
      %512 = vmatprep.subr.bf16.mxu0 0
      %513 = vmatpush1.bf16.msra.mxu0 %v494
      %514 = vmatprep.subr.bf16.mxu0 0
      %515 = vmatpush1.bf16.msra.mxu0 %v495
      %516 = vmatprep.subr.bf16.mxu0 0
      %517 = vmatpush1.bf16.msra.mxu0 %v496
      %518 = vmatprep.subr.bf16.mxu0 0
      %519 = vmatpush1.bf16.msra.mxu0 %v497
      %520 = vmatprep.subr.bf16.mxu0 0
      %521 = vmatpush1.bf16.msra.mxu0 %v498
      %522 = vmatprep.subr.bf16.mxu0 0
      %523 = vmatpush1.bf16.msra.mxu0 %v499
      %524 = vmatprep.subr.bf16.mxu0 0
      %525 = vmatpush1.bf16.msra.mxu0 0
      %526 = vmatprep.subr.bf16.mxu0 0
      %527 = vmatpush1.bf16.msra.mxu0 0
      %528 = vmatprep.subr.bf16.mxu0 0
      %529 = vmatpush1.bf16.msra.mxu0 0
      %530 = vmatprep.subr.bf16.mxu0 0
      %531 = vmatpush1.bf16.msra.mxu0 0
      %532 = vmatprep.subr.bf16.mxu0 0
      %533 = vmatpush1.bf16.msra.mxu0 0
      %534 = vmatprep.subr.bf16.mxu0 0
      %535 = vmatpush1.bf16.msra.mxu0 0
      %536 = vmatprep.subr.bf16.mxu0 0
      %537 = vmatpush1.bf16.msra.mxu0 0
      %538 = vmatprep.subr.bf16.mxu0 0
      %539 = vmatpush1.bf16.msra.mxu0 0
      %540 = vmatprep.mubr.bf16.mxu0 0
      %541 = vmatmul.mubr.bf16.gmra.mrb[0].mxu0 %v454
      %v542 = vpop.f32.mrb[0].mxu0
      %v543 = vadd.f32 %v459, %v542
      %v544 = vpop.f32.mrb[0].mxu0
      %v545 = vpop.f32.mrb[0].mxu0
      %v546 = vadd.f32 %v459, %v545
      %v547 = vpop.f32.mrb[0].mxu0
      %548 = vdwg.mxu0
      %v549 = vadd.f32 %v323, %v543
      %v550 = vadd.f32 %v324, %v546
      %v551 = vmul.f32 %v549, %v311
      %v552 = vmul.f32 %v550, %v311
      %553 = vadd.xlane.f32.xlu0 %v551
      %v554 = vpop.xlane.xlu0 %553
      %555 = vadd.xlane.f32.xlu0 %v552
      %v556 = vpop.xlane.xlu0 %555
      %v557 = vmul.f32 %v554, 0.03125
      %v558 = vmul.f32 %v556, 0.03125
      %v559 = vsub.f32 %v549, %v557
      %v560 = vsub.f32 %v550, %v558
      %v561 = vmul.f32 %v559, %v311
      %v562 = vmul.f32 %v560, %v311
      %v563 = vmul.f32 %v561, %v561
      %v564 = vmul.f32 %v562, %v562
      %565 = vadd.xlane.f32.xlu0 %v563
      %v566 = vpop.xlane.xlu0 %565
      %567 = vadd.xlane.f32.xlu0 %v564
      %v568 = vpop.xlane.xlu0 %567
      %v569 = vmul.f32 %v566, 0.03125
      %v570 = vmul.f32 %v568, 0.03125
      %v571 = vadd.f32 %v569, 1e-05
      %v572 = vadd.f32 %v570, 1e-05
      %v573 = vrsqrt.pop %v571
      %v574 = vrsqrt.pop %v572
      %v575 = vmul.f32 %v561, %v573
      %v576 = vmul.f32 %v562, %v574
      %v577 = vld [vmem:[%s5] sm:$0x1]
      %v578 = vlaneseq
      %v579 = vshrl.u32 %v578, 7
      %v580 = vsub.s32 0, %v579
      %v581 = vrot.slane %v577, %v580
      %v582 = vmul.f32 %v575, %v581
      %v583 = vmul.f32 %v576, %v581
      %v584 = vld [vmem:[%s5 + $0x1] sm:$0x1]
      %v585 = vlaneseq
      %v586 = vshrl.u32 %v585, 7
      %v587 = vsub.s32 0, %v586
      %v588 = vrot.slane %v584, %v587
      %v589 = vadd.f32 %v582, %v588
      %v590 = vadd.f32 %v583, %v588
      %v591 = vmul.f32 %v589, 0.5
      %v592 = vmul.f32 %v590, 0.5
      %v593 = vadd.f32 %v323, %v591
      %v594 = vadd.f32 %v324, %v592
      %v595 = vmul.f32 %v593, %v311
      %v596 = vmul.f32 %v594, %v311
      %597 = vadd.xlane.f32.xlu0 %v595
      %v598 = vpop.xlane.xlu0 %597
      %599 = vadd.xlane.f32.xlu0 %v596
      %v600 = vpop.xlane.xlu0 %599
      %v601 = vmul.f32 %v598, 0.03125
      %v602 = vmul.f32 %v600, 0.03125
      %v603 = vsub.f32 %v593, %v601
      %v604 = vsub.f32 %v594, %v602
      %v605 = vmul.f32 %v603, %v311
      %v606 = vmul.f32 %v604, %v311
      %v607 = vmul.f32 %v605, %v605
      %v608 = vmul.f32 %v606, %v606
      %609 = vadd.xlane.f32.xlu0 %v607
      %v610 = vpop.xlane.xlu0 %609
      %611 = vadd.xlane.f32.xlu0 %v608
      %v612 = vpop.xlane.xlu0 %611
      %v613 = vmul.f32 %v610, 0.03125
      %v614 = vmul.f32 %v612, 0.03125
      %v615 = vadd.f32 %v613, 1e-05
      %v616 = vadd.f32 %v614, 1e-05
      %v617 = vrsqrt.pop %v615
      %v618 = vrsqrt.pop %v616
      %v619 = vmul.f32 %v605, %v617
      %v620 = vmul.f32 %v606, %v618
      %v621 = vld [vmem:[%s5 + $0x3] sm:$0x1]
      %v622 = vlaneseq
      %v623 = vshrl.u32 %v622, 7
      %v624 = vsub.s32 0, %v623
      %v625 = vrot.slane %v621, %v624
      %v626 = vmul.f32 %v619, %v625
      %v627 = vmul.f32 %v620, %v625
      %v628 = vld [vmem:[%s5 + $0x4] sm:$0x1]
      %v629 = vlaneseq
      %v630 = vshrl.u32 %v629, 7
      %v631 = vsub.s32 0, %v630
      %v632 = vrot.slane %v628, %v631
      %v633 = vadd.f32 %v626, %v632
      %v634 = vadd.f32 %v627, %v632
      %v635 = vld [vmem:[%s1] sm:$0xf]
      %v636 = vld [vmem:[%s1 + $0x4] sm:$0xf]
      %v637 = vld [vmem:[%s1 + $0x8] sm:$0xf]
      %v638 = vld [vmem:[%s1 + $0xc] sm:$0xf]
      %v639 = vld [vmem:[%s1 + $0x10] sm:$0xf]
      %v640 = vld [vmem:[%s1 + $0x14] sm:$0xf]
      %v641 = vld [vmem:[%s1 + $0x18] sm:$0xf]
      %v642 = vld [vmem:[%s1 + $0x1c] sm:$0xf]
      %v643 = vld [vmem:[%s1 + $0x20] sm:$0xf]
      %v644 = vld [vmem:[%s1 + $0x24] sm:$0xf]
      %v645 = vld [vmem:[%s1 + $0x28] sm:$0xf]
      %v646 = vld [vmem:[%s1 + $0x2c] sm:$0xf]
      %v647 = vld [vmem:[%s1 + $0x30] sm:$0xf]
      %v648 = vld [vmem:[%s1 + $0x34] sm:$0xf]
      %v649 = vld [vmem:[%s1 + $0x38] sm:$0xf]
      %v650 = vld [vmem:[%s1 + $0x3c] sm:$0xf]
      %v651 = vpack.c.bf16 %v634, %v633
      %v652 = vld [vmem:[%s5 + $0x5] sm:$0x1]
      %v653 = vlaneseq
      %v654 = vshrl.u32 %v653, 7
      %v655 = vsub.s32 0, %v654
      %v656 = vrot.slane %v652, %v655
      %v673 = vunpack.c.l.b16 %v635
      %v674 = vunpack.c.l.b16 %v636
      %v675 = vunpack.c.l.b16 %v637
      %v676 = vunpack.c.l.b16 %v638
      %v677 = vunpack.c.l.b16 %v639
      %v678 = vunpack.c.l.b16 %v640
      %v679 = vunpack.c.l.b16 %v641
      %v680 = vunpack.c.l.b16 %v642
      %v681 = vunpack.c.l.b16 %v643
      %v682 = vunpack.c.l.b16 %v644
      %v683 = vunpack.c.l.b16 %v645
      %v684 = vunpack.c.l.b16 %v646
      %v685 = vunpack.c.l.b16 %v647
      %v686 = vunpack.c.l.b16 %v648
      %v687 = vunpack.c.l.b16 %v649
      %v688 = vunpack.c.l.b16 %v650
      %v689 = vpack.c.b16 %v674, %v673
      %v690 = vpack.c.b16 %v676, %v675
      %v691 = vpack.c.b16 %v678, %v677
      %v692 = vpack.c.b16 %v680, %v679
      %v693 = vpack.c.b16 %v682, %v681
      %v694 = vpack.c.b16 %v684, %v683
      %v695 = vpack.c.b16 %v686, %v685
      %v696 = vpack.c.b16 %v688, %v687
      %705 = vmatprep.subr.bf16.mxu0 0
      %706 = vmatpush1.bf16.msra.mxu0 %v689
      %707 = vmatprep.subr.bf16.mxu0 0
      %708 = vmatpush1.bf16.msra.mxu0 %v690
      %709 = vmatprep.subr.bf16.mxu0 0
      %710 = vmatpush1.bf16.msra.mxu0 %v691
      %711 = vmatprep.subr.bf16.mxu0 0
      %712 = vmatpush1.bf16.msra.mxu0 %v692
      %713 = vmatprep.subr.bf16.mxu0 0
      %714 = vmatpush1.bf16.msra.mxu0 %v693
      %715 = vmatprep.subr.bf16.mxu0 0
      %716 = vmatpush1.bf16.msra.mxu0 %v694
      %717 = vmatprep.subr.bf16.mxu0 0
      %718 = vmatpush1.bf16.msra.mxu0 %v695
      %719 = vmatprep.subr.bf16.mxu0 0
      %720 = vmatpush1.bf16.msra.mxu0 %v696
      %721 = vmatprep.subr.bf16.mxu0 0
      %722 = vmatpush1.bf16.msra.mxu0 0
      %723 = vmatprep.subr.bf16.mxu0 0
      %724 = vmatpush1.bf16.msra.mxu0 0
      %725 = vmatprep.subr.bf16.mxu0 0
      %726 = vmatpush1.bf16.msra.mxu0 0
      %727 = vmatprep.subr.bf16.mxu0 0
      %728 = vmatpush1.bf16.msra.mxu0 0
      %729 = vmatprep.subr.bf16.mxu0 0
      %730 = vmatpush1.bf16.msra.mxu0 0
      %731 = vmatprep.subr.bf16.mxu0 0
      %732 = vmatpush1.bf16.msra.mxu0 0
      %733 = vmatprep.subr.bf16.mxu0 0
      %734 = vmatpush1.bf16.msra.mxu0 0
      %735 = vmatprep.subr.bf16.mxu0 0
      %736 = vmatpush1.bf16.msra.mxu0 0
      %737 = vmatprep.mubr.bf16.mxu0 0
      %738 = vmatmul.mubr.bf16.gmra.mrb[0].mxu0 %v651
      %v739 = vpop.f32.mrb[0].mxu0
      %v740 = vadd.f32 %v656, %v739
      %v741 = vpop.f32.mrb[0].mxu0
      %v742 = vpop.f32.mrb[0].mxu0
      %v743 = vadd.f32 %v656, %v742
      %v744 = vpop.f32.mrb[0].mxu0
      %745 = vdwg.mxu0
      %s746 = scalar_lea.vmem %s1, 64
      %v747 = vld [vmem:[%s746] sm:$0xf]
      %v748 = vld [vmem:[%s746 + $0x4] sm:$0xf]
      %v749 = vld [vmem:[%s746 + $0x8] sm:$0xf]
      %v750 = vld [vmem:[%s746 + $0xc] sm:$0xf]
      %v751 = vld [vmem:[%s746 + $0x10] sm:$0xf]
      %v752 = vld [vmem:[%s746 + $0x14] sm:$0xf]
      %v753 = vld [vmem:[%s746 + $0x18] sm:$0xf]
      %v754 = vld [vmem:[%s746 + $0x1c] sm:$0xf]
      %v755 = vld [vmem:[%s746 + $0x20] sm:$0xf]
      %v756 = vld [vmem:[%s746 + $0x24] sm:$0xf]
      %v757 = vld [vmem:[%s746 + $0x28] sm:$0xf]
      %v758 = vld [vmem:[%s746 + $0x2c] sm:$0xf]
      %v759 = vld [vmem:[%s746 + $0x30] sm:$0xf]
      %v760 = vld [vmem:[%s746 + $0x34] sm:$0xf]
      %v761 = vld [vmem:[%s746 + $0x38] sm:$0xf]
      %v762 = vld [vmem:[%s746 + $0x3c] sm:$0xf]
      %v763 = vld [vmem:[%s5 + $0x6] sm:$0x1]
      %v764 = vlaneseq
      %v765 = vshrl.u32 %v764, 7
      %v766 = vsub.s32 0, %v765
      %v767 = vrot.slane %v763, %v766
      %v784 = vunpack.c.l.b16 %v747
      %v785 = vunpack.c.l.b16 %v748
      %v786 = vunpack.c.l.b16 %v749
      %v787 = vunpack.c.l.b16 %v750
      %v788 = vunpack.c.l.b16 %v751
      %v789 = vunpack.c.l.b16 %v752
      %v790 = vunpack.c.l.b16 %v753
      %v791 = vunpack.c.l.b16 %v754
      %v792 = vunpack.c.l.b16 %v755
      %v793 = vunpack.c.l.b16 %v756
      %v794 = vunpack.c.l.b16 %v757
      %v795 = vunpack.c.l.b16 %v758
      %v796 = vunpack.c.l.b16 %v759
      %v797 = vunpack.c.l.b16 %v760
      %v798 = vunpack.c.l.b16 %v761
      %v799 = vunpack.c.l.b16 %v762
      %v800 = vpack.c.b16 %v785, %v784
      %v801 = vpack.c.b16 %v787, %v786
      %v802 = vpack.c.b16 %v789, %v788
      %v803 = vpack.c.b16 %v791, %v790
      %v804 = vpack.c.b16 %v793, %v792
      %v805 = vpack.c.b16 %v795, %v794
      %v806 = vpack.c.b16 %v797, %v796
      %v807 = vpack.c.b16 %v799, %v798
      %816 = vmatprep.subr.bf16.mxu0 0
      %817 = vmatpush1.bf16.msra.mxu0 %v800
      %818 = vmatprep.subr.bf16.mxu0 0
      %819 = vmatpush1.bf16.msra.mxu0 %v801
      %820 = vmatprep.subr.bf16.mxu0 0
      %821 = vmatpush1.bf16.msra.mxu0 %v802
      %822 = vmatprep.subr.bf16.mxu0 0
      %823 = vmatpush1.bf16.msra.mxu0 %v803
      %824 = vmatprep.subr.bf16.mxu0 0
      %825 = vmatpush1.bf16.msra.mxu0 %v804
      %826 = vmatprep.subr.bf16.mxu0 0
      %827 = vmatpush1.bf16.msra.mxu0 %v805
      %828 = vmatprep.subr.bf16.mxu0 0
      %829 = vmatpush1.bf16.msra.mxu0 %v806
      %830 = vmatprep.subr.bf16.mxu0 0
      %831 = vmatpush1.bf16.msra.mxu0 %v807
      %832 = vmatprep.subr.bf16.mxu0 0
      %833 = vmatpush1.bf16.msra.mxu0 0
      %834 = vmatprep.subr.bf16.mxu0 0
      %835 = vmatpush1.bf16.msra.mxu0 0
      %836 = vmatprep.subr.bf16.mxu0 0
      %837 = vmatpush1.bf16.msra.mxu0 0
      %838 = vmatprep.subr.bf16.mxu0 0
      %839 = vmatpush1.bf16.msra.mxu0 0
      %840 = vmatprep.subr.bf16.mxu0 0
      %841 = vmatpush1.bf16.msra.mxu0 0
      %842 = vmatprep.subr.bf16.mxu0 0
      %843 = vmatpush1.bf16.msra.mxu0 0
      %844 = vmatprep.subr.bf16.mxu0 0
      %845 = vmatpush1.bf16.msra.mxu0 0
      %846 = vmatprep.subr.bf16.mxu0 0
      %847 = vmatpush1.bf16.msra.mxu0 0
      %848 = vmatprep.mubr.bf16.mxu0 0
      %849 = vmatmul.mubr.bf16.gmra.mrb[0].mxu0 %v651
      %v850 = vpop.f32.mrb[0].mxu0
      %v851 = vadd.f32 %v767, %v850
      %v852 = vpop.f32.mrb[0].mxu0
      %v853 = vpop.f32.mrb[0].mxu0
      %v854 = vadd.f32 %v767, %v853
      %v855 = vpop.f32.mrb[0].mxu0
      %856 = vdwg.mxu0
      %s857 = scalar_lea.vmem %s1, 128
      %v858 = vld [vmem:[%s857] sm:$0xf]
      %v859 = vld [vmem:[%s857 + $0x4] sm:$0xf]
      %v860 = vld [vmem:[%s857 + $0x8] sm:$0xf]
      %v861 = vld [vmem:[%s857 + $0xc] sm:$0xf]
      %v862 = vld [vmem:[%s857 + $0x10] sm:$0xf]
      %v863 = vld [vmem:[%s857 + $0x14] sm:$0xf]
      %v864 = vld [vmem:[%s857 + $0x18] sm:$0xf]
      %v865 = vld [vmem:[%s857 + $0x1c] sm:$0xf]
      %v866 = vld [vmem:[%s857 + $0x20] sm:$0xf]
      %v867 = vld [vmem:[%s857 + $0x24] sm:$0xf]
      %v868 = vld [vmem:[%s857 + $0x28] sm:$0xf]
      %v869 = vld [vmem:[%s857 + $0x2c] sm:$0xf]
      %v870 = vld [vmem:[%s857 + $0x30] sm:$0xf]
      %v871 = vld [vmem:[%s857 + $0x34] sm:$0xf]
      %v872 = vld [vmem:[%s857 + $0x38] sm:$0xf]
      %v873 = vld [vmem:[%s857 + $0x3c] sm:$0xf]
      %v874 = vld [vmem:[%s5 + $0x7] sm:$0x1]
      %v875 = vlaneseq
      %v876 = vshrl.u32 %v875, 7
      %v877 = vsub.s32 0, %v876
      %v878 = vrot.slane %v874, %v877
      %v895 = vunpack.c.l.b16 %v858
      %v896 = vunpack.c.l.b16 %v859
      %v897 = vunpack.c.l.b16 %v860
      %v898 = vunpack.c.l.b16 %v861
      %v899 = vunpack.c.l.b16 %v862
      %v900 = vunpack.c.l.b16 %v863
      %v901 = vunpack.c.l.b16 %v864
      %v902 = vunpack.c.l.b16 %v865
      %v903 = vunpack.c.l.b16 %v866
      %v904 = vunpack.c.l.b16 %v867
      %v905 = vunpack.c.l.b16 %v868
      %v906 = vunpack.c.l.b16 %v869
      %v907 = vunpack.c.l.b16 %v870
      %v908 = vunpack.c.l.b16 %v871
      %v909 = vunpack.c.l.b16 %v872
      %v910 = vunpack.c.l.b16 %v873
      %v911 = vpack.c.b16 %v896, %v895
      %v912 = vpack.c.b16 %v898, %v897
      %v913 = vpack.c.b16 %v900, %v899
      %v914 = vpack.c.b16 %v902, %v901
      %v915 = vpack.c.b16 %v904, %v903
      %v916 = vpack.c.b16 %v906, %v905
      %v917 = vpack.c.b16 %v908, %v907
      %v918 = vpack.c.b16 %v910, %v909
      %927 = vmatprep.subr.bf16.mxu0 0
      %928 = vmatpush1.bf16.msra.mxu0 %v911
      %929 = vmatprep.subr.bf16.mxu0 0
      %930 = vmatpush1.bf16.msra.mxu0 %v912
      %931 = vmatprep.subr.bf16.mxu0 0
      %932 = vmatpush1.bf16.msra.mxu0 %v913
      %933 = vmatprep.subr.bf16.mxu0 0
      %934 = vmatpush1.bf16.msra.mxu0 %v914
      %935 = vmatprep.subr.bf16.mxu0 0
      %936 = vmatpush1.bf16.msra.mxu0 %v915
      %937 = vmatprep.subr.bf16.mxu0 0
      %938 = vmatpush1.bf16.msra.mxu0 %v916
      %939 = vmatprep.subr.bf16.mxu0 0
      %940 = vmatpush1.bf16.msra.mxu0 %v917
      %941 = vmatprep.subr.bf16.mxu0 0
      %942 = vmatpush1.bf16.msra.mxu0 %v918
      %943 = vmatprep.subr.bf16.mxu0 0
      %944 = vmatpush1.bf16.msra.mxu0 0
      %945 = vmatprep.subr.bf16.mxu0 0
      %946 = vmatpush1.bf16.msra.mxu0 0
      %947 = vmatprep.subr.bf16.mxu0 0
      %948 = vmatpush1.bf16.msra.mxu0 0
      %949 = vmatprep.subr.bf16.mxu0 0
      %950 = vmatpush1.bf16.msra.mxu0 0
      %951 = vmatprep.subr.bf16.mxu0 0
      %952 = vmatpush1.bf16.msra.mxu0 0
      %953 = vmatprep.subr.bf16.mxu0 0
      %954 = vmatpush1.bf16.msra.mxu0 0
      %955 = vmatprep.subr.bf16.mxu0 0
      %956 = vmatpush1.bf16.msra.mxu0 0
      %957 = vmatprep.subr.bf16.mxu0 0
      %958 = vmatpush1.bf16.msra.mxu0 0
      %959 = vmatprep.mubr.bf16.mxu0 0
      %960 = vmatmul.mubr.bf16.gmra.mrb[0].mxu0 %v651
      %v961 = vpop.f32.mrb[0].mxu0
      %v962 = vadd.f32 %v878, %v961
      %v963 = vpop.f32.mrb[0].mxu0
      %v964 = vpop.f32.mrb[0].mxu0
      %v965 = vadd.f32 %v878, %v964
      %v966 = vpop.f32.mrb[0].mxu0
      %967 = vdwg.mxu0
      %v968 = vpack.c.bf16 %v854, %v851
      %vm969 = vcmp.ge.s32.totalorder %v308, 0
      %vm970 = vcmp.lt.s32.totalorder %v308, 8
      %vm971 = vmand %vm969, %vm970
      %v972 = vsel %vm971, 1, 0
      %v973 = vcvt.s32.f32 %v972
      %v974 = vmul.f32 %v973, 0.35355338
      %v975 = vmul.f32 %v740, %v974
      %v976 = vmul.f32 %v743, %v974
      %v977 = vpack.c.bf16 %v976, %v975
      %978 = vmatprep.subr.bf16.mxu0 0
      %979 = vmatpush1.bf16.xpose.msra.mxu0 %v968
      %980 = vmatprep.subr.bf16.mxu0 0
      %981 = vmatpush1.bf16.xpose.msra.mxu0 0
      %982 = vmatprep.subr.bf16.mxu0 0
      %983 = vmatpush1.bf16.xpose.msra.mxu0 0
      %984 = vmatprep.subr.bf16.mxu0 0
      %985 = vmatpush1.bf16.xpose.msra.mxu0 0
      %986 = vmatprep.subr.bf16.mxu0 0
      %987 = vmatpush1.bf16.xpose.msra.mxu0 0
      %988 = vmatprep.subr.bf16.mxu0 0
      %989 = vmatpush1.bf16.xpose.msra.mxu0 0
      %990 = vmatprep.subr.bf16.mxu0 0
      %991 = vmatpush1.bf16.xpose.msra.mxu0 0
      %992 = vmatprep.subr.bf16.mxu0 0
      %993 = vmatpush1.bf16.xpose.msra.mxu0 0
      %994 = vmatprep.subr.bf16.mxu0 0
      %995 = vmatpush1.bf16.xpose.msra.mxu0 0
      %996 = vmatprep.subr.bf16.mxu0 0
      %997 = vmatpush1.bf16.xpose.msra.mxu0 0
      %998 = vmatprep.subr.bf16.mxu0 0
      %999 = vmatpush1.bf16.xpose.msra.mxu0 0
      %1000 = vmatprep.subr.bf16.mxu0 0
      %1001 = vmatpush1.bf16.xpose.msra.mxu0 0
      %1002 = vmatprep.subr.bf16.mxu0 0
      %1003 = vmatpush1.bf16.xpose.msra.mxu0 0
      %1004 = vmatprep.subr.bf16.mxu0 0
      %1005 = vmatpush1.bf16.xpose.msra.mxu0 0
      %1006 = vmatprep.subr.bf16.mxu0 0
      %1007 = vmatpush1.bf16.xpose.msra.mxu0 0
      %1008 = vmatprep.subr.bf16.mxu0 0
      %1009 = vmatpush1.bf16.xpose.msra.mxu0 0
      %1010 = vmatprep.mubr.bf16.mxu0 0
      %1011 = vmatmul.mubr.bf16.gmra.mrb[0].mxu0 %v977
      %v1012 = vpop.f32.mrb[0].mxu0
      %v1013 = vadd.f32 %v322, %v1012
      %v1014 = vpop.f32.mrb[0].mxu0
      %v1015 = vpop.f32.mrb[0].mxu0
      %v1016 = vadd.f32 %v322, %v1015
      %v1017 = vpop.f32.mrb[0].mxu0
      %1018 = vdwg.mxu0
      %vm1019 = vcmask 130048
      %v1020 = vsel %vm1019, %v1013, -inf
      %1021 = vmax.xlane.f32.xlu0 %v1020
      %v1022 = vpop.xlane.xlu0 %1021
      %v1023 = vsel %vm1019, %v1016, -inf
      %1024 = vmax.xlane.f32.xlu0 %v1023
      %v1025 = vpop.xlane.xlu0 %1024
      %v1026 = vsub.f32 %v1013, %v1022
      %v1027 = vsub.f32 %v1016, %v1025
      %v1028 = vmul.f32 %v1026, 1.442695
      %v1029 = vpow.pop %v1028
      %v1030 = vmul.f32 %v1027, 1.442695
      %v1031 = vpow.pop %v1030
      %v1032 = vsel %vm1019, %v1029, 0.0
      %1033 = vadd.xlane.f32.xlu0 %v1032
      %v1034 = vpop.xlane.xlu0 %1033
      %v1035 = vsel %vm1019, %v1031, 0.0
      %1036 = vadd.xlane.f32.xlu0 %v1035
      %v1037 = vpop.xlane.xlu0 %1036
      %v1038 = vrcp.pop %v1034
      %v1039 = vrcp.pop %v1037
      %v1040 = vmul.f32 %v1029, %v1038
      %v1041 = vmul.f32 %v1031, %v1039
      %v1042 = vmul.f32 %v962, %v973
      %v1043 = vmul.f32 %v965, %v973
      %v1044 = vpack.c.bf16 %v1043, %v1042
      %v1045 = vpack.c.bf16 %v1041, %v1040
      %vm1046 = vcmp.ge.s32.totalorder %v308, 8
      %vm1047 = vcmp.lt.s32.totalorder %v308, 16
      %vm1048 = vmand %vm1046, %vm1047
      %v1049 = vsel %vm1048, 1, 0
      %v1050 = vcvt.s32.f32 %v1049
      %v1051 = vmul.f32 %v1050, 0.35355338
      %v1052 = vmul.f32 %v740, %v1051
      %v1053 = vmul.f32 %v743, %v1051
      %v1054 = vpack.c.bf16 %v1053, %v1052
      %1055 = vmatprep.subr.bf16.mxu0 0
      %1056 = vmatpush1.bf16.xpose.msra.mxu0 %v968
      %1057 = vmatprep.subr.bf16.mxu0 0
      %1058 = vmatpush1.bf16.xpose.msra.mxu0 0
      %1059 = vmatprep.subr.bf16.mxu0 0
      %1060 = vmatpush1.bf16.xpose.msra.mxu0 0
      %1061 = vmatprep.subr.bf16.mxu0 0
      %1062 = vmatpush1.bf16.xpose.msra.mxu0 0
      %1063 = vmatprep.subr.bf16.mxu0 0
      %1064 = vmatpush1.bf16.xpose.msra.mxu0 0
      %1065 = vmatprep.subr.bf16.mxu0 0
      %1066 = vmatpush1.bf16.xpose.msra.mxu0 0
      %1067 = vmatprep.subr.bf16.mxu0 0
      %1068 = vmatpush1.bf16.xpose.msra.mxu0 0
      %1069 = vmatprep.subr.bf16.mxu0 0
      %1070 = vmatpush1.bf16.xpose.msra.mxu0 0
      %1071 = vmatprep.subr.bf16.mxu0 0
      %1072 = vmatpush1.bf16.xpose.msra.mxu0 0
      %1073 = vmatprep.subr.bf16.mxu0 0
      %1074 = vmatpush1.bf16.xpose.msra.mxu0 0
      %1075 = vmatprep.subr.bf16.mxu0 0
      %1076 = vmatpush1.bf16.xpose.msra.mxu0 0
      %1077 = vmatprep.subr.bf16.mxu0 0
      %1078 = vmatpush1.bf16.xpose.msra.mxu0 0
      %1079 = vmatprep.subr.bf16.mxu0 0
      %1080 = vmatpush1.bf16.xpose.msra.mxu0 0
      %1081 = vmatprep.subr.bf16.mxu0 0
      %1082 = vmatpush1.bf16.xpose.msra.mxu0 0
      %1083 = vmatprep.subr.bf16.mxu0 0
      %1084 = vmatpush1.bf16.xpose.msra.mxu0 0
      %1085 = vmatprep.subr.bf16.mxu0 0
      %1086 = vmatpush1.bf16.xpose.msra.mxu0 0
      %1087 = vmatprep.mubr.bf16.mxu0 0
      %1088 = vmatmul.mubr.bf16.gmra.mrb[0].mxu0 %v1054
      %v1089 = vpop.f32.mrb[0].mxu0
      %v1090 = vadd.f32 %v322, %v1089
      %v1091 = vpop.f32.mrb[0].mxu0
      %v1092 = vpop.f32.mrb[0].mxu0
      %v1093 = vadd.f32 %v322, %v1092
      %v1094 = vpop.f32.mrb[0].mxu0
      %1095 = vdwg.mxu0
      %v1096 = vsel %vm1019, %v1090, -inf
      %1097 = vmax.xlane.f32.xlu0 %v1096
      %v1098 = vpop.xlane.xlu0 %1097
      %v1099 = vsel %vm1019, %v1093, -inf
      %1100 = vmax.xlane.f32.xlu0 %v1099
      %v1101 = vpop.xlane.xlu0 %1100
      %v1102 = vsub.f32 %v1090, %v1098
      %v1103 = vsub.f32 %v1093, %v1101
      %v1104 = vmul.f32 %v1102, 1.442695
      %v1105 = vpow.pop %v1104
      %v1106 = vmul.f32 %v1103, 1.442695
      %v1107 = vpow.pop %v1106
      %v1108 = vsel %vm1019, %v1105, 0.0
      %1109 = vadd.xlane.f32.xlu0 %v1108
      %v1110 = vpop.xlane.xlu0 %1109
      %v1111 = vsel %vm1019, %v1107, 0.0
      %1112 = vadd.xlane.f32.xlu0 %v1111
      %v1113 = vpop.xlane.xlu0 %1112
      %v1114 = vrcp.pop %v1110
      %v1115 = vrcp.pop %v1113
      %v1116 = vmul.f32 %v1105, %v1114
      %v1117 = vmul.f32 %v1107, %v1115
      %v1118 = vmul.f32 %v962, %v1050
      %v1119 = vmul.f32 %v965, %v1050
      %v1120 = vpack.c.bf16 %v1119, %v1118
      %v1121 = vpack.c.bf16 %v1117, %v1116
      %v1123 = vsel %vm1019, %v1121, 0
      %1125 = vmatprep.subr.bf16.mxu0 0
      %1126 = vmatpush1.bf16.msra.mxu0 %v1120
      %1127 = vmatprep.subr.bf16.mxu0 0
      %1128 = vmatpush1.bf16.msra.mxu0 0
      %1129 = vmatprep.subr.bf16.mxu0 0
      %1130 = vmatpush1.bf16.msra.mxu0 0
      %1131 = vmatprep.subr.bf16.mxu0 0
      %1132 = vmatpush1.bf16.msra.mxu0 0
      %1133 = vmatprep.subr.bf16.mxu0 0
      %1134 = vmatpush1.bf16.msra.mxu0 0
      %1135 = vmatprep.subr.bf16.mxu0 0
      %1136 = vmatpush1.bf16.msra.mxu0 0
      %1137 = vmatprep.subr.bf16.mxu0 0
      %1138 = vmatpush1.bf16.msra.mxu0 0
      %1139 = vmatprep.subr.bf16.mxu0 0
      %1140 = vmatpush1.bf16.msra.mxu0 0
      %1141 = vmatprep.subr.bf16.mxu0 0
      %1142 = vmatpush1.bf16.msra.mxu0 0
      %1143 = vmatprep.subr.bf16.mxu0 0
      %1144 = vmatpush1.bf16.msra.mxu0 0
      %1145 = vmatprep.subr.bf16.mxu0 0
      %1146 = vmatpush1.bf16.msra.mxu0 0
      %1147 = vmatprep.subr.bf16.mxu0 0
      %1148 = vmatpush1.bf16.msra.mxu0 0
      %1149 = vmatprep.subr.bf16.mxu0 0
      %1150 = vmatpush1.bf16.msra.mxu0 0
      %1151 = vmatprep.subr.bf16.mxu0 0
      %1152 = vmatpush1.bf16.msra.mxu0 0
      %1153 = vmatprep.subr.bf16.mxu0 0
      %1154 = vmatpush1.bf16.msra.mxu0 0
      %1155 = vmatprep.subr.bf16.mxu0 0
      %1156 = vmatpush1.bf16.msra.mxu0 0
      %1157 = vmatprep.mubr.bf16.mxu0 0
      %1158 = vmatmul.mubr.bf16.gmra.mrb[0].mxu0 %v1123
      %v1159 = vpop.f32.mrb[0].mxu0
      %v1160 = vadd.f32 0.0, %v1159
      %v1161 = vpop.f32.mrb[0].mxu0
      %v1162 = vpop.f32.mrb[0].mxu0
      %v1163 = vadd.f32 0.0, %v1162
      %v1164 = vpop.f32.mrb[0].mxu0
      %1165 = vdwg.mxu0
      %v1167 = vsel %vm1019, %v1045, 0
      %1169 = vmatprep.subr.bf16.mxu0 0
      %1170 = vmatpush1.bf16.msra.mxu0 %v1044
      %1171 = vmatprep.subr.bf16.mxu0 0
      %1172 = vmatpush1.bf16.msra.mxu0 0
      %1173 = vmatprep.subr.bf16.mxu0 0
      %1174 = vmatpush1.bf16.msra.mxu0 0
      %1175 = vmatprep.subr.bf16.mxu0 0
      %1176 = vmatpush1.bf16.msra.mxu0 0
      %1177 = vmatprep.subr.bf16.mxu0 0
      %1178 = vmatpush1.bf16.msra.mxu0 0
      %1179 = vmatprep.subr.bf16.mxu0 0
      %1180 = vmatpush1.bf16.msra.mxu0 0
      %1181 = vmatprep.subr.bf16.mxu0 0
      %1182 = vmatpush1.bf16.msra.mxu0 0
      %1183 = vmatprep.subr.bf16.mxu0 0
      %1184 = vmatpush1.bf16.msra.mxu0 0
      %1185 = vmatprep.subr.bf16.mxu0 0
      %1186 = vmatpush1.bf16.msra.mxu0 0
      %1187 = vmatprep.subr.bf16.mxu0 0
      %1188 = vmatpush1.bf16.msra.mxu0 0
      %1189 = vmatprep.subr.bf16.mxu0 0
      %1190 = vmatpush1.bf16.msra.mxu0 0
      %1191 = vmatprep.subr.bf16.mxu0 0
      %1192 = vmatpush1.bf16.msra.mxu0 0
      %1193 = vmatprep.subr.bf16.mxu0 0
      %1194 = vmatpush1.bf16.msra.mxu0 0
      %1195 = vmatprep.subr.bf16.mxu0 0
      %1196 = vmatpush1.bf16.msra.mxu0 0
      %1197 = vmatprep.subr.bf16.mxu0 0
      %1198 = vmatpush1.bf16.msra.mxu0 0
      %1199 = vmatprep.subr.bf16.mxu0 0
      %1200 = vmatpush1.bf16.msra.mxu0 0
      %1201 = vmatprep.mubr.bf16.mxu0 0
      %1202 = vmatmul.mubr.bf16.gmra.mrb[0].mxu0 %v1167
      %v1203 = vpop.f32.mrb[0].mxu0
      %v1204 = vadd.f32 %v1160, %v1203
      %v1205 = vpop.f32.mrb[0].mxu0
      %v1206 = vpop.f32.mrb[0].mxu0
      %v1207 = vadd.f32 %v1163, %v1206
      %v1208 = vpop.f32.mrb[0].mxu0
      %1209 = vdwg.mxu0
      %vm1210 = vcmp.ge.s32.totalorder %v308, 16
      %vm1211 = vcmp.lt.s32.totalorder %v308, 24
      %vm1212 = vmand %vm1210, %vm1211
      %v1213 = vsel %vm1212, 1, 0
      %v1214 = vcvt.s32.f32 %v1213
      %v1215 = vmul.f32 %v1214, 0.35355338
      %v1216 = vmul.f32 %v740, %v1215
      %v1217 = vmul.f32 %v743, %v1215
      %v1218 = vpack.c.bf16 %v1217, %v1216
      %1219 = vmatprep.subr.bf16.mxu0 0
      %1220 = vmatpush1.bf16.xpose.msra.mxu0 %v968
      %1221 = vmatprep.subr.bf16.mxu0 0
      %1222 = vmatpush1.bf16.xpose.msra.mxu0 0
      %1223 = vmatprep.subr.bf16.mxu0 0
      %1224 = vmatpush1.bf16.xpose.msra.mxu0 0
      %1225 = vmatprep.subr.bf16.mxu0 0
      %1226 = vmatpush1.bf16.xpose.msra.mxu0 0
      %1227 = vmatprep.subr.bf16.mxu0 0
      %1228 = vmatpush1.bf16.xpose.msra.mxu0 0
      %1229 = vmatprep.subr.bf16.mxu0 0
      %1230 = vmatpush1.bf16.xpose.msra.mxu0 0
      %1231 = vmatprep.subr.bf16.mxu0 0
      %1232 = vmatpush1.bf16.xpose.msra.mxu0 0
      %1233 = vmatprep.subr.bf16.mxu0 0
      %1234 = vmatpush1.bf16.xpose.msra.mxu0 0
      %1235 = vmatprep.subr.bf16.mxu0 0
      %1236 = vmatpush1.bf16.xpose.msra.mxu0 0
      %1237 = vmatprep.subr.bf16.mxu0 0
      %1238 = vmatpush1.bf16.xpose.msra.mxu0 0
      %1239 = vmatprep.subr.bf16.mxu0 0
      %1240 = vmatpush1.bf16.xpose.msra.mxu0 0
      %1241 = vmatprep.subr.bf16.mxu0 0
      %1242 = vmatpush1.bf16.xpose.msra.mxu0 0
      %1243 = vmatprep.subr.bf16.mxu0 0
      %1244 = vmatpush1.bf16.xpose.msra.mxu0 0
      %1245 = vmatprep.subr.bf16.mxu0 0
      %1246 = vmatpush1.bf16.xpose.msra.mxu0 0
      %1247 = vmatprep.subr.bf16.mxu0 0
      %1248 = vmatpush1.bf16.xpose.msra.mxu0 0
      %1249 = vmatprep.subr.bf16.mxu0 0
      %1250 = vmatpush1.bf16.xpose.msra.mxu0 0
      %1251 = vmatprep.mubr.bf16.mxu0 0
      %1252 = vmatmul.mubr.bf16.gmra.mrb[0].mxu0 %v1218
      %v1253 = vpop.f32.mrb[0].mxu0
      %v1254 = vadd.f32 %v322, %v1253
      %v1255 = vpop.f32.mrb[0].mxu0
      %v1256 = vpop.f32.mrb[0].mxu0
      %v1257 = vadd.f32 %v322, %v1256
      %v1258 = vpop.f32.mrb[0].mxu0
      %1259 = vdwg.mxu0
      %v1260 = vsel %vm1019, %v1254, -inf
      %1261 = vmax.xlane.f32.xlu0 %v1260
      %v1262 = vpop.xlane.xlu0 %1261
      %v1263 = vsel %vm1019, %v1257, -inf
      %1264 = vmax.xlane.f32.xlu0 %v1263
      %v1265 = vpop.xlane.xlu0 %1264
      %v1266 = vsub.f32 %v1254, %v1262
      %v1267 = vsub.f32 %v1257, %v1265
      %v1268 = vmul.f32 %v1266, 1.442695
      %v1269 = vpow.pop %v1268
      %v1270 = vmul.f32 %v1267, 1.442695
      %v1271 = vpow.pop %v1270
      %v1272 = vsel %vm1019, %v1269, 0.0
      %1273 = vadd.xlane.f32.xlu0 %v1272
      %v1274 = vpop.xlane.xlu0 %1273
      %v1275 = vsel %vm1019, %v1271, 0.0
      %1276 = vadd.xlane.f32.xlu0 %v1275
      %v1277 = vpop.xlane.xlu0 %1276
      %v1278 = vrcp.pop %v1274
      %v1279 = vrcp.pop %v1277
      %v1280 = vmul.f32 %v1269, %v1278
      %v1281 = vmul.f32 %v1271, %v1279
      %v1282 = vmul.f32 %v962, %v1214
      %v1283 = vmul.f32 %v965, %v1214
      %v1284 = vpack.c.bf16 %v1283, %v1282
      %v1285 = vpack.c.bf16 %v1281, %v1280
      %v1287 = vsel %vm1019, %v1285, 0
      %1289 = vmatprep.subr.bf16.mxu0 0
      %1290 = vmatpush1.bf16.msra.mxu0 %v1284
      %1291 = vmatprep.subr.bf16.mxu0 0
      %1292 = vmatpush1.bf16.msra.mxu0 0
      %1293 = vmatprep.subr.bf16.mxu0 0
      %1294 = vmatpush1.bf16.msra.mxu0 0
      %1295 = vmatprep.subr.bf16.mxu0 0
      %1296 = vmatpush1.bf16.msra.mxu0 0
      %1297 = vmatprep.subr.bf16.mxu0 0
      %1298 = vmatpush1.bf16.msra.mxu0 0
      %1299 = vmatprep.subr.bf16.mxu0 0
      %1300 = vmatpush1.bf16.msra.mxu0 0
      %1301 = vmatprep.subr.bf16.mxu0 0
      %1302 = vmatpush1.bf16.msra.mxu0 0
      %1303 = vmatprep.subr.bf16.mxu0 0
      %1304 = vmatpush1.bf16.msra.mxu0 0
      %1305 = vmatprep.subr.bf16.mxu0 0
      %1306 = vmatpush1.bf16.msra.mxu0 0
      %1307 = vmatprep.subr.bf16.mxu0 0
      %1308 = vmatpush1.bf16.msra.mxu0 0
      %1309 = vmatprep.subr.bf16.mxu0 0
      %1310 = vmatpush1.bf16.msra.mxu0 0
      %1311 = vmatprep.subr.bf16.mxu0 0
      %1312 = vmatpush1.bf16.msra.mxu0 0
      %1313 = vmatprep.subr.bf16.mxu0 0
      %1314 = vmatpush1.bf16.msra.mxu0 0
      %1315 = vmatprep.subr.bf16.mxu0 0
      %1316 = vmatpush1.bf16.msra.mxu0 0
      %1317 = vmatprep.subr.bf16.mxu0 0
      %1318 = vmatpush1.bf16.msra.mxu0 0
      %1319 = vmatprep.subr.bf16.mxu0 0
      %1320 = vmatpush1.bf16.msra.mxu0 0
      %1321 = vmatprep.mubr.bf16.mxu0 0
      %1322 = vmatmul.mubr.bf16.gmra.mrb[0].mxu0 %v1287
      %v1323 = vpop.f32.mrb[0].mxu0
      %v1324 = vadd.f32 0.0, %v1323
      %v1325 = vpop.f32.mrb[0].mxu0
      %v1326 = vpop.f32.mrb[0].mxu0
      %v1327 = vadd.f32 0.0, %v1326
      %v1328 = vpop.f32.mrb[0].mxu0
      %1329 = vdwg.mxu0
      %v1330 = vadd.f32 %v1204, %v1324
      %v1331 = vadd.f32 %v1207, %v1327
      %vm1332 = vcmp.ge.s32.totalorder %v308, 24
      %vm1333 = vmand %vm1332, %vm309
      %v1334 = vsel %vm1333, 1, 0
      %v1335 = vcvt.s32.f32 %v1334
      %v1336 = vmul.f32 %v1335, 0.35355338
      %v1337 = vmul.f32 %v740, %v1336
      %v1338 = vmul.f32 %v743, %v1336
      %v1339 = vpack.c.bf16 %v1338, %v1337
      %1340 = vmatprep.subr.bf16.mxu0 0
      %1341 = vmatpush1.bf16.xpose.msra.mxu0 %v968
      %1342 = vmatprep.subr.bf16.mxu0 0
      %1343 = vmatpush1.bf16.xpose.msra.mxu0 0
      %1344 = vmatprep.subr.bf16.mxu0 0
      %1345 = vmatpush1.bf16.xpose.msra.mxu0 0
      %1346 = vmatprep.subr.bf16.mxu0 0
      %1347 = vmatpush1.bf16.xpose.msra.mxu0 0
      %1348 = vmatprep.subr.bf16.mxu0 0
      %1349 = vmatpush1.bf16.xpose.msra.mxu0 0
      %1350 = vmatprep.subr.bf16.mxu0 0
      %1351 = vmatpush1.bf16.xpose.msra.mxu0 0
      %1352 = vmatprep.subr.bf16.mxu0 0
      %1353 = vmatpush1.bf16.xpose.msra.mxu0 0
      %1354 = vmatprep.subr.bf16.mxu0 0
      %1355 = vmatpush1.bf16.xpose.msra.mxu0 0
      %1356 = vmatprep.subr.bf16.mxu0 0
      %1357 = vmatpush1.bf16.xpose.msra.mxu0 0
      %1358 = vmatprep.subr.bf16.mxu0 0
      %1359 = vmatpush1.bf16.xpose.msra.mxu0 0
      %1360 = vmatprep.subr.bf16.mxu0 0
      %1361 = vmatpush1.bf16.xpose.msra.mxu0 0
      %1362 = vmatprep.subr.bf16.mxu0 0
      %1363 = vmatpush1.bf16.xpose.msra.mxu0 0
      %1364 = vmatprep.subr.bf16.mxu0 0
      %1365 = vmatpush1.bf16.xpose.msra.mxu0 0
      %1366 = vmatprep.subr.bf16.mxu0 0
      %1367 = vmatpush1.bf16.xpose.msra.mxu0 0
      %1368 = vmatprep.subr.bf16.mxu0 0
      %1369 = vmatpush1.bf16.xpose.msra.mxu0 0
      %1370 = vmatprep.subr.bf16.mxu0 0
      %1371 = vmatpush1.bf16.xpose.msra.mxu0 0
      %1372 = vmatprep.mubr.bf16.mxu0 0
      %1373 = vmatmul.mubr.bf16.gmra.mrb[0].mxu0 %v1339
      %v1374 = vpop.f32.mrb[0].mxu0
      %v1375 = vadd.f32 %v322, %v1374
      %v1376 = vpop.f32.mrb[0].mxu0
      %v1377 = vpop.f32.mrb[0].mxu0
      %v1378 = vadd.f32 %v322, %v1377
      %v1379 = vpop.f32.mrb[0].mxu0
      %1380 = vdwg.mxu0
      %v1381 = vsel %vm1019, %v1375, -inf
      %1382 = vmax.xlane.f32.xlu0 %v1381
      %v1383 = vpop.xlane.xlu0 %1382
      %v1384 = vsel %vm1019, %v1378, -inf
      %1385 = vmax.xlane.f32.xlu0 %v1384
      %v1386 = vpop.xlane.xlu0 %1385
      %v1387 = vsub.f32 %v1375, %v1383
      %v1388 = vsub.f32 %v1378, %v1386
      %v1389 = vmul.f32 %v1387, 1.442695
      %v1390 = vpow.pop %v1389
      %v1391 = vmul.f32 %v1388, 1.442695
      %v1392 = vpow.pop %v1391
      %v1393 = vsel %vm1019, %v1390, 0.0
      %1394 = vadd.xlane.f32.xlu0 %v1393
      %v1395 = vpop.xlane.xlu0 %1394
      %v1396 = vsel %vm1019, %v1392, 0.0
      %1397 = vadd.xlane.f32.xlu0 %v1396
      %v1398 = vpop.xlane.xlu0 %1397
      %v1399 = vrcp.pop %v1395
      %v1400 = vrcp.pop %v1398
      %v1401 = vmul.f32 %v1390, %v1399
      %v1402 = vmul.f32 %v1392, %v1400
      %v1403 = vmul.f32 %v962, %v1335
      %v1404 = vmul.f32 %v965, %v1335
      %v1405 = vpack.c.bf16 %v1404, %v1403
      %v1406 = vpack.c.bf16 %v1402, %v1401
      %v1408 = vsel %vm1019, %v1406, 0
      %1410 = vmatprep.subr.bf16.mxu0 0
      %1411 = vmatpush1.bf16.msra.mxu0 %v1405
      %1412 = vmatprep.subr.bf16.mxu0 0
      %1413 = vmatpush1.bf16.msra.mxu0 0
      %1414 = vmatprep.subr.bf16.mxu0 0
      %1415 = vmatpush1.bf16.msra.mxu0 0
      %1416 = vmatprep.subr.bf16.mxu0 0
      %1417 = vmatpush1.bf16.msra.mxu0 0
      %1418 = vmatprep.subr.bf16.mxu0 0
      %1419 = vmatpush1.bf16.msra.mxu0 0
      %1420 = vmatprep.subr.bf16.mxu0 0
      %1421 = vmatpush1.bf16.msra.mxu0 0
      %1422 = vmatprep.subr.bf16.mxu0 0
      %1423 = vmatpush1.bf16.msra.mxu0 0
      %1424 = vmatprep.subr.bf16.mxu0 0
      %1425 = vmatpush1.bf16.msra.mxu0 0
      %1426 = vmatprep.subr.bf16.mxu0 0
      %1427 = vmatpush1.bf16.msra.mxu0 0
      %1428 = vmatprep.subr.bf16.mxu0 0
      %1429 = vmatpush1.bf16.msra.mxu0 0
      %1430 = vmatprep.subr.bf16.mxu0 0
      %1431 = vmatpush1.bf16.msra.mxu0 0
      %1432 = vmatprep.subr.bf16.mxu0 0
      %1433 = vmatpush1.bf16.msra.mxu0 0
      %1434 = vmatprep.subr.bf16.mxu0 0
      %1435 = vmatpush1.bf16.msra.mxu0 0
      %1436 = vmatprep.subr.bf16.mxu0 0
      %1437 = vmatpush1.bf16.msra.mxu0 0
      %1438 = vmatprep.subr.bf16.mxu0 0
      %1439 = vmatpush1.bf16.msra.mxu0 0
      %1440 = vmatprep.subr.bf16.mxu0 0
      %1441 = vmatpush1.bf16.msra.mxu0 0
      %1442 = vmatprep.mubr.bf16.mxu0 0
      %1443 = vmatmul.mubr.bf16.gmra.mrb[0].mxu0 %v1408
      %v1444 = vpop.f32.mrb[0].mxu0
      %v1445 = vadd.f32 0.0, %v1444
      %v1446 = vpop.f32.mrb[0].mxu0
      %v1447 = vpop.f32.mrb[0].mxu0
      %v1448 = vadd.f32 0.0, %v1447
      %v1449 = vpop.f32.mrb[0].mxu0
      %1450 = vdwg.mxu0
      %v1451 = vadd.f32 %v1330, %v1445
      %v1452 = vadd.f32 %v1331, %v1448
      %s1453 = scalar_lea.vmem %s1, 192
      %v1454 = vld [vmem:[%s1453] sm:$0xf]
      %v1455 = vld [vmem:[%s1453 + $0x4] sm:$0xf]
      %v1456 = vld [vmem:[%s1453 + $0x8] sm:$0xf]
      %v1457 = vld [vmem:[%s1453 + $0xc] sm:$0xf]
      %v1458 = vld [vmem:[%s1453 + $0x10] sm:$0xf]
      %v1459 = vld [vmem:[%s1453 + $0x14] sm:$0xf]
      %v1460 = vld [vmem:[%s1453 + $0x18] sm:$0xf]
      %v1461 = vld [vmem:[%s1453 + $0x1c] sm:$0xf]
      %v1462 = vld [vmem:[%s1453 + $0x20] sm:$0xf]
      %v1463 = vld [vmem:[%s1453 + $0x24] sm:$0xf]
      %v1464 = vld [vmem:[%s1453 + $0x28] sm:$0xf]
      %v1465 = vld [vmem:[%s1453 + $0x2c] sm:$0xf]
      %v1466 = vld [vmem:[%s1453 + $0x30] sm:$0xf]
      %v1467 = vld [vmem:[%s1453 + $0x34] sm:$0xf]
      %v1468 = vld [vmem:[%s1453 + $0x38] sm:$0xf]
      %v1469 = vld [vmem:[%s1453 + $0x3c] sm:$0xf]
      %v1470 = vpack.c.bf16 %v1452, %v1451
      %v1487 = vunpack.c.l.b16 %v1454
      %v1488 = vunpack.c.l.b16 %v1455
      %v1489 = vunpack.c.l.b16 %v1456
      %v1490 = vunpack.c.l.b16 %v1457
      %v1491 = vunpack.c.l.b16 %v1458
      %v1492 = vunpack.c.l.b16 %v1459
      %v1493 = vunpack.c.l.b16 %v1460
      %v1494 = vunpack.c.l.b16 %v1461
      %v1495 = vunpack.c.l.b16 %v1462
      %v1496 = vunpack.c.l.b16 %v1463
      %v1497 = vunpack.c.l.b16 %v1464
      %v1498 = vunpack.c.l.b16 %v1465
      %v1499 = vunpack.c.l.b16 %v1466
      %v1500 = vunpack.c.l.b16 %v1467
      %v1501 = vunpack.c.l.b16 %v1468
      %v1502 = vunpack.c.l.b16 %v1469
      %v1503 = vpack.c.b16 %v1488, %v1487
      %v1504 = vpack.c.b16 %v1490, %v1489
      %v1505 = vpack.c.b16 %v1492, %v1491
      %v1506 = vpack.c.b16 %v1494, %v1493
      %v1507 = vpack.c.b16 %v1496, %v1495
      %v1508 = vpack.c.b16 %v1498, %v1497
      %v1509 = vpack.c.b16 %v1500, %v1499
      %v1510 = vpack.c.b16 %v1502, %v1501
      %1519 = vmatprep.subr.bf16.mxu0 0
      %1520 = vmatpush1.bf16.msra.mxu0 %v1503
      %1521 = vmatprep.subr.bf16.mxu0 0
      %1522 = vmatpush1.bf16.msra.mxu0 %v1504
      %1523 = vmatprep.subr.bf16.mxu0 0
      %1524 = vmatpush1.bf16.msra.mxu0 %v1505
      %1525 = vmatprep.subr.bf16.mxu0 0
      %1526 = vmatpush1.bf16.msra.mxu0 %v1506
      %1527 = vmatprep.subr.bf16.mxu0 0
      %1528 = vmatpush1.bf16.msra.mxu0 %v1507
      %1529 = vmatprep.subr.bf16.mxu0 0
      %1530 = vmatpush1.bf16.msra.mxu0 %v1508
      %1531 = vmatprep.subr.bf16.mxu0 0
      %1532 = vmatpush1.bf16.msra.mxu0 %v1509
      %1533 = vmatprep.subr.bf16.mxu0 0
      %1534 = vmatpush1.bf16.msra.mxu0 %v1510
      %1535 = vmatprep.subr.bf16.mxu0 0
      %1536 = vmatpush1.bf16.msra.mxu0 0
      %1537 = vmatprep.subr.bf16.mxu0 0
      %1538 = vmatpush1.bf16.msra.mxu0 0
      %1539 = vmatprep.subr.bf16.mxu0 0
      %1540 = vmatpush1.bf16.msra.mxu0 0
      %1541 = vmatprep.subr.bf16.mxu0 0
      %1542 = vmatpush1.bf16.msra.mxu0 0
      %1543 = vmatprep.subr.bf16.mxu0 0
      %1544 = vmatpush1.bf16.msra.mxu0 0
      %1545 = vmatprep.subr.bf16.mxu0 0
      %1546 = vmatpush1.bf16.msra.mxu0 0
      %1547 = vmatprep.subr.bf16.mxu0 0
      %1548 = vmatpush1.bf16.msra.mxu0 0
      %1549 = vmatprep.subr.bf16.mxu0 0
      %1550 = vmatpush1.bf16.msra.mxu0 0
      %1551 = vmatprep.mubr.bf16.mxu0 0
      %1552 = vmatmul.mubr.bf16.gmra.mrb[0].mxu0 %v1470
      %v1553 = vpop.f32.mrb[0].mxu0
      %v1554 = vadd.f32 0.0, %v1553
      %v1555 = vpop.f32.mrb[0].mxu0
      %v1556 = vpop.f32.mrb[0].mxu0
      %v1557 = vadd.f32 0.0, %v1556
      %v1558 = vpop.f32.mrb[0].mxu0
      %1559 = vdwg.mxu0
      %v1560 = vadd.f32 %v593, %v1554
      %v1561 = vadd.f32 %v594, %v1557
      %v1562 = vld [vmem:[%s5 + $0x8] sm:$0x1]
      %v1563 = vlaneseq
      %v1564 = vshrl.u32 %v1563, 7
      %v1565 = vsub.s32 0, %v1564
      %v1566 = vrot.slane %v1562, %v1565
      %v1567 = vadd.f32 %v1560, %v1566
      %v1568 = vadd.f32 %v1561, %v1566
      %v1569 = vmul.f32 %v1567, %v311
      %v1570 = vmul.f32 %v1568, %v311
      %1571 = vadd.xlane.f32.xlu0 %v1569
      %v1572 = vpop.xlane.xlu0 %1571
      %1573 = vadd.xlane.f32.xlu0 %v1570
      %v1574 = vpop.xlane.xlu0 %1573
      %v1575 = vmul.f32 %v1572, 0.03125
      %v1576 = vmul.f32 %v1574, 0.03125
      %v1577 = vsub.f32 %v1567, %v1575
      %v1578 = vsub.f32 %v1568, %v1576
      %v1579 = vmul.f32 %v1577, %v311
      %v1580 = vmul.f32 %v1578, %v311
      %v1581 = vmul.f32 %v1579, %v1579
      %v1582 = vmul.f32 %v1580, %v1580
      %1583 = vadd.xlane.f32.xlu0 %v1581
      %v1584 = vpop.xlane.xlu0 %1583
      %1585 = vadd.xlane.f32.xlu0 %v1582
      %v1586 = vpop.xlane.xlu0 %1585
      %v1587 = vmul.f32 %v1584, 0.03125
      %v1588 = vmul.f32 %v1586, 0.03125
      %v1589 = vadd.f32 %v1587, 1e-05
      %v1590 = vadd.f32 %v1588, 1e-05
      %v1591 = vrsqrt.pop %v1589
      %v1592 = vrsqrt.pop %v1590
      %v1593 = vmul.f32 %v1579, %v1591
      %v1594 = vmul.f32 %v1580, %v1592
      %v1595 = vld [vmem:[%s5 + $0x9] sm:$0x1]
      %v1596 = vlaneseq
      %v1597 = vshrl.u32 %v1596, 7
      %v1598 = vsub.s32 0, %v1597
      %v1599 = vrot.slane %v1595, %v1598
      %v1600 = vmul.f32 %v1593, %v1599
      %v1601 = vmul.f32 %v1594, %v1599
      %v1602 = vld [vmem:[%s5 + $0xa] sm:$0x1]
      %v1603 = vlaneseq
      %v1604 = vshrl.u32 %v1603, 7
      %v1605 = vsub.s32 0, %v1604
      %v1606 = vrot.slane %v1602, %v1605
      %v1607 = vadd.f32 %v1600, %v1606
      %v1608 = vadd.f32 %v1601, %v1606
      %s1609 = scalar_lea.vmem %s1, 256
      %v1610 = vld [vmem:[%s1609] sm:$0xf]
      %v1611 = vld [vmem:[%s1609 + $0x4] sm:$0xf]
      %v1612 = vld [vmem:[%s1609 + $0x8] sm:$0xf]
      %v1613 = vld [vmem:[%s1609 + $0xc] sm:$0xf]
      %v1614 = vld [vmem:[%s1609 + $0x10] sm:$0xf]
      %v1615 = vld [vmem:[%s1609 + $0x14] sm:$0xf]
      %v1616 = vld [vmem:[%s1609 + $0x18] sm:$0xf]
      %v1617 = vld [vmem:[%s1609 + $0x1c] sm:$0xf]
      %v1618 = vld [vmem:[%s1609 + $0x20] sm:$0xf]
      %v1619 = vld [vmem:[%s1609 + $0x24] sm:$0xf]
      %v1620 = vld [vmem:[%s1609 + $0x28] sm:$0xf]
      %v1621 = vld [vmem:[%s1609 + $0x2c] sm:$0xf]
      %v1622 = vld [vmem:[%s1609 + $0x30] sm:$0xf]
      %v1623 = vld [vmem:[%s1609 + $0x34] sm:$0xf]
      %v1624 = vld [vmem:[%s1609 + $0x38] sm:$0xf]
      %v1625 = vld [vmem:[%s1609 + $0x3c] sm:$0xf]
      %v1626 = vpack.c.bf16 %v1608, %v1607
      %v1627 = vld [vmem:[%s5 + $0xb] sm:$0x1]
      %v1628 = vlaneseq
      %v1629 = vshrl.u32 %v1628, 7
      %v1630 = vsub.s32 0, %v1629
      %v1631 = vrot.slane %v1627, %v1630
      %v1648 = vunpack.c.l.b16 %v1610
      %v1649 = vunpack.c.l.b16 %v1611
      %v1650 = vunpack.c.l.b16 %v1612
      %v1651 = vunpack.c.l.b16 %v1613
      %v1652 = vunpack.c.l.b16 %v1614
      %v1653 = vunpack.c.l.b16 %v1615
      %v1654 = vunpack.c.l.b16 %v1616
      %v1655 = vunpack.c.l.b16 %v1617
      %v1656 = vunpack.c.l.b16 %v1618
      %v1657 = vunpack.c.l.b16 %v1619
      %v1658 = vunpack.c.l.b16 %v1620
      %v1659 = vunpack.c.l.b16 %v1621
      %v1660 = vunpack.c.l.b16 %v1622
      %v1661 = vunpack.c.l.b16 %v1623
      %v1662 = vunpack.c.l.b16 %v1624
      %v1663 = vunpack.c.l.b16 %v1625
      %v1664 = vpack.c.b16 %v1649, %v1648
      %v1665 = vpack.c.b16 %v1651, %v1650
      %v1666 = vpack.c.b16 %v1653, %v1652
      %v1667 = vpack.c.b16 %v1655, %v1654
      %v1668 = vpack.c.b16 %v1657, %v1656
      %v1669 = vpack.c.b16 %v1659, %v1658
      %v1670 = vpack.c.b16 %v1661, %v1660
      %v1671 = vpack.c.b16 %v1663, %v1662
      %1680 = vmatprep.subr.bf16.mxu0 0
      %1681 = vmatpush1.bf16.msra.mxu0 %v1664
      %1682 = vmatprep.subr.bf16.mxu0 0
      %1683 = vmatpush1.bf16.msra.mxu0 %v1665
      %1684 = vmatprep.subr.bf16.mxu0 0
      %1685 = vmatpush1.bf16.msra.mxu0 %v1666
      %1686 = vmatprep.subr.bf16.mxu0 0
      %1687 = vmatpush1.bf16.msra.mxu0 %v1667
      %1688 = vmatprep.subr.bf16.mxu0 0
      %1689 = vmatpush1.bf16.msra.mxu0 %v1668
      %1690 = vmatprep.subr.bf16.mxu0 0
      %1691 = vmatpush1.bf16.msra.mxu0 %v1669
      %1692 = vmatprep.subr.bf16.mxu0 0
      %1693 = vmatpush1.bf16.msra.mxu0 %v1670
      %1694 = vmatprep.subr.bf16.mxu0 0
      %1695 = vmatpush1.bf16.msra.mxu0 %v1671
      %1696 = vmatprep.subr.bf16.mxu0 0
      %1697 = vmatpush1.bf16.msra.mxu0 0
      %1698 = vmatprep.subr.bf16.mxu0 0
      %1699 = vmatpush1.bf16.msra.mxu0 0
      %1700 = vmatprep.subr.bf16.mxu0 0
      %1701 = vmatpush1.bf16.msra.mxu0 0
      %1702 = vmatprep.subr.bf16.mxu0 0
      %1703 = vmatpush1.bf16.msra.mxu0 0
      %1704 = vmatprep.subr.bf16.mxu0 0
      %1705 = vmatpush1.bf16.msra.mxu0 0
      %1706 = vmatprep.subr.bf16.mxu0 0
      %1707 = vmatpush1.bf16.msra.mxu0 0
      %1708 = vmatprep.subr.bf16.mxu0 0
      %1709 = vmatpush1.bf16.msra.mxu0 0
      %1710 = vmatprep.subr.bf16.mxu0 0
      %1711 = vmatpush1.bf16.msra.mxu0 0
      %1712 = vmatprep.mubr.bf16.mxu0 0
      %1713 = vmatmul.mubr.bf16.gmra.mrb[0].mxu0 %v1626
      %v1714 = vpop.f32.mrb[0].mxu0
      %v1715 = vadd.f32 %v1631, %v1714
      %v1716 = vpop.f32.mrb[0].mxu0
      %v1717 = vpop.f32.mrb[0].mxu0
      %v1718 = vadd.f32 %v1631, %v1717
      %v1719 = vpop.f32.mrb[0].mxu0
      %1720 = vdwg.mxu0
      %s1721 = scalar_lea.vmem %s1, 320
      %v1722 = vld [vmem:[%s1721] sm:$0xf]
      %v1723 = vld [vmem:[%s1721 + $0x4] sm:$0xf]
      %v1724 = vld [vmem:[%s1721 + $0x8] sm:$0xf]
      %v1725 = vld [vmem:[%s1721 + $0xc] sm:$0xf]
      %v1726 = vld [vmem:[%s1721 + $0x10] sm:$0xf]
      %v1727 = vld [vmem:[%s1721 + $0x14] sm:$0xf]
      %v1728 = vld [vmem:[%s1721 + $0x18] sm:$0xf]
      %v1729 = vld [vmem:[%s1721 + $0x1c] sm:$0xf]
      %v1730 = vld [vmem:[%s1721 + $0x20] sm:$0xf]
      %v1731 = vld [vmem:[%s1721 + $0x24] sm:$0xf]
      %v1732 = vld [vmem:[%s1721 + $0x28] sm:$0xf]
      %v1733 = vld [vmem:[%s1721 + $0x2c] sm:$0xf]
      %v1734 = vld [vmem:[%s1721 + $0x30] sm:$0xf]
      %v1735 = vld [vmem:[%s1721 + $0x34] sm:$0xf]
      %v1736 = vld [vmem:[%s1721 + $0x38] sm:$0xf]
      %v1737 = vld [vmem:[%s1721 + $0x3c] sm:$0xf]
      %v1738 = vld [vmem:[%s5 + $0xc] sm:$0x1]
      %v1739 = vlaneseq
      %v1740 = vshrl.u32 %v1739, 7
      %v1741 = vsub.s32 0, %v1740
      %v1742 = vrot.slane %v1738, %v1741
      %v1759 = vunpack.c.l.b16 %v1722
      %v1760 = vunpack.c.l.b16 %v1723
      %v1761 = vunpack.c.l.b16 %v1724
      %v1762 = vunpack.c.l.b16 %v1725
      %v1763 = vunpack.c.l.b16 %v1726
      %v1764 = vunpack.c.l.b16 %v1727
      %v1765 = vunpack.c.l.b16 %v1728
      %v1766 = vunpack.c.l.b16 %v1729
      %v1767 = vunpack.c.l.b16 %v1730
      %v1768 = vunpack.c.l.b16 %v1731
      %v1769 = vunpack.c.l.b16 %v1732
      %v1770 = vunpack.c.l.b16 %v1733
      %v1771 = vunpack.c.l.b16 %v1734
      %v1772 = vunpack.c.l.b16 %v1735
      %v1773 = vunpack.c.l.b16 %v1736
      %v1774 = vunpack.c.l.b16 %v1737
      %v1775 = vpack.c.b16 %v1760, %v1759
      %v1776 = vpack.c.b16 %v1762, %v1761
      %v1777 = vpack.c.b16 %v1764, %v1763
      %v1778 = vpack.c.b16 %v1766, %v1765
      %v1779 = vpack.c.b16 %v1768, %v1767
      %v1780 = vpack.c.b16 %v1770, %v1769
      %v1781 = vpack.c.b16 %v1772, %v1771
      %v1782 = vpack.c.b16 %v1774, %v1773
      %1791 = vmatprep.subr.bf16.mxu0 0
      %1792 = vmatpush1.bf16.msra.mxu0 %v1775
      %1793 = vmatprep.subr.bf16.mxu0 0
      %1794 = vmatpush1.bf16.msra.mxu0 %v1776
      %1795 = vmatprep.subr.bf16.mxu0 0
      %1796 = vmatpush1.bf16.msra.mxu0 %v1777
      %1797 = vmatprep.subr.bf16.mxu0 0
      %1798 = vmatpush1.bf16.msra.mxu0 %v1778
      %1799 = vmatprep.subr.bf16.mxu0 0
      %1800 = vmatpush1.bf16.msra.mxu0 %v1779
      %1801 = vmatprep.subr.bf16.mxu0 0
      %1802 = vmatpush1.bf16.msra.mxu0 %v1780
      %1803 = vmatprep.subr.bf16.mxu0 0
      %1804 = vmatpush1.bf16.msra.mxu0 %v1781
      %1805 = vmatprep.subr.bf16.mxu0 0
      %1806 = vmatpush1.bf16.msra.mxu0 %v1782
      %1807 = vmatprep.subr.bf16.mxu0 0
      %1808 = vmatpush1.bf16.msra.mxu0 0
      %1809 = vmatprep.subr.bf16.mxu0 0
      %1810 = vmatpush1.bf16.msra.mxu0 0
      %1811 = vmatprep.subr.bf16.mxu0 0
      %1812 = vmatpush1.bf16.msra.mxu0 0
      %1813 = vmatprep.subr.bf16.mxu0 0
      %1814 = vmatpush1.bf16.msra.mxu0 0
      %1815 = vmatprep.subr.bf16.mxu0 0
      %1816 = vmatpush1.bf16.msra.mxu0 0
      %1817 = vmatprep.subr.bf16.mxu0 0
      %1818 = vmatpush1.bf16.msra.mxu0 0
      %1819 = vmatprep.subr.bf16.mxu0 0
      %1820 = vmatpush1.bf16.msra.mxu0 0
      %1821 = vmatprep.subr.bf16.mxu0 0
      %1822 = vmatpush1.bf16.msra.mxu0 0
      %1823 = vmatprep.mubr.bf16.mxu0 0
      %1824 = vmatmul.mubr.bf16.gmra.mrb[0].mxu0 %v1626
      %v1825 = vpop.f32.mrb[0].mxu0
      %v1826 = vadd.f32 %v1742, %v1825
      %v1827 = vpop.f32.mrb[0].mxu0
      %v1828 = vpop.f32.mrb[0].mxu0
      %v1829 = vadd.f32 %v1742, %v1828
      %v1830 = vpop.f32.mrb[0].mxu0
      %1831 = vdwg.mxu0
      %v1832 = vxor.u32 %v1826, 2147483648
      %v1833 = vxor.u32 %v1829, 2147483648
      %v1834 = vmul.f32 %v1832, 1.442695
      %v1835 = vpow.pop %v1834
      %v1836 = vmul.f32 %v1833, 1.442695
      %v1837 = vpow.pop %v1836
      %v1838 = vadd.f32 %v1835, 1.0
      %v1839 = vadd.f32 %v1837, 1.0
      %v1840 = vrcp.pop %v1838
      %v1841 = vmul.f32 1.0, %v1840
      %v1842 = vrcp.pop %v1839
      %v1843 = vmul.f32 1.0, %v1842
      %v1844 = vmul.f32 %v1715, %v1841
      %v1845 = vmul.f32 %v1718, %v1843
      %v1846 = vmul.f32 %v1844, %v319
      %v1847 = vmul.f32 %v1845, %v320
      %v1848 = vpack.c.bf16 %v1847, %v1846
      %v1849 = vld [vmem:[%s7] sm:$0xf]
      %v1850 = vld [vmem:[%s7 + $0x4] sm:$0xf]
      %v1853 = vunpack.c.l.b16 %v1849
      %v1854 = vunpack.c.l.b16 %v1850
      %v1855 = vpack.c.b16 %v1854, %v1853
      %v1857 = vsel %vm1019, %v1855, 0
      %1859 = vmatprep.subr.bf16.mxu0 0
      %1860 = vmatpush1.bf16.msra.mxu0 %v1848
      %1861 = vmatprep.subr.bf16.mxu0 0
      %1862 = vmatpush1.bf16.msra.mxu0 0
      %1863 = vmatprep.subr.bf16.mxu0 0
      %1864 = vmatpush1.bf16.msra.mxu0 0
      %1865 = vmatprep.subr.bf16.mxu0 0
      %1866 = vmatpush1.bf16.msra.mxu0 0
      %1867 = vmatprep.subr.bf16.mxu0 0
      %1868 = vmatpush1.bf16.msra.mxu0 0
      %1869 = vmatprep.subr.bf16.mxu0 0
      %1870 = vmatpush1.bf16.msra.mxu0 0
      %1871 = vmatprep.subr.bf16.mxu0 0
      %1872 = vmatpush1.bf16.msra.mxu0 0
      %1873 = vmatprep.subr.bf16.mxu0 0
      %1874 = vmatpush1.bf16.msra.mxu0 0
      %1875 = vmatprep.subr.bf16.mxu0 0
      %1876 = vmatpush1.bf16.msra.mxu0 0
      %1877 = vmatprep.subr.bf16.mxu0 0
      %1878 = vmatpush1.bf16.msra.mxu0 0
      %1879 = vmatprep.subr.bf16.mxu0 0
      %1880 = vmatpush1.bf16.msra.mxu0 0
      %1881 = vmatprep.subr.bf16.mxu0 0
      %1882 = vmatpush1.bf16.msra.mxu0 0
      %1883 = vmatprep.subr.bf16.mxu0 0
      %1884 = vmatpush1.bf16.msra.mxu0 0
      %1885 = vmatprep.subr.bf16.mxu0 0
      %1886 = vmatpush1.bf16.msra.mxu0 0
      %1887 = vmatprep.subr.bf16.mxu0 0
      %1888 = vmatpush1.bf16.msra.mxu0 0
      %1889 = vmatprep.subr.bf16.mxu0 0
      %1890 = vmatpush1.bf16.msra.mxu0 0
      %1891 = vmatprep.mubr.bf16.mxu0 0
      %1892 = vmatmul.mubr.bf16.gmra.mrb[0].mxu0 %v1857
      %v1893 = vpop.f32.mrb[0].mxu0
      %v1894 = vadd.f32 0.0, %v1893
      %v1895 = vpop.f32.mrb[0].mxu0
      %v1896 = vpop.f32.mrb[0].mxu0
      %v1897 = vadd.f32 0.0, %v1896
      %v1898 = vpop.f32.mrb[0].mxu0
      %1899 = vdwg.mxu0
      %v1900 = vld [vmem:[%s4] sm:$0x1]
      %v1901 = vlaneseq
      %v1902 = vshrl.u32 %v1901, 7
      %v1903 = vsub.s32 0, %v1902
      %v1904 = vrot.slane %v1900, %v1903
      %v1905 = vmul.f32 %v1894, %v1904
      %v1906 = vmul.f32 %v1897, %v1904
      %v1907 = vadd.f32 %v1905, 0.0
      %v1908 = vadd.f32 %v1906, 0.0
      %s1909 = scalar_lea.vmem %s7, 8
      %v1910 = vld [vmem:[%s1909] sm:$0xf]
      %v1911 = vld [vmem:[%s1909 + $0x4] sm:$0xf]
      %v1914 = vunpack.c.l.b16 %v1910
      %v1915 = vunpack.c.l.b16 %v1911
      %v1916 = vpack.c.b16 %v1915, %v1914
      %v1918 = vsel %vm1019, %v1916, 0
      %1920 = vmatprep.subr.bf16.mxu0 0
      %1921 = vmatpush1.bf16.msra.mxu0 %v1848
      %1922 = vmatprep.subr.bf16.mxu0 0
      %1923 = vmatpush1.bf16.msra.mxu0 0
      %1924 = vmatprep.subr.bf16.mxu0 0
      %1925 = vmatpush1.bf16.msra.mxu0 0
      %1926 = vmatprep.subr.bf16.mxu0 0
      %1927 = vmatpush1.bf16.msra.mxu0 0
      %1928 = vmatprep.subr.bf16.mxu0 0
      %1929 = vmatpush1.bf16.msra.mxu0 0
      %1930 = vmatprep.subr.bf16.mxu0 0
      %1931 = vmatpush1.bf16.msra.mxu0 0
      %1932 = vmatprep.subr.bf16.mxu0 0
      %1933 = vmatpush1.bf16.msra.mxu0 0
      %1934 = vmatprep.subr.bf16.mxu0 0
      %1935 = vmatpush1.bf16.msra.mxu0 0
      %1936 = vmatprep.subr.bf16.mxu0 0
      %1937 = vmatpush1.bf16.msra.mxu0 0
      %1938 = vmatprep.subr.bf16.mxu0 0
      %1939 = vmatpush1.bf16.msra.mxu0 0
      %1940 = vmatprep.subr.bf16.mxu0 0
      %1941 = vmatpush1.bf16.msra.mxu0 0
      %1942 = vmatprep.subr.bf16.mxu0 0
      %1943 = vmatpush1.bf16.msra.mxu0 0
      %1944 = vmatprep.subr.bf16.mxu0 0
      %1945 = vmatpush1.bf16.msra.mxu0 0
      %1946 = vmatprep.subr.bf16.mxu0 0
      %1947 = vmatpush1.bf16.msra.mxu0 0
      %1948 = vmatprep.subr.bf16.mxu0 0
      %1949 = vmatpush1.bf16.msra.mxu0 0
      %1950 = vmatprep.subr.bf16.mxu0 0
      %1951 = vmatpush1.bf16.msra.mxu0 0
      %1952 = vmatprep.mubr.bf16.mxu0 0
      %1953 = vmatmul.mubr.bf16.gmra.mrb[0].mxu0 %v1918
      %v1954 = vpop.f32.mrb[0].mxu0
      %v1955 = vadd.f32 0.0, %v1954
      %v1956 = vpop.f32.mrb[0].mxu0
      %v1957 = vpop.f32.mrb[0].mxu0
      %v1958 = vadd.f32 0.0, %v1957
      %v1959 = vpop.f32.mrb[0].mxu0
      %1960 = vdwg.mxu0
      %v1961 = vld [vmem:[%s4 + $0x1] sm:$0x1]
      %v1962 = vlaneseq
      %v1963 = vshrl.u32 %v1962, 7
      %v1964 = vsub.s32 0, %v1963
      %v1965 = vrot.slane %v1961, %v1964
      %v1966 = vmul.f32 %v1955, %v1965
      %v1967 = vmul.f32 %v1958, %v1965
      %v1968 = vadd.f32 %v1907, %v1966
      %v1969 = vadd.f32 %v1908, %v1967
      %s1970 = scalar_lea.vmem %s7, 16
      %v1971 = vld [vmem:[%s1970] sm:$0xf]
      %v1972 = vld [vmem:[%s1970 + $0x4] sm:$0xf]
      %v1975 = vunpack.c.l.b16 %v1971
      %v1976 = vunpack.c.l.b16 %v1972
      %v1977 = vpack.c.b16 %v1976, %v1975
      %v1979 = vsel %vm1019, %v1977, 0
      %1981 = vmatprep.subr.bf16.mxu0 0
      %1982 = vmatpush1.bf16.msra.mxu0 %v1848
      %1983 = vmatprep.subr.bf16.mxu0 0
      %1984 = vmatpush1.bf16.msra.mxu0 0
      %1985 = vmatprep.subr.bf16.mxu0 0
      %1986 = vmatpush1.bf16.msra.mxu0 0
      %1987 = vmatprep.subr.bf16.mxu0 0
      %1988 = vmatpush1.bf16.msra.mxu0 0
      %1989 = vmatprep.subr.bf16.mxu0 0
      %1990 = vmatpush1.bf16.msra.mxu0 0
      %1991 = vmatprep.subr.bf16.mxu0 0
      %1992 = vmatpush1.bf16.msra.mxu0 0
      %1993 = vmatprep.subr.bf16.mxu0 0
      %1994 = vmatpush1.bf16.msra.mxu0 0
      %1995 = vmatprep.subr.bf16.mxu0 0
      %1996 = vmatpush1.bf16.msra.mxu0 0
      %1997 = vmatprep.subr.bf16.mxu0 0
      %1998 = vmatpush1.bf16.msra.mxu0 0
      %1999 = vmatprep.subr.bf16.mxu0 0
      %2000 = vmatpush1.bf16.msra.mxu0 0
      %2001 = vmatprep.subr.bf16.mxu0 0
      %2002 = vmatpush1.bf16.msra.mxu0 0
      %2003 = vmatprep.subr.bf16.mxu0 0
      %2004 = vmatpush1.bf16.msra.mxu0 0
      %2005 = vmatprep.subr.bf16.mxu0 0
      %2006 = vmatpush1.bf16.msra.mxu0 0
      %2007 = vmatprep.subr.bf16.mxu0 0
      %2008 = vmatpush1.bf16.msra.mxu0 0
      %2009 = vmatprep.subr.bf16.mxu0 0
      %2010 = vmatpush1.bf16.msra.mxu0 0
      %2011 = vmatprep.subr.bf16.mxu0 0
      %2012 = vmatpush1.bf16.msra.mxu0 0
      %2013 = vmatprep.mubr.bf16.mxu0 0
      %2014 = vmatmul.mubr.bf16.gmra.mrb[0].mxu0 %v1979
      %v2015 = vpop.f32.mrb[0].mxu0
      %v2016 = vadd.f32 0.0, %v2015
      %v2017 = vpop.f32.mrb[0].mxu0
      %v2018 = vpop.f32.mrb[0].mxu0
      %v2019 = vadd.f32 0.0, %v2018
      %v2020 = vpop.f32.mrb[0].mxu0
      %2021 = vdwg.mxu0
      %v2022 = vld [vmem:[%s4 + $0x2] sm:$0x1]
      %v2023 = vlaneseq
      %v2024 = vshrl.u32 %v2023, 7
      %v2025 = vsub.s32 0, %v2024
      %v2026 = vrot.slane %v2022, %v2025
      %v2027 = vmul.f32 %v2016, %v2026
      %v2028 = vmul.f32 %v2019, %v2026
      %v2029 = vadd.f32 %v1968, %v2027
      %v2030 = vadd.f32 %v1969, %v2028
      %s2031 = scalar_lea.vmem %s7, 24
      %v2032 = vld [vmem:[%s2031] sm:$0xf]
      %v2033 = vld [vmem:[%s2031 + $0x4] sm:$0xf]
      %v2036 = vunpack.c.l.b16 %v2032
      %v2037 = vunpack.c.l.b16 %v2033
      %v2038 = vpack.c.b16 %v2037, %v2036
      %v2040 = vsel %vm1019, %v2038, 0
      %2042 = vmatprep.subr.bf16.mxu0 0
      %2043 = vmatpush1.bf16.msra.mxu0 %v1848
      %2044 = vmatprep.subr.bf16.mxu0 0
      %2045 = vmatpush1.bf16.msra.mxu0 0
      %2046 = vmatprep.subr.bf16.mxu0 0
      %2047 = vmatpush1.bf16.msra.mxu0 0
      %2048 = vmatprep.subr.bf16.mxu0 0
      %2049 = vmatpush1.bf16.msra.mxu0 0
      %2050 = vmatprep.subr.bf16.mxu0 0
      %2051 = vmatpush1.bf16.msra.mxu0 0
      %2052 = vmatprep.subr.bf16.mxu0 0
      %2053 = vmatpush1.bf16.msra.mxu0 0
      %2054 = vmatprep.subr.bf16.mxu0 0
      %2055 = vmatpush1.bf16.msra.mxu0 0
      %2056 = vmatprep.subr.bf16.mxu0 0
      %2057 = vmatpush1.bf16.msra.mxu0 0
      %2058 = vmatprep.subr.bf16.mxu0 0
      %2059 = vmatpush1.bf16.msra.mxu0 0
      %2060 = vmatprep.subr.bf16.mxu0 0
      %2061 = vmatpush1.bf16.msra.mxu0 0
      %2062 = vmatprep.subr.bf16.mxu0 0
      %2063 = vmatpush1.bf16.msra.mxu0 0
      %2064 = vmatprep.subr.bf16.mxu0 0
      %2065 = vmatpush1.bf16.msra.mxu0 0
      %2066 = vmatprep.subr.bf16.mxu0 0
      %2067 = vmatpush1.bf16.msra.mxu0 0
      %2068 = vmatprep.subr.bf16.mxu0 0
      %2069 = vmatpush1.bf16.msra.mxu0 0
      %2070 = vmatprep.subr.bf16.mxu0 0
      %2071 = vmatpush1.bf16.msra.mxu0 0
      %2072 = vmatprep.subr.bf16.mxu0 0
      %2073 = vmatpush1.bf16.msra.mxu0 0
      %2074 = vmatprep.mubr.bf16.mxu0 0
      %2075 = vmatmul.mubr.bf16.gmra.mrb[0].mxu0 %v2040
      %v2076 = vpop.f32.mrb[0].mxu0
      %v2077 = vadd.f32 0.0, %v2076
      %v2078 = vpop.f32.mrb[0].mxu0
      %v2079 = vpop.f32.mrb[0].mxu0
      %v2080 = vadd.f32 0.0, %v2079
      %v2081 = vpop.f32.mrb[0].mxu0
      %2082 = vdwg.mxu0
      %v2083 = vld [vmem:[%s4 + $0x3] sm:$0x1]
      %v2084 = vlaneseq
      %v2085 = vshrl.u32 %v2084, 7
      %v2086 = vsub.s32 0, %v2085
      %v2087 = vrot.slane %v2083, %v2086
      %v2088 = vmul.f32 %v2077, %v2087
      %v2089 = vmul.f32 %v2080, %v2087
      %v2090 = vadd.f32 %v2029, %v2088
      %v2091 = vadd.f32 %v2030, %v2089
      %s2092 = scalar_lea.vmem %s7, 32
      %v2093 = vld [vmem:[%s2092] sm:$0xf]
      %v2094 = vld [vmem:[%s2092 + $0x4] sm:$0xf]
      %v2097 = vunpack.c.l.b16 %v2093
      %v2098 = vunpack.c.l.b16 %v2094
      %v2099 = vpack.c.b16 %v2098, %v2097
      %v2101 = vsel %vm1019, %v2099, 0
      %2103 = vmatprep.subr.bf16.mxu0 0
      %2104 = vmatpush1.bf16.msra.mxu0 %v1848
      %2105 = vmatprep.subr.bf16.mxu0 0
      %2106 = vmatpush1.bf16.msra.mxu0 0
      %2107 = vmatprep.subr.bf16.mxu0 0
      %2108 = vmatpush1.bf16.msra.mxu0 0
      %2109 = vmatprep.subr.bf16.mxu0 0
      %2110 = vmatpush1.bf16.msra.mxu0 0
      %2111 = vmatprep.subr.bf16.mxu0 0
      %2112 = vmatpush1.bf16.msra.mxu0 0
      %2113 = vmatprep.subr.bf16.mxu0 0
      %2114 = vmatpush1.bf16.msra.mxu0 0
      %2115 = vmatprep.subr.bf16.mxu0 0
      %2116 = vmatpush1.bf16.msra.mxu0 0
      %2117 = vmatprep.subr.bf16.mxu0 0
      %2118 = vmatpush1.bf16.msra.mxu0 0
      %2119 = vmatprep.subr.bf16.mxu0 0
      %2120 = vmatpush1.bf16.msra.mxu0 0
      %2121 = vmatprep.subr.bf16.mxu0 0
      %2122 = vmatpush1.bf16.msra.mxu0 0
      %2123 = vmatprep.subr.bf16.mxu0 0
      %2124 = vmatpush1.bf16.msra.mxu0 0
      %2125 = vmatprep.subr.bf16.mxu0 0
      %2126 = vmatpush1.bf16.msra.mxu0 0
      %2127 = vmatprep.subr.bf16.mxu0 0
      %2128 = vmatpush1.bf16.msra.mxu0 0
      %2129 = vmatprep.subr.bf16.mxu0 0
      %2130 = vmatpush1.bf16.msra.mxu0 0
      %2131 = vmatprep.subr.bf16.mxu0 0
      %2132 = vmatpush1.bf16.msra.mxu0 0
      %2133 = vmatprep.subr.bf16.mxu0 0
      %2134 = vmatpush1.bf16.msra.mxu0 0
      %2135 = vmatprep.mubr.bf16.mxu0 0
      %2136 = vmatmul.mubr.bf16.gmra.mrb[0].mxu0 %v2101
      %v2137 = vpop.f32.mrb[0].mxu0
      %v2138 = vadd.f32 0.0, %v2137
      %v2139 = vpop.f32.mrb[0].mxu0
      %v2140 = vpop.f32.mrb[0].mxu0
      %v2141 = vadd.f32 0.0, %v2140
      %v2142 = vpop.f32.mrb[0].mxu0
      %2143 = vdwg.mxu0
      %v2144 = vld [vmem:[%s4 + $0x4] sm:$0x1]
      %v2145 = vlaneseq
      %v2146 = vshrl.u32 %v2145, 7
      %v2147 = vsub.s32 0, %v2146
      %v2148 = vrot.slane %v2144, %v2147
      %v2149 = vmul.f32 %v2138, %v2148
      %v2150 = vmul.f32 %v2141, %v2148
      %v2151 = vadd.f32 %v2090, %v2149
      %v2152 = vadd.f32 %v2091, %v2150
      %s2153 = scalar_lea.vmem %s7, 40
      %v2154 = vld [vmem:[%s2153] sm:$0xf]
      %v2155 = vld [vmem:[%s2153 + $0x4] sm:$0xf]
      %v2158 = vunpack.c.l.b16 %v2154
      %v2159 = vunpack.c.l.b16 %v2155
      %v2160 = vpack.c.b16 %v2159, %v2158
      %v2162 = vsel %vm1019, %v2160, 0
      %2164 = vmatprep.subr.bf16.mxu0 0
      %2165 = vmatpush1.bf16.msra.mxu0 %v1848
      %2166 = vmatprep.subr.bf16.mxu0 0
      %2167 = vmatpush1.bf16.msra.mxu0 0
      %2168 = vmatprep.subr.bf16.mxu0 0
      %2169 = vmatpush1.bf16.msra.mxu0 0
      %2170 = vmatprep.subr.bf16.mxu0 0
      %2171 = vmatpush1.bf16.msra.mxu0 0
      %2172 = vmatprep.subr.bf16.mxu0 0
      %2173 = vmatpush1.bf16.msra.mxu0 0
      %2174 = vmatprep.subr.bf16.mxu0 0
      %2175 = vmatpush1.bf16.msra.mxu0 0
      %2176 = vmatprep.subr.bf16.mxu0 0
      %2177 = vmatpush1.bf16.msra.mxu0 0
      %2178 = vmatprep.subr.bf16.mxu0 0
      %2179 = vmatpush1.bf16.msra.mxu0 0
      %2180 = vmatprep.subr.bf16.mxu0 0
      %2181 = vmatpush1.bf16.msra.mxu0 0
      %2182 = vmatprep.subr.bf16.mxu0 0
      %2183 = vmatpush1.bf16.msra.mxu0 0
      %2184 = vmatprep.subr.bf16.mxu0 0
      %2185 = vmatpush1.bf16.msra.mxu0 0
      %2186 = vmatprep.subr.bf16.mxu0 0
      %2187 = vmatpush1.bf16.msra.mxu0 0
      %2188 = vmatprep.subr.bf16.mxu0 0
      %2189 = vmatpush1.bf16.msra.mxu0 0
      %2190 = vmatprep.subr.bf16.mxu0 0
      %2191 = vmatpush1.bf16.msra.mxu0 0
      %2192 = vmatprep.subr.bf16.mxu0 0
      %2193 = vmatpush1.bf16.msra.mxu0 0
      %2194 = vmatprep.subr.bf16.mxu0 0
      %2195 = vmatpush1.bf16.msra.mxu0 0
      %2196 = vmatprep.mubr.bf16.mxu0 0
      %2197 = vmatmul.mubr.bf16.gmra.mrb[0].mxu0 %v2162
      %v2198 = vpop.f32.mrb[0].mxu0
      %v2199 = vadd.f32 0.0, %v2198
      %v2200 = vpop.f32.mrb[0].mxu0
      %v2201 = vpop.f32.mrb[0].mxu0
      %v2202 = vadd.f32 0.0, %v2201
      %v2203 = vpop.f32.mrb[0].mxu0
      %2204 = vdwg.mxu0
      %v2205 = vld [vmem:[%s4 + $0x5] sm:$0x1]
      %v2206 = vlaneseq
      %v2207 = vshrl.u32 %v2206, 7
      %v2208 = vsub.s32 0, %v2207
      %v2209 = vrot.slane %v2205, %v2208
      %v2210 = vmul.f32 %v2199, %v2209
      %v2211 = vmul.f32 %v2202, %v2209
      %v2212 = vadd.f32 %v2151, %v2210
      %v2213 = vadd.f32 %v2152, %v2211
      %s2214 = scalar_lea.vmem %s7, 48
      %v2215 = vld [vmem:[%s2214] sm:$0xf]
      %v2216 = vld [vmem:[%s2214 + $0x4] sm:$0xf]
      %v2219 = vunpack.c.l.b16 %v2215
      %v2220 = vunpack.c.l.b16 %v2216
      %v2221 = vpack.c.b16 %v2220, %v2219
      %v2223 = vsel %vm1019, %v2221, 0
      %2225 = vmatprep.subr.bf16.mxu0 0
      %2226 = vmatpush1.bf16.msra.mxu0 %v1848
      %2227 = vmatprep.subr.bf16.mxu0 0
      %2228 = vmatpush1.bf16.msra.mxu0 0
      %2229 = vmatprep.subr.bf16.mxu0 0
      %2230 = vmatpush1.bf16.msra.mxu0 0
      %2231 = vmatprep.subr.bf16.mxu0 0
      %2232 = vmatpush1.bf16.msra.mxu0 0
      %2233 = vmatprep.subr.bf16.mxu0 0
      %2234 = vmatpush1.bf16.msra.mxu0 0
      %2235 = vmatprep.subr.bf16.mxu0 0
      %2236 = vmatpush1.bf16.msra.mxu0 0
      %2237 = vmatprep.subr.bf16.mxu0 0
      %2238 = vmatpush1.bf16.msra.mxu0 0
      %2239 = vmatprep.subr.bf16.mxu0 0
      %2240 = vmatpush1.bf16.msra.mxu0 0
      %2241 = vmatprep.subr.bf16.mxu0 0
      %2242 = vmatpush1.bf16.msra.mxu0 0
      %2243 = vmatprep.subr.bf16.mxu0 0
      %2244 = vmatpush1.bf16.msra.mxu0 0
      %2245 = vmatprep.subr.bf16.mxu0 0
      %2246 = vmatpush1.bf16.msra.mxu0 0
      %2247 = vmatprep.subr.bf16.mxu0 0
      %2248 = vmatpush1.bf16.msra.mxu0 0
      %2249 = vmatprep.subr.bf16.mxu0 0
      %2250 = vmatpush1.bf16.msra.mxu0 0
      %2251 = vmatprep.subr.bf16.mxu0 0
      %2252 = vmatpush1.bf16.msra.mxu0 0
      %2253 = vmatprep.subr.bf16.mxu0 0
      %2254 = vmatpush1.bf16.msra.mxu0 0
      %2255 = vmatprep.subr.bf16.mxu0 0
      %2256 = vmatpush1.bf16.msra.mxu0 0
      %2257 = vmatprep.mubr.bf16.mxu0 0
      %2258 = vmatmul.mubr.bf16.gmra.mrb[0].mxu0 %v2223
      %v2259 = vpop.f32.mrb[0].mxu0
      %v2260 = vadd.f32 0.0, %v2259
      %v2261 = vpop.f32.mrb[0].mxu0
      %v2262 = vpop.f32.mrb[0].mxu0
      %v2263 = vadd.f32 0.0, %v2262
      %v2264 = vpop.f32.mrb[0].mxu0
      %2265 = vdwg.mxu0
      %v2266 = vld [vmem:[%s4 + $0x6] sm:$0x1]
      %v2267 = vlaneseq
      %v2268 = vshrl.u32 %v2267, 7
      %v2269 = vsub.s32 0, %v2268
      %v2270 = vrot.slane %v2266, %v2269
      %v2271 = vmul.f32 %v2260, %v2270
      %v2272 = vmul.f32 %v2263, %v2270
      %v2273 = vadd.f32 %v2212, %v2271
      %v2274 = vadd.f32 %v2213, %v2272
      %v2275 = vld [vmem:[%s5 + $0xd] sm:$0x1]
      %v2276 = vlaneseq
      %v2277 = vshrl.u32 %v2276, 7
      %v2278 = vsub.s32 0, %v2277
      %v2279 = vrot.slane %v2275, %v2278
      %v2280 = vadd.f32 %v2273, %v2279
      %v2281 = vadd.f32 %v2274, %v2279
      %v2282 = vld [vmem:[%s5 + $0xe] sm:$0x1]
      %v2283 = vlaneseq
      %v2284 = vshrl.u32 %v2283, 7
      %v2285 = vsub.s32 0, %v2284
      %v2286 = vrot.slane %v2282, %v2285
      %v2287 = vmul.f32 %v2280, %v2286
      %v2288 = vmul.f32 %v2281, %v2286
      %v2289 = vld [vmem:[%s5 + $0xf] sm:$0x1]
      %v2290 = vlaneseq
      %v2291 = vshrl.u32 %v2290, 7
      %v2292 = vsub.s32 0, %v2291
      %v2293 = vrot.slane %v2289, %v2292
      %v2294 = vadd.f32 %v2287, %v2293
      %v2295 = vadd.f32 %v2288, %v2293
      %v2296 = vxor.u32 %v2294, 2147483648
      %v2297 = vxor.u32 %v2295, 2147483648
      %v2298 = vmul.f32 %v2296, 1.442695
      %v2299 = vpow.pop %v2298
      %v2300 = vmul.f32 %v2297, 1.442695
      %v2301 = vpow.pop %v2300
      %v2302 = vadd.f32 %v2299, 1.0
      %v2303 = vadd.f32 %v2301, 1.0
      %v2304 = vrcp.pop %v2302
      %v2305 = vmul.f32 1.0, %v2304
      %v2306 = vrcp.pop %v2303
      %v2307 = vmul.f32 1.0, %v2306
      %v2308 = vmul.f32 %v2294, %v2305
      %v2309 = vmul.f32 %v2295, %v2307
      %s2310 = scalar_lea.vmem %s1, 384
      %v2311 = vld [vmem:[%s2310] sm:$0xf]
      %v2312 = vld [vmem:[%s2310 + $0x4] sm:$0xf]
      %v2313 = vld [vmem:[%s2310 + $0x8] sm:$0xf]
      %v2314 = vld [vmem:[%s2310 + $0xc] sm:$0xf]
      %v2315 = vld [vmem:[%s2310 + $0x10] sm:$0xf]
      %v2316 = vld [vmem:[%s2310 + $0x14] sm:$0xf]
      %v2317 = vld [vmem:[%s2310 + $0x18] sm:$0xf]
      %v2318 = vld [vmem:[%s2310 + $0x1c] sm:$0xf]
      %v2319 = vld [vmem:[%s2310 + $0x20] sm:$0xf]
      %v2320 = vld [vmem:[%s2310 + $0x24] sm:$0xf]
      %v2321 = vld [vmem:[%s2310 + $0x28] sm:$0xf]
      %v2322 = vld [vmem:[%s2310 + $0x2c] sm:$0xf]
      %v2323 = vld [vmem:[%s2310 + $0x30] sm:$0xf]
      %v2324 = vld [vmem:[%s2310 + $0x34] sm:$0xf]
      %v2325 = vld [vmem:[%s2310 + $0x38] sm:$0xf]
      %v2326 = vld [vmem:[%s2310 + $0x3c] sm:$0xf]
      %v2327 = vpack.c.bf16 %v2309, %v2308
      %v2344 = vunpack.c.l.b16 %v2311
      %v2345 = vunpack.c.l.b16 %v2312
      %v2346 = vunpack.c.l.b16 %v2313
      %v2347 = vunpack.c.l.b16 %v2314
      %v2348 = vunpack.c.l.b16 %v2315
      %v2349 = vunpack.c.l.b16 %v2316
      %v2350 = vunpack.c.l.b16 %v2317
      %v2351 = vunpack.c.l.b16 %v2318
      %v2352 = vunpack.c.l.b16 %v2319
      %v2353 = vunpack.c.l.b16 %v2320
      %v2354 = vunpack.c.l.b16 %v2321
      %v2355 = vunpack.c.l.b16 %v2322
      %v2356 = vunpack.c.l.b16 %v2323
      %v2357 = vunpack.c.l.b16 %v2324
      %v2358 = vunpack.c.l.b16 %v2325
      %v2359 = vunpack.c.l.b16 %v2326
      %v2360 = vpack.c.b16 %v2345, %v2344
      %v2361 = vpack.c.b16 %v2347, %v2346
      %v2362 = vpack.c.b16 %v2349, %v2348
      %v2363 = vpack.c.b16 %v2351, %v2350
      %v2364 = vpack.c.b16 %v2353, %v2352
      %v2365 = vpack.c.b16 %v2355, %v2354
      %v2366 = vpack.c.b16 %v2357, %v2356
      %v2367 = vpack.c.b16 %v2359, %v2358
      %2376 = vmatprep.subr.bf16.mxu0 0
      %2377 = vmatpush1.bf16.msra.mxu0 %v2360
      %2378 = vmatprep.subr.bf16.mxu0 0
      %2379 = vmatpush1.bf16.msra.mxu0 %v2361
      %2380 = vmatprep.subr.bf16.mxu0 0
      %2381 = vmatpush1.bf16.msra.mxu0 %v2362
      %2382 = vmatprep.subr.bf16.mxu0 0
      %2383 = vmatpush1.bf16.msra.mxu0 %v2363
      %2384 = vmatprep.subr.bf16.mxu0 0
      %2385 = vmatpush1.bf16.msra.mxu0 %v2364
      %2386 = vmatprep.subr.bf16.mxu0 0
      %2387 = vmatpush1.bf16.msra.mxu0 %v2365
      %2388 = vmatprep.subr.bf16.mxu0 0
      %2389 = vmatpush1.bf16.msra.mxu0 %v2366
      %2390 = vmatprep.subr.bf16.mxu0 0
      %2391 = vmatpush1.bf16.msra.mxu0 %v2367
      %2392 = vmatprep.subr.bf16.mxu0 0
      %2393 = vmatpush1.bf16.msra.mxu0 0
      %2394 = vmatprep.subr.bf16.mxu0 0
      %2395 = vmatpush1.bf16.msra.mxu0 0
      %2396 = vmatprep.subr.bf16.mxu0 0
      %2397 = vmatpush1.bf16.msra.mxu0 0
      %2398 = vmatprep.subr.bf16.mxu0 0
      %2399 = vmatpush1.bf16.msra.mxu0 0
      %2400 = vmatprep.subr.bf16.mxu0 0
      %2401 = vmatpush1.bf16.msra.mxu0 0
      %2402 = vmatprep.subr.bf16.mxu0 0
      %2403 = vmatpush1.bf16.msra.mxu0 0
      %2404 = vmatprep.subr.bf16.mxu0 0
      %2405 = vmatpush1.bf16.msra.mxu0 0
      %2406 = vmatprep.subr.bf16.mxu0 0
      %2407 = vmatpush1.bf16.msra.mxu0 0
      %2408 = vmatprep.mubr.bf16.mxu0 0
      %2409 = vmatmul.mubr.bf16.gmra.mrb[0].mxu0 %v2327
      %v2410 = vpop.f32.mrb[0].mxu0
      %v2411 = vadd.f32 0.0, %v2410
      %v2412 = vpop.f32.mrb[0].mxu0
      %v2413 = vpop.f32.mrb[0].mxu0
      %v2414 = vadd.f32 0.0, %v2413
      %v2415 = vpop.f32.mrb[0].mxu0
      %2416 = vdwg.mxu0
      %v2417 = vadd.f32 %v1567, %v2411
      %v2418 = vadd.f32 %v1568, %v2414
      %v2419 = vld [vmem:[%s5 + $0x10] sm:$0x1]
      %v2420 = vlaneseq
      %v2421 = vshrl.u32 %v2420, 7
      %v2422 = vsub.s32 0, %v2421
      %v2423 = vrot.slane %v2419, %v2422
      %v2424 = vadd.f32 %v2417, %v2423
      %v2425 = vadd.f32 %v2418, %v2423
      %s2426 = scalar_lea.vmem %s2, 64
      %v2427 = vld [vmem:[%s2426] sm:$0xf]
      %v2428 = vld [vmem:[%s2426 + $0x4] sm:$0xf]
      %v2429 = vld [vmem:[%s2426 + $0x8] sm:$0xf]
      %v2430 = vld [vmem:[%s2426 + $0xc] sm:$0xf]
      %v2431 = vld [vmem:[%s2426 + $0x10] sm:$0xf]
      %v2432 = vld [vmem:[%s2426 + $0x14] sm:$0xf]
      %v2433 = vld [vmem:[%s2426 + $0x18] sm:$0xf]
      %v2434 = vld [vmem:[%s2426 + $0x1c] sm:$0xf]
      %v2435 = vld [vmem:[%s2426 + $0x20] sm:$0xf]
      %v2436 = vld [vmem:[%s2426 + $0x24] sm:$0xf]
      %v2437 = vld [vmem:[%s2426 + $0x28] sm:$0xf]
      %v2438 = vld [vmem:[%s2426 + $0x2c] sm:$0xf]
      %v2439 = vld [vmem:[%s2426 + $0x30] sm:$0xf]
      %v2440 = vld [vmem:[%s2426 + $0x34] sm:$0xf]
      %v2441 = vld [vmem:[%s2426 + $0x38] sm:$0xf]
      %v2442 = vld [vmem:[%s2426 + $0x3c] sm:$0xf]
      %v2443 = vpack.c.bf16 %v2425, %v2424
      %v2444 = vld [vmem:[%s6 + $0x1] sm:$0x1]
      %v2445 = vlaneseq
      %v2446 = vshrl.u32 %v2445, 7
      %v2447 = vsub.s32 0, %v2446
      %v2448 = vrot.slane %v2444, %v2447
      %v2465 = vunpack.c.l.b16 %v2427
      %v2466 = vunpack.c.l.b16 %v2428
      %v2467 = vunpack.c.l.b16 %v2429
      %v2468 = vunpack.c.l.b16 %v2430
      %v2469 = vunpack.c.l.b16 %v2431
      %v2470 = vunpack.c.l.b16 %v2432
      %v2471 = vunpack.c.l.b16 %v2433
      %v2472 = vunpack.c.l.b16 %v2434
      %v2473 = vunpack.c.l.b16 %v2435
      %v2474 = vunpack.c.l.b16 %v2436
      %v2475 = vunpack.c.l.b16 %v2437
      %v2476 = vunpack.c.l.b16 %v2438
      %v2477 = vunpack.c.l.b16 %v2439
      %v2478 = vunpack.c.l.b16 %v2440
      %v2479 = vunpack.c.l.b16 %v2441
      %v2480 = vunpack.c.l.b16 %v2442
      %v2481 = vpack.c.b16 %v2466, %v2465
      %v2482 = vpack.c.b16 %v2468, %v2467
      %v2483 = vpack.c.b16 %v2470, %v2469
      %v2484 = vpack.c.b16 %v2472, %v2471
      %v2485 = vpack.c.b16 %v2474, %v2473
      %v2486 = vpack.c.b16 %v2476, %v2475
      %v2487 = vpack.c.b16 %v2478, %v2477
      %v2488 = vpack.c.b16 %v2480, %v2479
      %2497 = vmatprep.subr.bf16.mxu0 0
      %2498 = vmatpush1.bf16.msra.mxu0 %v2481
      %2499 = vmatprep.subr.bf16.mxu0 0
      %2500 = vmatpush1.bf16.msra.mxu0 %v2482
      %2501 = vmatprep.subr.bf16.mxu0 0
      %2502 = vmatpush1.bf16.msra.mxu0 %v2483
      %2503 = vmatprep.subr.bf16.mxu0 0
      %2504 = vmatpush1.bf16.msra.mxu0 %v2484
      %2505 = vmatprep.subr.bf16.mxu0 0
      %2506 = vmatpush1.bf16.msra.mxu0 %v2485
      %2507 = vmatprep.subr.bf16.mxu0 0
      %2508 = vmatpush1.bf16.msra.mxu0 %v2486
      %2509 = vmatprep.subr.bf16.mxu0 0
      %2510 = vmatpush1.bf16.msra.mxu0 %v2487
      %2511 = vmatprep.subr.bf16.mxu0 0
      %2512 = vmatpush1.bf16.msra.mxu0 %v2488
      %2513 = vmatprep.subr.bf16.mxu0 0
      %2514 = vmatpush1.bf16.msra.mxu0 0
      %2515 = vmatprep.subr.bf16.mxu0 0
      %2516 = vmatpush1.bf16.msra.mxu0 0
      %2517 = vmatprep.subr.bf16.mxu0 0
      %2518 = vmatpush1.bf16.msra.mxu0 0
      %2519 = vmatprep.subr.bf16.mxu0 0
      %2520 = vmatpush1.bf16.msra.mxu0 0
      %2521 = vmatprep.subr.bf16.mxu0 0
      %2522 = vmatpush1.bf16.msra.mxu0 0
      %2523 = vmatprep.subr.bf16.mxu0 0
      %2524 = vmatpush1.bf16.msra.mxu0 0
      %2525 = vmatprep.subr.bf16.mxu0 0
      %2526 = vmatpush1.bf16.msra.mxu0 0
      %2527 = vmatprep.subr.bf16.mxu0 0
      %2528 = vmatpush1.bf16.msra.mxu0 0
      %2529 = vmatprep.mubr.bf16.mxu0 0
      %2530 = vmatmul.mubr.bf16.gmra.mrb[0].mxu0 %v2443
      %v2531 = vpop.f32.mrb[0].mxu0
      %v2532 = vadd.f32 %v2448, %v2531
      %v2533 = vpop.f32.mrb[0].mxu0
      %v2534 = vpop.f32.mrb[0].mxu0
      %v2535 = vadd.f32 %v2448, %v2534
      %v2536 = vpop.f32.mrb[0].mxu0
      %2537 = vdwg.mxu0
      %v2538 = vmax.f32 %v2532, 0.0
      %v2539 = vmax.f32 %v2535, 0.0
      %s2540 = scalar_lea.vmem %s3, 64
      %v2541 = vld [vmem:[%s2540] sm:$0xf]
      %v2542 = vld [vmem:[%s2540 + $0x4] sm:$0xf]
      %v2543 = vld [vmem:[%s2540 + $0x8] sm:$0xf]
      %v2544 = vld [vmem:[%s2540 + $0xc] sm:$0xf]
      %v2545 = vld [vmem:[%s2540 + $0x10] sm:$0xf]
      %v2546 = vld [vmem:[%s2540 + $0x14] sm:$0xf]
      %v2547 = vld [vmem:[%s2540 + $0x18] sm:$0xf]
      %v2548 = vld [vmem:[%s2540 + $0x1c] sm:$0xf]
      %v2549 = vld [vmem:[%s2540 + $0x20] sm:$0xf]
      %v2550 = vld [vmem:[%s2540 + $0x24] sm:$0xf]
      %v2551 = vld [vmem:[%s2540 + $0x28] sm:$0xf]
      %v2552 = vld [vmem:[%s2540 + $0x2c] sm:$0xf]
      %v2553 = vld [vmem:[%s2540 + $0x30] sm:$0xf]
      %v2554 = vld [vmem:[%s2540 + $0x34] sm:$0xf]
      %v2555 = vld [vmem:[%s2540 + $0x38] sm:$0xf]
      %v2556 = vld [vmem:[%s2540 + $0x3c] sm:$0xf]
      %v2557 = vpack.c.bf16 %v2539, %v2538
      %v2558 = vld [vmem:[%s5 + $0x13] sm:$0x1]
      %v2559 = vlaneseq
      %v2560 = vshrl.u32 %v2559, 7
      %v2561 = vsub.s32 0, %v2560
      %v2562 = vrot.slane %v2558, %v2561
      %v2579 = vunpack.c.l.b16 %v2541
      %v2580 = vunpack.c.l.b16 %v2542
      %v2581 = vunpack.c.l.b16 %v2543
      %v2582 = vunpack.c.l.b16 %v2544
      %v2583 = vunpack.c.l.b16 %v2545
      %v2584 = vunpack.c.l.b16 %v2546
      %v2585 = vunpack.c.l.b16 %v2547
      %v2586 = vunpack.c.l.b16 %v2548
      %v2587 = vunpack.c.l.b16 %v2549
      %v2588 = vunpack.c.l.b16 %v2550
      %v2589 = vunpack.c.l.b16 %v2551
      %v2590 = vunpack.c.l.b16 %v2552
      %v2591 = vunpack.c.l.b16 %v2553
      %v2592 = vunpack.c.l.b16 %v2554
      %v2593 = vunpack.c.l.b16 %v2555
      %v2594 = vunpack.c.l.b16 %v2556
      %v2595 = vpack.c.b16 %v2580, %v2579
      %v2596 = vpack.c.b16 %v2582, %v2581
      %v2597 = vpack.c.b16 %v2584, %v2583
      %v2598 = vpack.c.b16 %v2586, %v2585
      %v2599 = vpack.c.b16 %v2588, %v2587
      %v2600 = vpack.c.b16 %v2590, %v2589
      %v2601 = vpack.c.b16 %v2592, %v2591
      %v2602 = vpack.c.b16 %v2594, %v2593
      %2611 = vmatprep.subr.bf16.mxu0 0
      %2612 = vmatpush1.bf16.msra.mxu0 %v2595
      %2613 = vmatprep.subr.bf16.mxu0 0
      %2614 = vmatpush1.bf16.msra.mxu0 %v2596
      %2615 = vmatprep.subr.bf16.mxu0 0
      %2616 = vmatpush1.bf16.msra.mxu0 %v2597
      %2617 = vmatprep.subr.bf16.mxu0 0
      %2618 = vmatpush1.bf16.msra.mxu0 %v2598
      %2619 = vmatprep.subr.bf16.mxu0 0
      %2620 = vmatpush1.bf16.msra.mxu0 %v2599
      %2621 = vmatprep.subr.bf16.mxu0 0
      %2622 = vmatpush1.bf16.msra.mxu0 %v2600
      %2623 = vmatprep.subr.bf16.mxu0 0
      %2624 = vmatpush1.bf16.msra.mxu0 %v2601
      %2625 = vmatprep.subr.bf16.mxu0 0
      %2626 = vmatpush1.bf16.msra.mxu0 %v2602
      %2627 = vmatprep.subr.bf16.mxu0 0
      %2628 = vmatpush1.bf16.msra.mxu0 0
      %2629 = vmatprep.subr.bf16.mxu0 0
      %2630 = vmatpush1.bf16.msra.mxu0 0
      %2631 = vmatprep.subr.bf16.mxu0 0
      %2632 = vmatpush1.bf16.msra.mxu0 0
      %2633 = vmatprep.subr.bf16.mxu0 0
      %2634 = vmatpush1.bf16.msra.mxu0 0
      %2635 = vmatprep.subr.bf16.mxu0 0
      %2636 = vmatpush1.bf16.msra.mxu0 0
      %2637 = vmatprep.subr.bf16.mxu0 0
      %2638 = vmatpush1.bf16.msra.mxu0 0
      %2639 = vmatprep.subr.bf16.mxu0 0
      %2640 = vmatpush1.bf16.msra.mxu0 0
      %2641 = vmatprep.subr.bf16.mxu0 0
      %2642 = vmatpush1.bf16.msra.mxu0 0
      %2643 = vmatprep.mubr.bf16.mxu0 0
      %2644 = vmatmul.mubr.bf16.gmra.mrb[0].mxu0 %v2557
      %v2645 = vpop.f32.mrb[0].mxu0
      %v2646 = vadd.f32 %v2562, %v2645
      %v2647 = vpop.f32.mrb[0].mxu0
      %v2648 = vpop.f32.mrb[0].mxu0
      %v2649 = vadd.f32 %v2562, %v2648
      %v2650 = vpop.f32.mrb[0].mxu0
      %2651 = vdwg.mxu0
      %v2652 = vadd.f32 %v2424, %v2646
      %v2653 = vadd.f32 %v2425, %v2649
      %v2654 = vmul.f32 %v2652, %v311
      %v2655 = vmul.f32 %v2653, %v311
      %2656 = vadd.xlane.f32.xlu0 %v2654
      %v2657 = vpop.xlane.xlu0 %2656
      %2658 = vadd.xlane.f32.xlu0 %v2655
      %v2659 = vpop.xlane.xlu0 %2658
      %v2660 = vmul.f32 %v2657, 0.03125
      %v2661 = vmul.f32 %v2659, 0.03125
      %v2662 = vsub.f32 %v2652, %v2660
      %v2663 = vsub.f32 %v2653, %v2661
      %v2664 = vmul.f32 %v2662, %v311
      %v2665 = vmul.f32 %v2663, %v311
      %v2666 = vmul.f32 %v2664, %v2664
      %v2667 = vmul.f32 %v2665, %v2665
      %2668 = vadd.xlane.f32.xlu0 %v2666
      %v2669 = vpop.xlane.xlu0 %2668
      %2670 = vadd.xlane.f32.xlu0 %v2667
      %v2671 = vpop.xlane.xlu0 %2670
      %v2672 = vmul.f32 %v2669, 0.03125
      %v2673 = vmul.f32 %v2671, 0.03125
      %v2674 = vadd.f32 %v2672, 1e-05
      %v2675 = vadd.f32 %v2673, 1e-05
      %v2676 = vrsqrt.pop %v2674
      %v2677 = vrsqrt.pop %v2675
      %v2678 = vmul.f32 %v2664, %v2676
      %v2679 = vmul.f32 %v2665, %v2677
      %v2680 = vld [vmem:[%s5 + $0x11] sm:$0x1]
      %v2681 = vlaneseq
      %v2682 = vshrl.u32 %v2681, 7
      %v2683 = vsub.s32 0, %v2682
      %v2684 = vrot.slane %v2680, %v2683
      %v2685 = vmul.f32 %v2678, %v2684
      %v2686 = vmul.f32 %v2679, %v2684
      %v2687 = vld [vmem:[%s5 + $0x12] sm:$0x1]
      %v2688 = vlaneseq
      %v2689 = vshrl.u32 %v2688, 7
      %v2690 = vsub.s32 0, %v2689
      %v2691 = vrot.slane %v2687, %v2690
      %v2692 = vadd.f32 %v2685, %v2691
      %v2693 = vadd.f32 %v2686, %v2691
      %v2694 = vmul.f32 %v2692, 0.5
      %v2695 = vmul.f32 %v2693, 0.5
      %v2696 = vadd.f32 %v2424, %v2694
      %v2697 = vadd.f32 %v2425, %v2695
      %v2698 = vmul.f32 %v2696, %v311
      %v2699 = vmul.f32 %v2697, %v311
      %2700 = vadd.xlane.f32.xlu0 %v2698
      %v2701 = vpop.xlane.xlu0 %2700
      %2702 = vadd.xlane.f32.xlu0 %v2699
      %v2703 = vpop.xlane.xlu0 %2702
      %v2704 = vmul.f32 %v2701, 0.03125
      %v2705 = vmul.f32 %v2703, 0.03125
      %v2706 = vsub.f32 %v2696, %v2704
      %v2707 = vsub.f32 %v2697, %v2705
      %v2708 = vmul.f32 %v2706, %v311
      %v2709 = vmul.f32 %v2707, %v311
      %v2710 = vmul.f32 %v2708, %v2708
      %v2711 = vmul.f32 %v2709, %v2709
      %2712 = vadd.xlane.f32.xlu0 %v2710
      %v2713 = vpop.xlane.xlu0 %2712
      %2714 = vadd.xlane.f32.xlu0 %v2711
      %v2715 = vpop.xlane.xlu0 %2714
      %v2716 = vmul.f32 %v2713, 0.03125
      %v2717 = vmul.f32 %v2715, 0.03125
      %v2718 = vadd.f32 %v2716, 1e-05
      %v2719 = vadd.f32 %v2717, 1e-05
      %v2720 = vrsqrt.pop %v2718
      %v2721 = vrsqrt.pop %v2719
      %v2722 = vmul.f32 %v2708, %v2720
      %v2723 = vmul.f32 %v2709, %v2721
      %v2724 = vld [vmem:[%s5 + $0x14] sm:$0x1]
      %v2725 = vlaneseq
      %v2726 = vshrl.u32 %v2725, 7
      %v2727 = vsub.s32 0, %v2726
      %v2728 = vrot.slane %v2724, %v2727
      %v2729 = vmul.f32 %v2722, %v2728
      %v2730 = vmul.f32 %v2723, %v2728
      %v2731 = vld [vmem:[%s5 + $0x15] sm:$0x1]
      %v2732 = vlaneseq
      %v2733 = vshrl.u32 %v2732, 7
      %v2734 = vsub.s32 0, %v2733
      %v2735 = vrot.slane %v2731, %v2734
      %v2736 = vadd.f32 %v2729, %v2735
      %v2737 = vadd.f32 %v2730, %v2735
      %2738 = vst [vmem:[%s305] sm:$0xff] %v2736
      %2739 = vst [vmem:[%s305 + $0x8] sm:$0xff] %v2737
      %p2740 = scmp.lt.s32.totalorder %s19, 1
      %s2741 = scalar_select %p2740, %s19, 1
      %s2742 = smul.addr %s2741, 2
      %s2743 = smul.addr %s2742, 8
      %s2744 = scalar_lea.vmem %s8, %s2743
      // Predicated region
      $region53: #{conformer_forward.5} parent=51 // pred_check
        %p2745 = pneg %p210
      $region54: #{conformer_forward.5} parent=51 // pred_check_branch
        %2747 = sbr.rel (%p2745) target = $region56
      $region55: #{conformer_forward.5} parent=51 // pred_region
        _
      $region56: #{conformer_forward.5} parent=51 // pred_fallthru
        _
    $region52: #{conformer_forward.5} parent=5 // pred_fallthru
      _
    %p2748 = scmp.le.s32.totalorder 2, %s14
    // Predicated region
    $region57: #{conformer_forward.5} parent=5 // pred_check
      %p2749 = pneg %p2748
    $region58: #{conformer_forward.5} parent=5 // pred_check_branch
      %2751 = sbr.rel (%p2749) target = $region60
    $region59: #{conformer_forward.5} parent=5 // pred_region
      %s2752 = ssub.s32 %s14, 2
      // Predicated region
      $region61: #{conformer_forward.5} parent=59 // pred_check
        %p2753 = pneg %p216
      $region62: #{conformer_forward.5} parent=59 // pred_check_branch
        %2755 = sbr.rel (%p2753) target = $region64
      $region63: #{conformer_forward.5} parent=59 // pred_region
        %p2756 = scmp.lt.s32.totalorder %s20, 1
        %s2757 = scalar_select %p2756, %s20, 1
        %s2758 = smul.addr %s2757, 2
        %s2759 = smul.addr %s2758, 8
        %s2760 = scalar_lea.vmem %s8, %s2759
      $region64: #{conformer_forward.5} parent=59 // pred_fallthru
        _
    $region60: #{conformer_forward.5} parent=5 // pred_fallthru
      _
  $region6: #{conformer_forward.5} parent=0 // loop_footer
    %s18 = sadd.s32 1, %s14
  $region7: #{conformer_forward.5} parent=0 // loop_footer_branch
    %13 = sbr.rel target = $region3
  $region8: #{conformer_forward.5} parent=0 // loop_exit
    _

</llo_original>
